<compile_context>
chip_gen: v7x
topology: tpu7x:2x2x1
jax: 0.10.0
libtpu: 0.0.40
codegen_flags: <defaults>
</compile_context>

<pallas_src>
import math
import functools

import jax
import jax.numpy as jnp
from jax import lax
from jax.experimental import pallas as pl
from jax.experimental.pallas import tpu as pltpu


def _layer_norm(x, gamma, beta, eps=1e-5):
    # x: (rows, D) f32, gamma/beta: (1, D) f32
    mean = jnp.mean(x, axis=-1, keepdims=True)
    var = jnp.mean((x - mean) ** 2, axis=-1, keepdims=True)
    inv = jax.lax.rsqrt(var + eps)
    return (x - mean) * inv * gamma + beta


def transformer_layer_kernel(
    xq_ref, xkv_ref,
    wq_ref, wk_ref, wv_ref, wo_ref,
    bq_ref, bk_ref, bv_ref, bo_ref,
    w1_ref, b1_ref, w2_ref, b2_ref,
    g1_ref, beta1_ref, g2_ref, beta2_ref,
    o_ref,
    k_scr, v_scr, ffn_acc,
    *, n_heads, d_k, ff_chunk,
):
    f32 = jnp.float32
    bf16 = jnp.bfloat16
    scale = 1.0 / math.sqrt(d_k)

    # ---- K/V projections: once per batch (qi == 0) into persistent VMEM scratch --------
    # x_kv arrives pre-cast to bf16 (no f32 round-trip); weights are head-major refs,
    # so each head's projection is a plain (S, D) x (D, dk) MXU matmul.
    @pl.when(pl.program_id(1) == 0)
    def _():
        xkv_b = xkv_ref[...]                                    # (S, D) bf16
        for h in range(n_heads):
            kh = jnp.dot(xkv_b, wk_ref[h], preferred_element_type=f32) + bk_ref[h]
            vh = jnp.dot(xkv_b, wv_ref[h], preferred_element_type=f32) + bv_ref[h]
            k_scr[h] = kh.astype(bf16)                          # (S, dk)
            v_scr[h] = vh.astype(bf16)                          # (S, dk)

    xq = xq_ref[...].astype(f32)                                # (tq, D) f32 (residual path)
    xq_b = xq.astype(bf16)
    tq, D = xq.shape

    # ---- attention: per-head, ref-sliced weights, head-merge fused into W_o -------------
    attn = jnp.zeros((tq, D), f32)
    for h in range(n_heads):
        qh = (jnp.dot(xq_b, wq_ref[h], preferred_element_type=f32) + bq_ref[h]) * scale
        s = jnp.einsum("qd,kd->qk", qh.astype(bf16), k_scr[h],
                       preferred_element_type=f32)              # (tq, S) f32
        m = jnp.max(s, axis=-1, keepdims=True)
        p = jnp.exp(s - m)
        p = p * pl.reciprocal(jnp.sum(p, axis=-1, keepdims=True), approx=True)
        oh = jnp.dot(p.astype(bf16), v_scr[h], preferred_element_type=f32)   # (tq, dk)
        attn = attn + jnp.dot(oh.astype(bf16), wo_ref[h], preferred_element_type=f32)
    attn = attn + bo_ref[...]

    # ---- residual + LayerNorm 1 (f32) ----------------------------------------------------
    x1 = _layer_norm(xq + attn, g1_ref[...], beta1_ref[...])
    x1_b = x1.astype(bf16)

    # ---- feed-forward, fused over d_ff chunks into a VMEM accumulator ---------------------
    d_ff = w1_ref.shape[1]
    n_chunks = d_ff // ff_chunk
    ffn_acc[...] = jnp.zeros_like(ffn_acc)

    def ffn_body(c, carry):
        off = pl.multiple_of(c * ff_chunk, ff_chunk)
        w1c = w1_ref[:, pl.ds(off, ff_chunk)]                   # (D, fc) bf16 ref slice
        b1c = b1_ref[:, pl.ds(off, ff_chunk)]                   # (1, fc) f32
        h = jnp.maximum(jnp.dot(x1_b, w1c, preferred_element_type=f32) + b1c, 0.0)
        w2c = w2_ref[pl.ds(off, ff_chunk), :]                   # (fc, D) bf16 ref slice
        ffn_acc[...] += jnp.dot(h.astype(bf16), w2c, preferred_element_type=f32)
        return carry

    lax.fori_loop(0, n_chunks, ffn_body, 0, unroll=(n_chunks <= 8))

    ff = ffn_acc[...] + b2_ref[...]

    # ---- residual + LayerNorm 2 (f32) -----------------------------------------------------
    x2 = _layer_norm(x1 + ff, g2_ref[...], beta2_ref[...])
    o_ref[...] = x2.astype(o_ref.dtype)


def _pick_tile(total, target, multiple):
    """Largest tile <= target that divides `total` AND is a multiple of `multiple`.

    Falls back to the full extent (a whole-dim block is always a legal BlockSpec)."""
    if total <= target:
        return total
    for t in range(target, 0, -1):
        if total % t == 0 and t % multiple == 0:
            return t
    return total


def _vmem_capacity_bytes():
    try:
        return int(pltpu.get_tpu_info().vmem_capacity_bytes)
    except Exception:
        return 128 * 1024 * 1024


def transformer_layer(x, params, *, n_heads, q_tile=256, ff_chunk=512):
    B, S, D = x.shape
    assert D % n_heads == 0
    H = n_heads
    d_k = D // n_heads
    d_ff = params["w1"].shape[1]

    tq = _pick_tile(S, q_tile, 8)        # query-row tile: multiple of 8 or full S
    fc = _pick_tile(d_ff, ff_chunk, 128)  # FFN hidden chunk: multiple of 128 or full d_ff

    kernel = functools.partial(
        transformer_layer_kernel, n_heads=n_heads, d_k=d_k, ff_chunk=fc)

    bf16 = jnp.bfloat16
    f32 = jnp.float32

    # Head-major weight / bias layouts (wrapper-side): the kernel only ever slices refs,
    # never activations, and the head-merge is fused into per-head W_o projections.
    wq_h = params["wq"].reshape(D, H, d_k).transpose(1, 0, 2).astype(bf16)   # (H, D, dk)
    wk_h = params["wk"].reshape(D, H, d_k).transpose(1, 0, 2).astype(bf16)
    wv_h = params["wv"].reshape(D, H, d_k).transpose(1, 0, 2).astype(bf16)
    wo_h = params["wo"].reshape(H, d_k, D).astype(bf16)                      # (H, dk, D)
    bq_h = params["bq"].reshape(1, H, d_k).transpose(1, 0, 2).astype(f32)    # (H, 1, dk)
    bk_h = params["bk"].reshape(1, H, d_k).transpose(1, 0, 2).astype(f32)
    bv_h = params["bv"].reshape(1, H, d_k).transpose(1, 0, 2).astype(f32)

    w1 = params["w1"].astype(bf16)
    w2 = params["w2"].astype(bf16)

    # KV operand pre-cast to bf16: half the DMA / VMEM of the (S, D) block, no in-kernel cast.
    x_kv = x.astype(bf16)

    # Weights / biases / LN params: whole-array, single-buffered VMEM residents.
    def resident():
        return pl.BlockSpec(memory_space=pltpu.MemorySpace.VMEM)

    grid = (B, S // tq)

    in_specs = [
        # query rows for this (batch, q-tile) step; batch dim squeezed (None)
        pl.BlockSpec((None, tq, D), lambda b, qi: (b, qi, 0)),
        # full sequence of this batch (bf16) for K/V; block index constant across qi
        pl.BlockSpec((None, S, D), lambda b, qi: (b, 0, 0)),
        resident(), resident(), resident(), resident(),     # Wq, Wk, Wv, Wo (head-major bf16)
        resident(), resident(), resident(), resident(),     # bq, bk, bv (head-major), bo
        resident(), resident(), resident(), resident(),     # W1, b1, W2, b2
        resident(), resident(), resident(), resident(),     # ln1 gamma/beta, ln2 gamma/beta
    ]
    out_specs = pl.BlockSpec((None, tq, D), lambda b, qi: (b, qi, 0))

    scratch_shapes = [
        pltpu.VMEM((H, S, d_k), bf16),   # K per batch, head-major (persists across qi)
        pltpu.VMEM((H, S, d_k), bf16),   # V per batch, head-major
        pltpu.VMEM((tq, D), f32),        # FFN accumulator
    ]

    # VMEM budget: resident weights + scratch + double-buffered blocked operands + working set,
    # capped at physical VMEM minus headroom for Mosaic internal scratch.
    weight_bytes = 2 * (4 * D * D + 2 * D * d_ff) + 4 * (8 * D + d_ff)
    scratch_bytes = 2 * 2 * S * D + 4 * tq * D
    io_bytes = 2 * 2 * tq * D * 4 + 2 * S * D * 2
    work_bytes = 4 * (8 * tq * D + 2 * tq * S + 2 * tq * fc + 2 * S * d_k)
    need = 2 * (weight_bytes + scratch_bytes + io_bytes + work_bytes)
    cap = _vmem_capacity_bytes()
    vmem_limit = int(min(max(need, 32 * 1024 * 1024), cap - 16 * 1024 * 1024))

    return pl.pallas_call(
        kernel,
        out_shape=jax.ShapeDtypeStruct((B, S, D), x.dtype),
        grid=grid,
        in_specs=in_specs,
        out_specs=out_specs,
        scratch_shapes=scratch_shapes,
        compiler_params=pltpu.CompilerParams(
            # batch axis parallel (megacore); qi arbitrary so the K/V scratch carry and the
            # unchanged-block-index DMA skip for x_kv are valid.
            dimension_semantics=("parallel", "arbitrary"),
            vmem_limit_bytes=vmem_limit,
        ),
    )(
        x, x_kv,
        wq_h, wk_h, wv_h, wo_h,
        bq_h, bk_h, bv_h, params["bo"],
        w1, params["b1"], w2, params["b2"],
        params["g1"], params["beta1"], params["g2"], params["beta2"],
    )


def reference_layer(x, params, *, n_heads):
    """Pure-JAX f32 reference mirroring the PyTorch module (dropout = identity)."""
    B, S, D = x.shape
    d_k = D // n_heads

    def ln(y, g, b, eps=1e-5):
        mu = jnp.mean(y, axis=-1, keepdims=True)
        var = jnp.mean((y - mu) ** 2, axis=-1, keepdims=True)
        return (y - mu) * jax.lax.rsqrt(var + eps) * g + b

    q = x @ params["wq"] + params["bq"]
    k = x @ params["wk"] + params["bk"]
    v = x @ params["wv"] + params["bv"]
    q = q.reshape(B, S, n_heads, d_k).transpose(0, 2, 1, 3)
    k = k.reshape(B, S, n_heads, d_k).transpose(0, 2, 1, 3)
    v = v.reshape(B, S, n_heads, d_k).transpose(0, 2, 1, 3)
    scores = jnp.einsum("bhqd,bhkd->bhqk", q, k) / math.sqrt(d_k)
    w = jax.nn.softmax(scores, axis=-1)
    attn = jnp.einsum("bhqk,bhkd->bhqd", w, v).transpose(0, 2, 1, 3).reshape(B, S, D)
    attn = attn @ params["wo"] + params["bo"]
    x1 = ln(x + attn, params["g1"], params["beta1"])
    ff = jnp.maximum(x1 @ params["w1"] + params["b1"], 0.0) @ params["w2"] + params["b2"]
    return ln(x1 + ff, params["g2"], params["beta2"])


def init_params(key, d_model, n_heads):
    d_ff = 4 * d_model
    keys = jax.random.split(key, 10)
    scale = 1.0 / math.sqrt(d_model)
    return {
        "wq": jax.random.normal(keys[0], (d_model, d_model), jnp.float32) * scale,
        "wk": jax.random.normal(keys[1], (d_model, d_model), jnp.float32) * scale,
        "wv": jax.random.normal(keys[2], (d_model, d_model), jnp.float32) * scale,
        "wo": jax.random.normal(keys[3], (d_model, d_model), jnp.float32) * scale,
        "bq": jax.random.normal(keys[4], (1, d_model), jnp.float32) * 0.01,
        "bk": jax.random.normal(keys[5], (1, d_model), jnp.float32) * 0.01,
        "bv": jax.random.normal(keys[6], (1, d_model), jnp.float32) * 0.01,
        "bo": jnp.zeros((1, d_model), jnp.float32),
        "w1": jax.random.normal(keys[7], (d_model, d_ff), jnp.float32) * scale,
        "b1": jnp.zeros((1, d_ff), jnp.float32),
        "w2": jax.random.normal(keys[8], (d_ff, d_model), jnp.float32) * (1.0 / math.sqrt(d_ff)),
        "b2": jnp.zeros((1, d_model), jnp.float32),
        "g1": jnp.ones((1, d_model), jnp.float32),
        "beta1": jnp.zeros((1, d_model), jnp.float32),
        "g2": jnp.ones((1, d_model), jnp.float32),
        "beta2": jnp.zeros((1, d_model), jnp.float32),
    }


if __name__ == "__main__":
    B, S, d_model, n_heads = 2, 8, 32, 4

    key = jax.random.PRNGKey(0)
    kx, kp = jax.random.split(key)
    x = jax.random.normal(kx, (B, S, d_model), jnp.float32)
    params = init_params(kp, d_model, n_heads)

    out = transformer_layer(x, params, n_heads=n_heads)
    out = jax.block_until_ready(out)

    ref = reference_layer(x, params, n_heads=n_heads)
    assert out.shape == (B, S, d_model)
    # bf16 MXU operands + EUP approx reciprocal => loosened tolerance vs the f32 reference.
    assert jnp.allclose(out, ref, atol=5e-2, rtol=5e-2), "mismatch vs reference"

    # TODO(synk): dropout is modeled as eval-mode identity (no RNG mask in the kernel).
    print("KERNEL_OK")
</pallas_src>

<mosaic_0001>
module attributes {stable_mosaic.version = 11 : i64} {
  func.func @transformer_layer_kernel(%arg0: i32, %arg1: i32, %arg2: memref<1x8x32xf32, #tpu.memory_space<vmem>>, %arg3: memref<1x8x32xbf16, #tpu.memory_space<vmem>>, %arg4: memref<4x32x8xbf16, #tpu.memory_space<vmem>>, %arg5: memref<4x32x8xbf16, #tpu.memory_space<vmem>>, %arg6: memref<4x32x8xbf16, #tpu.memory_space<vmem>>, %arg7: memref<4x8x32xbf16, #tpu.memory_space<vmem>>, %arg8: memref<4x1x8xf32, #tpu.memory_space<vmem>>, %arg9: memref<4x1x8xf32, #tpu.memory_space<vmem>>, %arg10: memref<4x1x8xf32, #tpu.memory_space<vmem>>, %arg11: memref<1x32xf32, #tpu.memory_space<vmem>>, %arg12: memref<32x128xbf16, #tpu.memory_space<vmem>>, %arg13: memref<1x128xf32, #tpu.memory_space<vmem>>, %arg14: memref<128x32xbf16, #tpu.memory_space<vmem>>, %arg15: memref<1x32xf32, #tpu.memory_space<vmem>>, %arg16: memref<1x32xf32, #tpu.memory_space<vmem>>, %arg17: memref<1x32xf32, #tpu.memory_space<vmem>>, %arg18: memref<1x32xf32, #tpu.memory_space<vmem>>, %arg19: memref<1x32xf32, #tpu.memory_space<vmem>>, %arg20: memref<1x8x32xf32, #tpu.memory_space<vmem>>, %arg21: memref<4x8x8xbf16, #tpu.memory_space<vmem>>, %arg22: memref<4x8x8xbf16, #tpu.memory_space<vmem>>, %arg23: memref<8x32xf32, #tpu.memory_space<vmem>>) attributes {dimension_semantics = [#tpu.dimension_semantics<parallel>, #tpu.dimension_semantics<arbitrary>], iteration_bounds = array<i64: 2, 1>, scalar_prefetch = 0 : i64, scratch_operands = 3 : i64, tpu.core_type = #tpu.core_type<tc>, window_params = [{transform_indices = @transform_0, window_bounds = array<i64: 1, 8, 32>}, {transform_indices = @transform_1, window_bounds = array<i64: 1, 8, 32>}, {pipeline_mode = #tpu.pipeline_mode<synchronous>, transform_indices = @transform_2, window_bounds = array<i64: 4, 32, 8>}, {pipeline_mode = #tpu.pipeline_mode<synchronous>, transform_indices = @transform_3, window_bounds = array<i64: 4, 32, 8>}, {pipeline_mode = #tpu.pipeline_mode<synchronous>, transform_indices = @transform_4, window_bounds = array<i64: 4, 32, 8>}, {pipeline_mode = #tpu.pipeline_mode<synchronous>, transform_indices = @transform_5, window_bounds = array<i64: 4, 8, 32>}, {pipeline_mode = #tpu.pipeline_mode<synchronous>, transform_indices = @transform_6, window_bounds = array<i64: 4, 1, 8>}, {pipeline_mode = #tpu.pipeline_mode<synchronous>, transform_indices = @transform_7, window_bounds = array<i64: 4, 1, 8>}, {pipeline_mode = #tpu.pipeline_mode<synchronous>, transform_indices = @transform_8, window_bounds = array<i64: 4, 1, 8>}, {pipeline_mode = #tpu.pipeline_mode<synchronous>, transform_indices = @transform_9, window_bounds = array<i64: 1, 32>}, {pipeline_mode = #tpu.pipeline_mode<synchronous>, transform_indices = @transform_10, window_bounds = array<i64: 32, 128>}, {pipeline_mode = #tpu.pipeline_mode<synchronous>, transform_indices = @transform_11, window_bounds = array<i64: 1, 128>}, {pipeline_mode = #tpu.pipeline_mode<synchronous>, transform_indices = @transform_12, window_bounds = array<i64: 128, 32>}, {pipeline_mode = #tpu.pipeline_mode<synchronous>, transform_indices = @transform_13, window_bounds = array<i64: 1, 32>}, {pipeline_mode = #tpu.pipeline_mode<synchronous>, transform_indices = @transform_14, window_bounds = array<i64: 1, 32>}, {pipeline_mode = #tpu.pipeline_mode<synchronous>, transform_indices = @transform_15, window_bounds = array<i64: 1, 32>}, {pipeline_mode = #tpu.pipeline_mode<synchronous>, transform_indices = @transform_16, window_bounds = array<i64: 1, 32>}, {pipeline_mode = #tpu.pipeline_mode<synchronous>, transform_indices = @transform_17, window_bounds = array<i64: 1, 32>}, {transform_indices = @transform_18, window_bounds = array<i64: 1, 8, 32>}]} {
    %c0_i32 = arith.constant 0 : i32
    %0 = arith.cmpi eq, %arg1, %c0_i32 : i32
    %1 = arith.extui %0 : i1 to i32
    %c0_i32_0 = arith.constant 0 : i32
    %2 = arith.cmpi ne, %1, %c0_i32_0 : i32
    scf.if %2 {
      %c0_129 = arith.constant 0 : index
      %c0_130 = arith.constant 0 : index
      %c0_131 = arith.constant 0 : index
      %216 = vector.load %arg3[%c0_129, %c0_130, %c0_131] : memref<1x8x32xbf16, #tpu.memory_space<vmem>>, vector<1x8x32xbf16>
      %217 = vector.shape_cast %216 : vector<1x8x32xbf16> to vector<8x32xbf16>
      %c0_132 = arith.constant 0 : index
      %c0_133 = arith.constant 0 : index
      %c0_134 = arith.constant 0 : index
      %218 = vector.load %arg5[%c0_132, %c0_133, %c0_134] : memref<4x32x8xbf16, #tpu.memory_space<vmem>>, vector<1x32x8xbf16>
      %219 = vector.shape_cast %218 : vector<1x32x8xbf16> to vector<32x8xbf16>
      %cst_135 = arith.constant dense<0.000000e+00> : vector<8x8xf32>
      %220 = tpu.matmul %217, %219, %cst_135 {dimension_numbers = #tpu.dot_dimension_numbers<[1], [0], [0], [1], [0, 0, 1, 1], [], []>} : vector<8x32xbf16>, vector<32x8xbf16>, vector<8x8xf32> -> vector<8x8xf32>
      %c0_136 = arith.constant 0 : index
      %c0_137 = arith.constant 0 : index
      %c0_138 = arith.constant 0 : index
      %221 = vector.load %arg9[%c0_136, %c0_137, %c0_138] : memref<4x1x8xf32, #tpu.memory_space<vmem>>, vector<1x1x8xf32>
      %222 = vector.shape_cast %221 : vector<1x1x8xf32> to vector<1x8xf32>
      %223 = vector.broadcast %222 : vector<1x8xf32> to vector<8x8xf32>
      %224 = arith.addf %220, %223 : vector<8x8xf32>
      %c0_139 = arith.constant 0 : index
      %c0_140 = arith.constant 0 : index
      %c0_141 = arith.constant 0 : index
      %225 = vector.load %arg6[%c0_139, %c0_140, %c0_141] : memref<4x32x8xbf16, #tpu.memory_space<vmem>>, vector<1x32x8xbf16>
      %226 = vector.shape_cast %225 : vector<1x32x8xbf16> to vector<32x8xbf16>
      %cst_142 = arith.constant dense<0.000000e+00> : vector<8x8xf32>
      %227 = tpu.matmul %217, %226, %cst_142 {dimension_numbers = #tpu.dot_dimension_numbers<[1], [0], [0], [1], [0, 0, 1, 1], [], []>} : vector<8x32xbf16>, vector<32x8xbf16>, vector<8x8xf32> -> vector<8x8xf32>
      %c0_143 = arith.constant 0 : index
      %c0_144 = arith.constant 0 : index
      %c0_145 = arith.constant 0 : index
      %228 = vector.load %arg10[%c0_143, %c0_144, %c0_145] : memref<4x1x8xf32, #tpu.memory_space<vmem>>, vector<1x1x8xf32>
      %229 = vector.shape_cast %228 : vector<1x1x8xf32> to vector<1x8xf32>
      %230 = vector.broadcast %229 : vector<1x8xf32> to vector<8x8xf32>
      %231 = arith.addf %227, %230 : vector<8x8xf32>
      %232 = arith.truncf %224 : vector<8x8xf32> to vector<8x8xbf16>
      %c0_146 = arith.constant 0 : index
      %c0_147 = arith.constant 0 : index
      %c0_148 = arith.constant 0 : index
      %233 = vector.load %arg21[%c0_146, %c0_147, %c0_148] : memref<4x8x8xbf16, #tpu.memory_space<vmem>>, vector<1x8x8xbf16>
      %234 = vector.shape_cast %233 : vector<1x8x8xbf16> to vector<8x8xbf16>
      %235 = vector.shape_cast %232 : vector<8x8xbf16> to vector<1x8x8xbf16>
      tpu.vector_store %arg21[%c0_146, %c0_147, %c0_148], %235 {strides = array<i32>} : memref<4x8x8xbf16, #tpu.memory_space<vmem>>, vector<1x8x8xbf16>,
      %236 = arith.truncf %231 : vector<8x8xf32> to vector<8x8xbf16>
      %c0_149 = arith.constant 0 : index
      %c0_150 = arith.constant 0 : index
      %c0_151 = arith.constant 0 : index
      %237 = vector.load %arg22[%c0_149, %c0_150, %c0_151] : memref<4x8x8xbf16, #tpu.memory_space<vmem>>, vector<1x8x8xbf16>
      %238 = vector.shape_cast %237 : vector<1x8x8xbf16> to vector<8x8xbf16>
      %239 = vector.shape_cast %236 : vector<8x8xbf16> to vector<1x8x8xbf16>
      tpu.vector_store %arg22[%c0_149, %c0_150, %c0_151], %239 {strides = array<i32>} : memref<4x8x8xbf16, #tpu.memory_space<vmem>>, vector<1x8x8xbf16>,
      %c1_152 = arith.constant 1 : index
      %c0_153 = arith.constant 0 : index
      %c0_154 = arith.constant 0 : index
      %240 = vector.load %arg5[%c1_152, %c0_153, %c0_154] : memref<4x32x8xbf16, #tpu.memory_space<vmem>>, vector<1x32x8xbf16>
      %241 = vector.shape_cast %240 : vector<1x32x8xbf16> to vector<32x8xbf16>
      %cst_155 = arith.constant dense<0.000000e+00> : vector<8x8xf32>
      %242 = tpu.matmul %217, %241, %cst_155 {dimension_numbers = #tpu.dot_dimension_numbers<[1], [0], [0], [1], [0, 0, 1, 1], [], []>} : vector<8x32xbf16>, vector<32x8xbf16>, vector<8x8xf32> -> vector<8x8xf32>
      %c1_156 = arith.constant 1 : index
      %c0_157 = arith.constant 0 : index
      %c0_158 = arith.constant 0 : index
      %243 = vector.load %arg9[%c1_156, %c0_157, %c0_158] : memref<4x1x8xf32, #tpu.memory_space<vmem>>, vector<1x1x8xf32>
      %244 = vector.shape_cast %243 : vector<1x1x8xf32> to vector<1x8xf32>
      %245 = vector.broadcast %244 : vector<1x8xf32> to vector<8x8xf32>
      %246 = arith.addf %242, %245 : vector<8x8xf32>
      %c1_159 = arith.constant 1 : index
      %c0_160 = arith.constant 0 : index
      %c0_161 = arith.constant 0 : index
      %247 = vector.load %arg6[%c1_159, %c0_160, %c0_161] : memref<4x32x8xbf16, #tpu.memory_space<vmem>>, vector<1x32x8xbf16>
      %248 = vector.shape_cast %247 : vector<1x32x8xbf16> to vector<32x8xbf16>
      %cst_162 = arith.constant dense<0.000000e+00> : vector<8x8xf32>
      %249 = tpu.matmul %217, %248, %cst_162 {dimension_numbers = #tpu.dot_dimension_numbers<[1], [0], [0], [1], [0, 0, 1, 1], [], []>} : vector<8x32xbf16>, vector<32x8xbf16>, vector<8x8xf32> -> vector<8x8xf32>
      %c1_163 = arith.constant 1 : index
      %c0_164 = arith.constant 0 : index
      %c0_165 = arith.constant 0 : index
      %250 = vector.load %arg10[%c1_163, %c0_164, %c0_165] : memref<4x1x8xf32, #tpu.memory_space<vmem>>, vector<1x1x8xf32>
      %251 = vector.shape_cast %250 : vector<1x1x8xf32> to vector<1x8xf32>
      %252 = vector.broadcast %251 : vector<1x8xf32> to vector<8x8xf32>
      %253 = arith.addf %249, %252 : vector<8x8xf32>
      %254 = arith.truncf %246 : vector<8x8xf32> to vector<8x8xbf16>
      %c1_166 = arith.constant 1 : index
      %c0_167 = arith.constant 0 : index
      %c0_168 = arith.constant 0 : index
      %255 = vector.load %arg21[%c1_166, %c0_167, %c0_168] : memref<4x8x8xbf16, #tpu.memory_space<vmem>>, vector<1x8x8xbf16>
      %256 = vector.shape_cast %255 : vector<1x8x8xbf16> to vector<8x8xbf16>
      %257 = vector.shape_cast %254 : vector<8x8xbf16> to vector<1x8x8xbf16>
      tpu.vector_store %arg21[%c1_166, %c0_167, %c0_168], %257 {strides = array<i32>} : memref<4x8x8xbf16, #tpu.memory_space<vmem>>, vector<1x8x8xbf16>,
      %258 = arith.truncf %253 : vector<8x8xf32> to vector<8x8xbf16>
      %c1_169 = arith.constant 1 : index
      %c0_170 = arith.constant 0 : index
      %c0_171 = arith.constant 0 : index
      %259 = vector.load %arg22[%c1_169, %c0_170, %c0_171] : memref<4x8x8xbf16, #tpu.memory_space<vmem>>, vector<1x8x8xbf16>
      %260 = vector.shape_cast %259 : vector<1x8x8xbf16> to vector<8x8xbf16>
      %261 = vector.shape_cast %258 : vector<8x8xbf16> to vector<1x8x8xbf16>
      tpu.vector_store %arg22[%c1_169, %c0_170, %c0_171], %261 {strides = array<i32>} : memref<4x8x8xbf16, #tpu.memory_space<vmem>>, vector<1x8x8xbf16>,
      %c2_172 = arith.constant 2 : index
      %c0_173 = arith.constant 0 : index
      %c0_174 = arith.constant 0 : index
      %262 = vector.load %arg5[%c2_172, %c0_173, %c0_174] : memref<4x32x8xbf16, #tpu.memory_space<vmem>>, vector<1x32x8xbf16>
      %263 = vector.shape_cast %262 : vector<1x32x8xbf16> to vector<32x8xbf16>
      %cst_175 = arith.constant dense<0.000000e+00> : vector<8x8xf32>
      %264 = tpu.matmul %217, %263, %cst_175 {dimension_numbers = #tpu.dot_dimension_numbers<[1], [0], [0], [1], [0, 0, 1, 1], [], []>} : vector<8x32xbf16>, vector<32x8xbf16>, vector<8x8xf32> -> vector<8x8xf32>
      %c2_176 = arith.constant 2 : index
      %c0_177 = arith.constant 0 : index
      %c0_178 = arith.constant 0 : index
      %265 = vector.load %arg9[%c2_176, %c0_177, %c0_178] : memref<4x1x8xf32, #tpu.memory_space<vmem>>, vector<1x1x8xf32>
      %266 = vector.shape_cast %265 : vector<1x1x8xf32> to vector<1x8xf32>
      %267 = vector.broadcast %266 : vector<1x8xf32> to vector<8x8xf32>
      %268 = arith.addf %264, %267 : vector<8x8xf32>
      %c2_179 = arith.constant 2 : index
      %c0_180 = arith.constant 0 : index
      %c0_181 = arith.constant 0 : index
      %269 = vector.load %arg6[%c2_179, %c0_180, %c0_181] : memref<4x32x8xbf16, #tpu.memory_space<vmem>>, vector<1x32x8xbf16>
      %270 = vector.shape_cast %269 : vector<1x32x8xbf16> to vector<32x8xbf16>
      %cst_182 = arith.constant dense<0.000000e+00> : vector<8x8xf32>
      %271 = tpu.matmul %217, %270, %cst_182 {dimension_numbers = #tpu.dot_dimension_numbers<[1], [0], [0], [1], [0, 0, 1, 1], [], []>} : vector<8x32xbf16>, vector<32x8xbf16>, vector<8x8xf32> -> vector<8x8xf32>
      %c2_183 = arith.constant 2 : index
      %c0_184 = arith.constant 0 : index
      %c0_185 = arith.constant 0 : index
      %272 = vector.load %arg10[%c2_183, %c0_184, %c0_185] : memref<4x1x8xf32, #tpu.memory_space<vmem>>, vector<1x1x8xf32>
      %273 = vector.shape_cast %272 : vector<1x1x8xf32> to vector<1x8xf32>
      %274 = vector.broadcast %273 : vector<1x8xf32> to vector<8x8xf32>
      %275 = arith.addf %271, %274 : vector<8x8xf32>
      %276 = arith.truncf %268 : vector<8x8xf32> to vector<8x8xbf16>
      %c2_186 = arith.constant 2 : index
      %c0_187 = arith.constant 0 : index
      %c0_188 = arith.constant 0 : index
      %277 = vector.load %arg21[%c2_186, %c0_187, %c0_188] : memref<4x8x8xbf16, #tpu.memory_space<vmem>>, vector<1x8x8xbf16>
      %278 = vector.shape_cast %277 : vector<1x8x8xbf16> to vector<8x8xbf16>
      %279 = vector.shape_cast %276 : vector<8x8xbf16> to vector<1x8x8xbf16>
      tpu.vector_store %arg21[%c2_186, %c0_187, %c0_188], %279 {strides = array<i32>} : memref<4x8x8xbf16, #tpu.memory_space<vmem>>, vector<1x8x8xbf16>,
      %280 = arith.truncf %275 : vector<8x8xf32> to vector<8x8xbf16>
      %c2_189 = arith.constant 2 : index
      %c0_190 = arith.constant 0 : index
      %c0_191 = arith.constant 0 : index
      %281 = vector.load %arg22[%c2_189, %c0_190, %c0_191] : memref<4x8x8xbf16, #tpu.memory_space<vmem>>, vector<1x8x8xbf16>
      %282 = vector.shape_cast %281 : vector<1x8x8xbf16> to vector<8x8xbf16>
      %283 = vector.shape_cast %280 : vector<8x8xbf16> to vector<1x8x8xbf16>
      tpu.vector_store %arg22[%c2_189, %c0_190, %c0_191], %283 {strides = array<i32>} : memref<4x8x8xbf16, #tpu.memory_space<vmem>>, vector<1x8x8xbf16>,
      %c3_192 = arith.constant 3 : index
      %c0_193 = arith.constant 0 : index
      %c0_194 = arith.constant 0 : index
      %284 = vector.load %arg5[%c3_192, %c0_193, %c0_194] : memref<4x32x8xbf16, #tpu.memory_space<vmem>>, vector<1x32x8xbf16>
      %285 = vector.shape_cast %284 : vector<1x32x8xbf16> to vector<32x8xbf16>
      %cst_195 = arith.constant dense<0.000000e+00> : vector<8x8xf32>
      %286 = tpu.matmul %217, %285, %cst_195 {dimension_numbers = #tpu.dot_dimension_numbers<[1], [0], [0], [1], [0, 0, 1, 1], [], []>} : vector<8x32xbf16>, vector<32x8xbf16>, vector<8x8xf32> -> vector<8x8xf32>
      %c3_196 = arith.constant 3 : index
      %c0_197 = arith.constant 0 : index
      %c0_198 = arith.constant 0 : index
      %287 = vector.load %arg9[%c3_196, %c0_197, %c0_198] : memref<4x1x8xf32, #tpu.memory_space<vmem>>, vector<1x1x8xf32>
      %288 = vector.shape_cast %287 : vector<1x1x8xf32> to vector<1x8xf32>
      %289 = vector.broadcast %288 : vector<1x8xf32> to vector<8x8xf32>
      %290 = arith.addf %286, %289 : vector<8x8xf32>
      %c3_199 = arith.constant 3 : index
      %c0_200 = arith.constant 0 : index
      %c0_201 = arith.constant 0 : index
      %291 = vector.load %arg6[%c3_199, %c0_200, %c0_201] : memref<4x32x8xbf16, #tpu.memory_space<vmem>>, vector<1x32x8xbf16>
      %292 = vector.shape_cast %291 : vector<1x32x8xbf16> to vector<32x8xbf16>
      %cst_202 = arith.constant dense<0.000000e+00> : vector<8x8xf32>
      %293 = tpu.matmul %217, %292, %cst_202 {dimension_numbers = #tpu.dot_dimension_numbers<[1], [0], [0], [1], [0, 0, 1, 1], [], []>} : vector<8x32xbf16>, vector<32x8xbf16>, vector<8x8xf32> -> vector<8x8xf32>
      %c3_203 = arith.constant 3 : index
      %c0_204 = arith.constant 0 : index
      %c0_205 = arith.constant 0 : index
      %294 = vector.load %arg10[%c3_203, %c0_204, %c0_205] : memref<4x1x8xf32, #tpu.memory_space<vmem>>, vector<1x1x8xf32>
      %295 = vector.shape_cast %294 : vector<1x1x8xf32> to vector<1x8xf32>
      %296 = vector.broadcast %295 : vector<1x8xf32> to vector<8x8xf32>
      %297 = arith.addf %293, %296 : vector<8x8xf32>
      %298 = arith.truncf %290 : vector<8x8xf32> to vector<8x8xbf16>
      %c3_206 = arith.constant 3 : index
      %c0_207 = arith.constant 0 : index
      %c0_208 = arith.constant 0 : index
      %299 = vector.load %arg21[%c3_206, %c0_207, %c0_208] : memref<4x8x8xbf16, #tpu.memory_space<vmem>>, vector<1x8x8xbf16>
      %300 = vector.shape_cast %299 : vector<1x8x8xbf16> to vector<8x8xbf16>
      %301 = vector.shape_cast %298 : vector<8x8xbf16> to vector<1x8x8xbf16>
      tpu.vector_store %arg21[%c3_206, %c0_207, %c0_208], %301 {strides = array<i32>} : memref<4x8x8xbf16, #tpu.memory_space<vmem>>, vector<1x8x8xbf16>,
      %302 = arith.truncf %297 : vector<8x8xf32> to vector<8x8xbf16>
      %c3_209 = arith.constant 3 : index
      %c0_210 = arith.constant 0 : index
      %c0_211 = arith.constant 0 : index
      %303 = vector.load %arg22[%c3_209, %c0_210, %c0_211] : memref<4x8x8xbf16, #tpu.memory_space<vmem>>, vector<1x8x8xbf16>
      %304 = vector.shape_cast %303 : vector<1x8x8xbf16> to vector<8x8xbf16>
      %305 = vector.shape_cast %302 : vector<8x8xbf16> to vector<1x8x8xbf16>
      tpu.vector_store %arg22[%c3_209, %c0_210, %c0_211], %305 {strides = array<i32>} : memref<4x8x8xbf16, #tpu.memory_space<vmem>>, vector<1x8x8xbf16>,
    } else {
    }
    %c0 = arith.constant 0 : index
    %c0_1 = arith.constant 0 : index
    %c0_2 = arith.constant 0 : index
    %3 = vector.load %arg2[%c0, %c0_1, %c0_2] : memref<1x8x32xf32, #tpu.memory_space<vmem>>, vector<1x8x32xf32>
    %4 = vector.shape_cast %3 : vector<1x8x32xf32> to vector<8x32xf32>
    %5 = arith.truncf %4 : vector<8x32xf32> to vector<8x32xbf16>
    %cst = arith.constant 0.000000e+00 : f32
    %6 = vector.broadcast %cst : f32 to vector<8x32xf32>
    %c0_3 = arith.constant 0 : index
    %c0_4 = arith.constant 0 : index
    %c0_5 = arith.constant 0 : index
    %7 = vector.load %arg4[%c0_3, %c0_4, %c0_5] : memref<4x32x8xbf16, #tpu.memory_space<vmem>>, vector<1x32x8xbf16>
    %8 = vector.shape_cast %7 : vector<1x32x8xbf16> to vector<32x8xbf16>
    %cst_6 = arith.constant dense<0.000000e+00> : vector<8x8xf32>
    %9 = tpu.matmul %5, %8, %cst_6 {dimension_numbers = #tpu.dot_dimension_numbers<[1], [0], [0], [1], [0, 0, 1, 1], [], []>} : vector<8x32xbf16>, vector<32x8xbf16>, vector<8x8xf32> -> vector<8x8xf32>
    %c0_7 = arith.constant 0 : index
    %c0_8 = arith.constant 0 : index
    %c0_9 = arith.constant 0 : index
    %10 = vector.load %arg8[%c0_7, %c0_8, %c0_9] : memref<4x1x8xf32, #tpu.memory_space<vmem>>, vector<1x1x8xf32>
    %11 = vector.shape_cast %10 : vector<1x1x8xf32> to vector<1x8xf32>
    %12 = vector.broadcast %11 : vector<1x8xf32> to vector<8x8xf32>
    %13 = arith.addf %9, %12 : vector<8x8xf32>
    %cst_10 = arith.constant 0.353553385 : f32
    %14 = vector.broadcast %cst_10 : f32 to vector<8x8xf32>
    %15 = arith.mulf %13, %14 : vector<8x8xf32>
    %16 = arith.truncf %15 : vector<8x8xf32> to vector<8x8xbf16>
    %c0_11 = arith.constant 0 : index
    %c0_12 = arith.constant 0 : index
    %c0_13 = arith.constant 0 : index
    %17 = vector.load %arg21[%c0_11, %c0_12, %c0_13] : memref<4x8x8xbf16, #tpu.memory_space<vmem>>, vector<1x8x8xbf16>
    %18 = vector.shape_cast %17 : vector<1x8x8xbf16> to vector<8x8xbf16>
    "tpu.trace_start"() <{level = 10 : i32, message = "qd,kd->qk"}> : () -> ()
    %cst_14 = arith.constant dense<0.000000e+00> : vector<8x8xf32>
    %19 = tpu.matmul %16, %18, %cst_14 {dimension_numbers = #tpu.dot_dimension_numbers<[1], [1], [0], [0], [0, 0, 1, 0], [], []>} : vector<8x8xbf16>, vector<8x8xbf16>, vector<8x8xf32> -> vector<8x8xf32>
    "tpu.trace_stop"() : () -> ()
    %cst_15 = arith.constant dense<0xFF800000> : vector<8xf32>
    %20 = vector.multi_reduction <maximumf>, %19, %cst_15 [1] : vector<8x8xf32> to vector<8xf32>
    %21 = vector.shape_cast %20 : vector<8xf32> to vector<8x1xf32>
    %22 = vector.broadcast %21 : vector<8x1xf32> to vector<8x8xf32>
    %23 = arith.subf %19, %22 : vector<8x8xf32>
    %24 = math.exp %23 : vector<8x8xf32>
    %cst_16 = arith.constant dense<0.000000e+00> : vector<8xf32>
    %25 = vector.multi_reduction <add>, %24, %cst_16 [1] : vector<8x8xf32> to vector<8xf32>
    %26 = vector.shape_cast %25 : vector<8xf32> to vector<8x1xf32>
    %27 = tpu.reciprocal %26 {approx = true} : vector<8x1xf32> -> vector<8x1xf32>
    %28 = vector.broadcast %27 : vector<8x1xf32> to vector<8x8xf32>
    %29 = arith.mulf %24, %28 : vector<8x8xf32>
    %30 = arith.truncf %29 : vector<8x8xf32> to vector<8x8xbf16>
    %c0_17 = arith.constant 0 : index
    %c0_18 = arith.constant 0 : index
    %c0_19 = arith.constant 0 : index
    %31 = vector.load %arg22[%c0_17, %c0_18, %c0_19] : memref<4x8x8xbf16, #tpu.memory_space<vmem>>, vector<1x8x8xbf16>
    %32 = vector.shape_cast %31 : vector<1x8x8xbf16> to vector<8x8xbf16>
    %cst_20 = arith.constant dense<0.000000e+00> : vector<8x8xf32>
    %33 = tpu.matmul %30, %32, %cst_20 {dimension_numbers = #tpu.dot_dimension_numbers<[1], [0], [0], [1], [0, 0, 1, 1], [], []>} : vector<8x8xbf16>, vector<8x8xbf16>, vector<8x8xf32> -> vector<8x8xf32>
    %34 = arith.truncf %33 : vector<8x8xf32> to vector<8x8xbf16>
    %c0_21 = arith.constant 0 : index
    %c0_22 = arith.constant 0 : index
    %c0_23 = arith.constant 0 : index
    %35 = vector.load %arg7[%c0_21, %c0_22, %c0_23] : memref<4x8x32xbf16, #tpu.memory_space<vmem>>, vector<1x8x32xbf16>
    %36 = vector.shape_cast %35 : vector<1x8x32xbf16> to vector<8x32xbf16>
    %cst_24 = arith.constant dense<0.000000e+00> : vector<8x32xf32>
    %37 = tpu.matmul %34, %36, %cst_24 {dimension_numbers = #tpu.dot_dimension_numbers<[1], [0], [0], [1], [0, 0, 1, 1], [], []>} : vector<8x8xbf16>, vector<8x32xbf16>, vector<8x32xf32> -> vector<8x32xf32>
    %38 = arith.addf %6, %37 : vector<8x32xf32>
    %c1 = arith.constant 1 : index
    %c0_25 = arith.constant 0 : index
    %c0_26 = arith.constant 0 : index
    %39 = vector.load %arg4[%c1, %c0_25, %c0_26] : memref<4x32x8xbf16, #tpu.memory_space<vmem>>, vector<1x32x8xbf16>
    %40 = vector.shape_cast %39 : vector<1x32x8xbf16> to vector<32x8xbf16>
    %cst_27 = arith.constant dense<0.000000e+00> : vector<8x8xf32>
    %41 = tpu.matmul %5, %40, %cst_27 {dimension_numbers = #tpu.dot_dimension_numbers<[1], [0], [0], [1], [0, 0, 1, 1], [], []>} : vector<8x32xbf16>, vector<32x8xbf16>, vector<8x8xf32> -> vector<8x8xf32>
    %c1_28 = arith.constant 1 : index
    %c0_29 = arith.constant 0 : index
    %c0_30 = arith.constant 0 : index
    %42 = vector.load %arg8[%c1_28, %c0_29, %c0_30] : memref<4x1x8xf32, #tpu.memory_space<vmem>>, vector<1x1x8xf32>
    %43 = vector.shape_cast %42 : vector<1x1x8xf32> to vector<1x8xf32>
    %44 = vector.broadcast %43 : vector<1x8xf32> to vector<8x8xf32>
    %45 = arith.addf %41, %44 : vector<8x8xf32>
    %cst_31 = arith.constant 0.353553385 : f32
    %46 = vector.broadcast %cst_31 : f32 to vector<8x8xf32>
    %47 = arith.mulf %45, %46 : vector<8x8xf32>
    %48 = arith.truncf %47 : vector<8x8xf32> to vector<8x8xbf16>
    %c1_32 = arith.constant 1 : index
    %c0_33 = arith.constant 0 : index
    %c0_34 = arith.constant 0 : index
    %49 = vector.load %arg21[%c1_32, %c0_33, %c0_34] : memref<4x8x8xbf16, #tpu.memory_space<vmem>>, vector<1x8x8xbf16>
    %50 = vector.shape_cast %49 : vector<1x8x8xbf16> to vector<8x8xbf16>
    "tpu.trace_start"() <{level = 10 : i32, message = "qd,kd->qk"}> : () -> ()
    %cst_35 = arith.constant dense<0.000000e+00> : vector<8x8xf32>
    %51 = tpu.matmul %48, %50, %cst_35 {dimension_numbers = #tpu.dot_dimension_numbers<[1], [1], [0], [0], [0, 0, 1, 0], [], []>} : vector<8x8xbf16>, vector<8x8xbf16>, vector<8x8xf32> -> vector<8x8xf32>
    "tpu.trace_stop"() : () -> ()
    %cst_36 = arith.constant dense<0xFF800000> : vector<8xf32>
    %52 = vector.multi_reduction <maximumf>, %51, %cst_36 [1] : vector<8x8xf32> to vector<8xf32>
    %53 = vector.shape_cast %52 : vector<8xf32> to vector<8x1xf32>
    %54 = vector.broadcast %53 : vector<8x1xf32> to vector<8x8xf32>
    %55 = arith.subf %51, %54 : vector<8x8xf32>
    %56 = math.exp %55 : vector<8x8xf32>
    %cst_37 = arith.constant dense<0.000000e+00> : vector<8xf32>
    %57 = vector.multi_reduction <add>, %56, %cst_37 [1] : vector<8x8xf32> to vector<8xf32>
    %58 = vector.shape_cast %57 : vector<8xf32> to vector<8x1xf32>
    %59 = tpu.reciprocal %58 {approx = true} : vector<8x1xf32> -> vector<8x1xf32>
    %60 = vector.broadcast %59 : vector<8x1xf32> to vector<8x8xf32>
    %61 = arith.mulf %56, %60 : vector<8x8xf32>
    %62 = arith.truncf %61 : vector<8x8xf32> to vector<8x8xbf16>
    %c1_38 = arith.constant 1 : index
    %c0_39 = arith.constant 0 : index
    %c0_40 = arith.constant 0 : index
    %63 = vector.load %arg22[%c1_38, %c0_39, %c0_40] : memref<4x8x8xbf16, #tpu.memory_space<vmem>>, vector<1x8x8xbf16>
    %64 = vector.shape_cast %63 : vector<1x8x8xbf16> to vector<8x8xbf16>
    %cst_41 = arith.constant dense<0.000000e+00> : vector<8x8xf32>
    %65 = tpu.matmul %62, %64, %cst_41 {dimension_numbers = #tpu.dot_dimension_numbers<[1], [0], [0], [1], [0, 0, 1, 1], [], []>} : vector<8x8xbf16>, vector<8x8xbf16>, vector<8x8xf32> -> vector<8x8xf32>
    %66 = arith.truncf %65 : vector<8x8xf32> to vector<8x8xbf16>
    %c1_42 = arith.constant 1 : index
    %c0_43 = arith.constant 0 : index
    %c0_44 = arith.constant 0 : index
    %67 = vector.load %arg7[%c1_42, %c0_43, %c0_44] : memref<4x8x32xbf16, #tpu.memory_space<vmem>>, vector<1x8x32xbf16>
    %68 = vector.shape_cast %67 : vector<1x8x32xbf16> to vector<8x32xbf16>
    %cst_45 = arith.constant dense<0.000000e+00> : vector<8x32xf32>
    %69 = tpu.matmul %66, %68, %cst_45 {dimension_numbers = #tpu.dot_dimension_numbers<[1], [0], [0], [1], [0, 0, 1, 1], [], []>} : vector<8x8xbf16>, vector<8x32xbf16>, vector<8x32xf32> -> vector<8x32xf32>
    %70 = arith.addf %38, %69 : vector<8x32xf32>
    %c2 = arith.constant 2 : index
    %c0_46 = arith.constant 0 : index
    %c0_47 = arith.constant 0 : index
    %71 = vector.load %arg4[%c2, %c0_46, %c0_47] : memref<4x32x8xbf16, #tpu.memory_space<vmem>>, vector<1x32x8xbf16>
    %72 = vector.shape_cast %71 : vector<1x32x8xbf16> to vector<32x8xbf16>
    %cst_48 = arith.constant dense<0.000000e+00> : vector<8x8xf32>
    %73 = tpu.matmul %5, %72, %cst_48 {dimension_numbers = #tpu.dot_dimension_numbers<[1], [0], [0], [1], [0, 0, 1, 1], [], []>} : vector<8x32xbf16>, vector<32x8xbf16>, vector<8x8xf32> -> vector<8x8xf32>
    %c2_49 = arith.constant 2 : index
    %c0_50 = arith.constant 0 : index
    %c0_51 = arith.constant 0 : index
    %74 = vector.load %arg8[%c2_49, %c0_50, %c0_51] : memref<4x1x8xf32, #tpu.memory_space<vmem>>, vector<1x1x8xf32>
    %75 = vector.shape_cast %74 : vector<1x1x8xf32> to vector<1x8xf32>
    %76 = vector.broadcast %75 : vector<1x8xf32> to vector<8x8xf32>
    %77 = arith.addf %73, %76 : vector<8x8xf32>
    %cst_52 = arith.constant 0.353553385 : f32
    %78 = vector.broadcast %cst_52 : f32 to vector<8x8xf32>
    %79 = arith.mulf %77, %78 : vector<8x8xf32>
    %80 = arith.truncf %79 : vector<8x8xf32> to vector<8x8xbf16>
    %c2_53 = arith.constant 2 : index
    %c0_54 = arith.constant 0 : index
    %c0_55 = arith.constant 0 : index
    %81 = vector.load %arg21[%c2_53, %c0_54, %c0_55] : memref<4x8x8xbf16, #tpu.memory_space<vmem>>, vector<1x8x8xbf16>
    %82 = vector.shape_cast %81 : vector<1x8x8xbf16> to vector<8x8xbf16>
    "tpu.trace_start"() <{level = 10 : i32, message = "qd,kd->qk"}> : () -> ()
    %cst_56 = arith.constant dense<0.000000e+00> : vector<8x8xf32>
    %83 = tpu.matmul %80, %82, %cst_56 {dimension_numbers = #tpu.dot_dimension_numbers<[1], [1], [0], [0], [0, 0, 1, 0], [], []>} : vector<8x8xbf16>, vector<8x8xbf16>, vector<8x8xf32> -> vector<8x8xf32>
    "tpu.trace_stop"() : () -> ()
    %cst_57 = arith.constant dense<0xFF800000> : vector<8xf32>
    %84 = vector.multi_reduction <maximumf>, %83, %cst_57 [1] : vector<8x8xf32> to vector<8xf32>
    %85 = vector.shape_cast %84 : vector<8xf32> to vector<8x1xf32>
    %86 = vector.broadcast %85 : vector<8x1xf32> to vector<8x8xf32>
    %87 = arith.subf %83, %86 : vector<8x8xf32>
    %88 = math.exp %87 : vector<8x8xf32>
    %cst_58 = arith.constant dense<0.000000e+00> : vector<8xf32>
    %89 = vector.multi_reduction <add>, %88, %cst_58 [1] : vector<8x8xf32> to vector<8xf32>
    %90 = vector.shape_cast %89 : vector<8xf32> to vector<8x1xf32>
    %91 = tpu.reciprocal %90 {approx = true} : vector<8x1xf32> -> vector<8x1xf32>
    %92 = vector.broadcast %91 : vector<8x1xf32> to vector<8x8xf32>
    %93 = arith.mulf %88, %92 : vector<8x8xf32>
    %94 = arith.truncf %93 : vector<8x8xf32> to vector<8x8xbf16>
    %c2_59 = arith.constant 2 : index
    %c0_60 = arith.constant 0 : index
    %c0_61 = arith.constant 0 : index
    %95 = vector.load %arg22[%c2_59, %c0_60, %c0_61] : memref<4x8x8xbf16, #tpu.memory_space<vmem>>, vector<1x8x8xbf16>
    %96 = vector.shape_cast %95 : vector<1x8x8xbf16> to vector<8x8xbf16>
    %cst_62 = arith.constant dense<0.000000e+00> : vector<8x8xf32>
    %97 = tpu.matmul %94, %96, %cst_62 {dimension_numbers = #tpu.dot_dimension_numbers<[1], [0], [0], [1], [0, 0, 1, 1], [], []>} : vector<8x8xbf16>, vector<8x8xbf16>, vector<8x8xf32> -> vector<8x8xf32>
    %98 = arith.truncf %97 : vector<8x8xf32> to vector<8x8xbf16>
    %c2_63 = arith.constant 2 : index
    %c0_64 = arith.constant 0 : index
    %c0_65 = arith.constant 0 : index
    %99 = vector.load %arg7[%c2_63, %c0_64, %c0_65] : memref<4x8x32xbf16, #tpu.memory_space<vmem>>, vector<1x8x32xbf16>
    %100 = vector.shape_cast %99 : vector<1x8x32xbf16> to vector<8x32xbf16>
    %cst_66 = arith.constant dense<0.000000e+00> : vector<8x32xf32>
    %101 = tpu.matmul %98, %100, %cst_66 {dimension_numbers = #tpu.dot_dimension_numbers<[1], [0], [0], [1], [0, 0, 1, 1], [], []>} : vector<8x8xbf16>, vector<8x32xbf16>, vector<8x32xf32> -> vector<8x32xf32>
    %102 = arith.addf %70, %101 : vector<8x32xf32>
    %c3 = arith.constant 3 : index
    %c0_67 = arith.constant 0 : index
    %c0_68 = arith.constant 0 : index
    %103 = vector.load %arg4[%c3, %c0_67, %c0_68] : memref<4x32x8xbf16, #tpu.memory_space<vmem>>, vector<1x32x8xbf16>
    %104 = vector.shape_cast %103 : vector<1x32x8xbf16> to vector<32x8xbf16>
    %cst_69 = arith.constant dense<0.000000e+00> : vector<8x8xf32>
    %105 = tpu.matmul %5, %104, %cst_69 {dimension_numbers = #tpu.dot_dimension_numbers<[1], [0], [0], [1], [0, 0, 1, 1], [], []>} : vector<8x32xbf16>, vector<32x8xbf16>, vector<8x8xf32> -> vector<8x8xf32>
    %c3_70 = arith.constant 3 : index
    %c0_71 = arith.constant 0 : index
    %c0_72 = arith.constant 0 : index
    %106 = vector.load %arg8[%c3_70, %c0_71, %c0_72] : memref<4x1x8xf32, #tpu.memory_space<vmem>>, vector<1x1x8xf32>
    %107 = vector.shape_cast %106 : vector<1x1x8xf32> to vector<1x8xf32>
    %108 = vector.broadcast %107 : vector<1x8xf32> to vector<8x8xf32>
    %109 = arith.addf %105, %108 : vector<8x8xf32>
    %cst_73 = arith.constant 0.353553385 : f32
    %110 = vector.broadcast %cst_73 : f32 to vector<8x8xf32>
    %111 = arith.mulf %109, %110 : vector<8x8xf32>
    %112 = arith.truncf %111 : vector<8x8xf32> to vector<8x8xbf16>
    %c3_74 = arith.constant 3 : index
    %c0_75 = arith.constant 0 : index
    %c0_76 = arith.constant 0 : index
    %113 = vector.load %arg21[%c3_74, %c0_75, %c0_76] : memref<4x8x8xbf16, #tpu.memory_space<vmem>>, vector<1x8x8xbf16>
    %114 = vector.shape_cast %113 : vector<1x8x8xbf16> to vector<8x8xbf16>
    "tpu.trace_start"() <{level = 10 : i32, message = "qd,kd->qk"}> : () -> ()
    %cst_77 = arith.constant dense<0.000000e+00> : vector<8x8xf32>
    %115 = tpu.matmul %112, %114, %cst_77 {dimension_numbers = #tpu.dot_dimension_numbers<[1], [1], [0], [0], [0, 0, 1, 0], [], []>} : vector<8x8xbf16>, vector<8x8xbf16>, vector<8x8xf32> -> vector<8x8xf32>
    "tpu.trace_stop"() : () -> ()
    %cst_78 = arith.constant dense<0xFF800000> : vector<8xf32>
    %116 = vector.multi_reduction <maximumf>, %115, %cst_78 [1] : vector<8x8xf32> to vector<8xf32>
    %117 = vector.shape_cast %116 : vector<8xf32> to vector<8x1xf32>
    %118 = vector.broadcast %117 : vector<8x1xf32> to vector<8x8xf32>
    %119 = arith.subf %115, %118 : vector<8x8xf32>
    %120 = math.exp %119 : vector<8x8xf32>
    %cst_79 = arith.constant dense<0.000000e+00> : vector<8xf32>
    %121 = vector.multi_reduction <add>, %120, %cst_79 [1] : vector<8x8xf32> to vector<8xf32>
    %122 = vector.shape_cast %121 : vector<8xf32> to vector<8x1xf32>
    %123 = tpu.reciprocal %122 {approx = true} : vector<8x1xf32> -> vector<8x1xf32>
    %124 = vector.broadcast %123 : vector<8x1xf32> to vector<8x8xf32>
    %125 = arith.mulf %120, %124 : vector<8x8xf32>
    %126 = arith.truncf %125 : vector<8x8xf32> to vector<8x8xbf16>
    %c3_80 = arith.constant 3 : index
    %c0_81 = arith.constant 0 : index
    %c0_82 = arith.constant 0 : index
    %127 = vector.load %arg22[%c3_80, %c0_81, %c0_82] : memref<4x8x8xbf16, #tpu.memory_space<vmem>>, vector<1x8x8xbf16>
    %128 = vector.shape_cast %127 : vector<1x8x8xbf16> to vector<8x8xbf16>
    %cst_83 = arith.constant dense<0.000000e+00> : vector<8x8xf32>
    %129 = tpu.matmul %126, %128, %cst_83 {dimension_numbers = #tpu.dot_dimension_numbers<[1], [0], [0], [1], [0, 0, 1, 1], [], []>} : vector<8x8xbf16>, vector<8x8xbf16>, vector<8x8xf32> -> vector<8x8xf32>
    %130 = arith.truncf %129 : vector<8x8xf32> to vector<8x8xbf16>
    %c3_84 = arith.constant 3 : index
    %c0_85 = arith.constant 0 : index
    %c0_86 = arith.constant 0 : index
    %131 = vector.load %arg7[%c3_84, %c0_85, %c0_86] : memref<4x8x32xbf16, #tpu.memory_space<vmem>>, vector<1x8x32xbf16>
    %132 = vector.shape_cast %131 : vector<1x8x32xbf16> to vector<8x32xbf16>
    %cst_87 = arith.constant dense<0.000000e+00> : vector<8x32xf32>
    %133 = tpu.matmul %130, %132, %cst_87 {dimension_numbers = #tpu.dot_dimension_numbers<[1], [0], [0], [1], [0, 0, 1, 1], [], []>} : vector<8x8xbf16>, vector<8x32xbf16>, vector<8x32xf32> -> vector<8x32xf32>
    %134 = arith.addf %102, %133 : vector<8x32xf32>
    %c0_88 = arith.constant 0 : index
    %c0_89 = arith.constant 0 : index
    %135 = vector.load %arg11[%c0_88, %c0_89] : memref<1x32xf32, #tpu.memory_space<vmem>>, vector<1x32xf32>
    %136 = vector.broadcast %135 : vector<1x32xf32> to vector<8x32xf32>
    %137 = arith.addf %134, %136 : vector<8x32xf32>
    %138 = arith.addf %4, %137 : vector<8x32xf32>
    %c0_90 = arith.constant 0 : index
    %c0_91 = arith.constant 0 : index
    %139 = vector.load %arg16[%c0_90, %c0_91] : memref<1x32xf32, #tpu.memory_space<vmem>>, vector<1x32xf32>
    %c0_92 = arith.constant 0 : index
    %c0_93 = arith.constant 0 : index
    %140 = vector.load %arg17[%c0_92, %c0_93] : memref<1x32xf32, #tpu.memory_space<vmem>>, vector<1x32xf32>
    %cst_94 = arith.constant dense<0.000000e+00> : vector<8xf32>
    %141 = vector.multi_reduction <add>, %138, %cst_94 [1] : vector<8x32xf32> to vector<8xf32>
    %142 = vector.shape_cast %141 : vector<8xf32> to vector<8x1xf32>
    %cst_95 = arith.constant 3.200000e+01 : f32
    %143 = vector.broadcast %cst_95 : f32 to vector<8x1xf32>
    %144 = arith.divf %142, %143 : vector<8x1xf32>
    %145 = vector.broadcast %144 : vector<8x1xf32> to vector<8x32xf32>
    %146 = arith.subf %138, %145 : vector<8x32xf32>
    %147 = arith.mulf %146, %146 : vector<8x32xf32>
    %cst_96 = arith.constant dense<0.000000e+00> : vector<8xf32>
    %148 = vector.multi_reduction <add>, %147, %cst_96 [1] : vector<8x32xf32> to vector<8xf32>
    %149 = vector.shape_cast %148 : vector<8xf32> to vector<8x1xf32>
    %cst_97 = arith.constant 3.200000e+01 : f32
    %150 = vector.broadcast %cst_97 : f32 to vector<8x1xf32>
    %151 = arith.divf %149, %150 : vector<8x1xf32>
    %cst_98 = arith.constant 9.99999974E-6 : f32
    %152 = vector.broadcast %cst_98 : f32 to vector<8x1xf32>
    %153 = arith.addf %151, %152 : vector<8x1xf32>
    %154 = math.rsqrt %153 : vector<8x1xf32>
    %155 = vector.broadcast %144 : vector<8x1xf32> to vector<8x32xf32>
    %156 = arith.subf %138, %155 : vector<8x32xf32>
    %157 = vector.broadcast %154 : vector<8x1xf32> to vector<8x32xf32>
    %158 = arith.mulf %156, %157 : vector<8x32xf32>
    %159 = vector.broadcast %139 : vector<1x32xf32> to vector<8x32xf32>
    %160 = arith.mulf %158, %159 : vector<8x32xf32>
    %161 = vector.broadcast %140 : vector<1x32xf32> to vector<8x32xf32>
    %162 = arith.addf %160, %161 : vector<8x32xf32>
    %163 = arith.truncf %162 : vector<8x32xf32> to vector<8x32xbf16>
    %cst_99 = arith.constant 0.000000e+00 : f32
    %164 = vector.broadcast %cst_99 : f32 to vector<8x32xf32>
    %c0_100 = arith.constant 0 : index
    %c0_101 = arith.constant 0 : index
    %165 = vector.load %arg23[%c0_100, %c0_101] : memref<8x32xf32, #tpu.memory_space<vmem>>, vector<8x32xf32>
    tpu.vector_store %arg23[%c0_100, %c0_101], %164 {strides = array<i32>} : memref<8x32xf32, #tpu.memory_space<vmem>>, vector<8x32xf32>,
    %c0_i32_102 = arith.constant 0 : i32
    %c128_i32 = arith.constant 128 : i32
    %166 = arith.muli %c0_i32_102, %c128_i32 : i32
    %167 = tpu.assume_multiple %166, 128 : i32
    %c0_103 = arith.constant 0 : index
    %168 = arith.index_cast %167 : i32 to index
    %169 = vector.load %arg12[%c0_103, %168] : memref<32x128xbf16, #tpu.memory_space<vmem>>, vector<32x128xbf16>
    %c0_104 = arith.constant 0 : index
    %170 = arith.index_cast %167 : i32 to index
    %171 = vector.load %arg13[%c0_104, %170] : memref<1x128xf32, #tpu.memory_space<vmem>>, vector<1x128xf32>
    %cst_105 = arith.constant dense<0.000000e+00> : vector<8x128xf32>
    %172 = tpu.matmul %163, %169, %cst_105 {dimension_numbers = #tpu.dot_dimension_numbers<[1], [0], [0], [1], [0, 0, 1, 1], [], []>} : vector<8x32xbf16>, vector<32x128xbf16>, vector<8x128xf32> -> vector<8x128xf32>
    %173 = vector.broadcast %171 : vector<1x128xf32> to vector<8x128xf32>
    %174 = arith.addf %172, %173 : vector<8x128xf32>
    %cst_106 = arith.constant 0.000000e+00 : f32
    %175 = vector.broadcast %cst_106 : f32 to vector<8x128xf32>
    %176 = arith.maximumf %174, %175 : vector<8x128xf32>
    %177 = arith.index_cast %167 : i32 to index
    %c0_107 = arith.constant 0 : index
    %178 = vector.load %arg14[%177, %c0_107] : memref<128x32xbf16, #tpu.memory_space<vmem>>, vector<128x32xbf16>
    %c0_108 = arith.constant 0 : index
    %c0_109 = arith.constant 0 : index
    %179 = vector.load %arg23[%c0_108, %c0_109] : memref<8x32xf32, #tpu.memory_space<vmem>>, vector<8x32xf32>
    %180 = arith.truncf %176 : vector<8x128xf32> to vector<8x128xbf16>
    %cst_110 = arith.constant dense<0.000000e+00> : vector<8x32xf32>
    %181 = tpu.matmul %180, %178, %cst_110 {dimension_numbers = #tpu.dot_dimension_numbers<[1], [0], [0], [1], [0, 0, 1, 1], [], []>} : vector<8x128xbf16>, vector<128x32xbf16>, vector<8x32xf32> -> vector<8x32xf32>
    %182 = arith.addf %179, %181 : vector<8x32xf32>
    %c0_111 = arith.constant 0 : index
    %c0_112 = arith.constant 0 : index
    %183 = vector.load %arg23[%c0_111, %c0_112] : memref<8x32xf32, #tpu.memory_space<vmem>>, vector<8x32xf32>
    tpu.vector_store %arg23[%c0_111, %c0_112], %182 {strides = array<i32>} : memref<8x32xf32, #tpu.memory_space<vmem>>, vector<8x32xf32>,
    %c1_i32 = arith.constant 1 : i32
    %c0_113 = arith.constant 0 : index
    %c0_114 = arith.constant 0 : index
    %184 = vector.load %arg23[%c0_113, %c0_114] : memref<8x32xf32, #tpu.memory_space<vmem>>, vector<8x32xf32>
    %c0_115 = arith.constant 0 : index
    %c0_116 = arith.constant 0 : index
    %185 = vector.load %arg15[%c0_115, %c0_116] : memref<1x32xf32, #tpu.memory_space<vmem>>, vector<1x32xf32>
    %186 = vector.broadcast %185 : vector<1x32xf32> to vector<8x32xf32>
    %187 = arith.addf %184, %186 : vector<8x32xf32>
    %188 = arith.addf %162, %187 : vector<8x32xf32>
    %c0_117 = arith.constant 0 : index
    %c0_118 = arith.constant 0 : index
    %189 = vector.load %arg18[%c0_117, %c0_118] : memref<1x32xf32, #tpu.memory_space<vmem>>, vector<1x32xf32>
    %c0_119 = arith.constant 0 : index
    %c0_120 = arith.constant 0 : index
    %190 = vector.load %arg19[%c0_119, %c0_120] : memref<1x32xf32, #tpu.memory_space<vmem>>, vector<1x32xf32>
    %cst_121 = arith.constant dense<0.000000e+00> : vector<8xf32>
    %191 = vector.multi_reduction <add>, %188, %cst_121 [1] : vector<8x32xf32> to vector<8xf32>
    %192 = vector.shape_cast %191 : vector<8xf32> to vector<8x1xf32>
    %cst_122 = arith.constant 3.200000e+01 : f32
    %193 = vector.broadcast %cst_122 : f32 to vector<8x1xf32>
    %194 = arith.divf %192, %193 : vector<8x1xf32>
    %195 = vector.broadcast %194 : vector<8x1xf32> to vector<8x32xf32>
    %196 = arith.subf %188, %195 : vector<8x32xf32>
    %197 = arith.mulf %196, %196 : vector<8x32xf32>
    %cst_123 = arith.constant dense<0.000000e+00> : vector<8xf32>
    %198 = vector.multi_reduction <add>, %197, %cst_123 [1] : vector<8x32xf32> to vector<8xf32>
    %199 = vector.shape_cast %198 : vector<8xf32> to vector<8x1xf32>
    %cst_124 = arith.constant 3.200000e+01 : f32
    %200 = vector.broadcast %cst_124 : f32 to vector<8x1xf32>
    %201 = arith.divf %199, %200 : vector<8x1xf32>
    %cst_125 = arith.constant 9.99999974E-6 : f32
    %202 = vector.broadcast %cst_125 : f32 to vector<8x1xf32>
    %203 = arith.addf %201, %202 : vector<8x1xf32>
    %204 = math.rsqrt %203 : vector<8x1xf32>
    %205 = vector.broadcast %194 : vector<8x1xf32> to vector<8x32xf32>
    %206 = arith.subf %188, %205 : vector<8x32xf32>
    %207 = vector.broadcast %204 : vector<8x1xf32> to vector<8x32xf32>
    %208 = arith.mulf %206, %207 : vector<8x32xf32>
    %209 = vector.broadcast %189 : vector<1x32xf32> to vector<8x32xf32>
    %210 = arith.mulf %208, %209 : vector<8x32xf32>
    %211 = vector.broadcast %190 : vector<1x32xf32> to vector<8x32xf32>
    %212 = arith.addf %210, %211 : vector<8x32xf32>
    %c0_126 = arith.constant 0 : index
    %c0_127 = arith.constant 0 : index
    %c0_128 = arith.constant 0 : index
    %213 = vector.load %arg20[%c0_126, %c0_127, %c0_128] : memref<1x8x32xf32, #tpu.memory_space<vmem>>, vector<1x8x32xf32>
    %214 = vector.shape_cast %213 : vector<1x8x32xf32> to vector<8x32xf32>
    %215 = vector.shape_cast %212 : vector<8x32xf32> to vector<1x8x32xf32>
    tpu.vector_store %arg20[%c0_126, %c0_127, %c0_128], %215 {strides = array<i32>} : memref<1x8x32xf32, #tpu.memory_space<vmem>>, vector<1x8x32xf32>,
    return
  }
  func.func @transform_0(%arg0: i32, %arg1: i32) -> (i32, i32, i32) {
    %c0_i32 = arith.constant 0 : i32
    %c0_i32_0 = arith.constant 0 : i32
    return %arg0, %arg1, %c0_i32 : i32, i32, i32
  }
  func.func @transform_1(%arg0: i32, %arg1: i32) -> (i32, i32, i32) {
    %c0_i32 = arith.constant 0 : i32
    %c0_i32_0 = arith.constant 0 : i32
    %c0_i32_1 = arith.constant 0 : i32
    return %arg0, %c0_i32, %c0_i32_0 : i32, i32, i32
  }
  func.func @transform_2(%arg0: i32, %arg1: i32) -> (i32, i32, i32) {
    %c0_i32 = arith.constant 0 : i32
    %c0_i32_0 = arith.constant 0 : i32
    %c0_i32_1 = arith.constant 0 : i32
    %c0_i32_2 = arith.constant 0 : i32
    return %c0_i32, %c0_i32_0, %c0_i32_1 : i32, i32, i32
  }
  func.func @transform_3(%arg0: i32, %arg1: i32) -> (i32, i32, i32) {
    %c0_i32 = arith.constant 0 : i32
    %c0_i32_0 = arith.constant 0 : i32
    %c0_i32_1 = arith.constant 0 : i32
    %c0_i32_2 = arith.constant 0 : i32
    return %c0_i32, %c0_i32_0, %c0_i32_1 : i32, i32, i32
  }
  func.func @transform_4(%arg0: i32, %arg1: i32) -> (i32, i32, i32) {
    %c0_i32 = arith.constant 0 : i32
    %c0_i32_0 = arith.constant 0 : i32
    %c0_i32_1 = arith.constant 0 : i32
    %c0_i32_2 = arith.constant 0 : i32
    return %c0_i32, %c0_i32_0, %c0_i32_1 : i32, i32, i32
  }
  func.func @transform_5(%arg0: i32, %arg1: i32) -> (i32, i32, i32) {
    %c0_i32 = arith.constant 0 : i32
    %c0_i32_0 = arith.constant 0 : i32
    %c0_i32_1 = arith.constant 0 : i32
    %c0_i32_2 = arith.constant 0 : i32
    return %c0_i32, %c0_i32_0, %c0_i32_1 : i32, i32, i32
  }
  func.func @transform_6(%arg0: i32, %arg1: i32) -> (i32, i32, i32) {
    %c0_i32 = arith.constant 0 : i32
    %c0_i32_0 = arith.constant 0 : i32
    %c0_i32_1 = arith.constant 0 : i32
    %c0_i32_2 = arith.constant 0 : i32
    return %c0_i32, %c0_i32_0, %c0_i32_1 : i32, i32, i32
  }
  func.func @transform_7(%arg0: i32, %arg1: i32) -> (i32, i32, i32) {
    %c0_i32 = arith.constant 0 : i32
    %c0_i32_0 = arith.constant 0 : i32
    %c0_i32_1 = arith.constant 0 : i32
    %c0_i32_2 = arith.constant 0 : i32
    return %c0_i32, %c0_i32_0, %c0_i32_1 : i32, i32, i32
  }
  func.func @transform_8(%arg0: i32, %arg1: i32) -> (i32, i32, i32) {
    %c0_i32 = arith.constant 0 : i32
    %c0_i32_0 = arith.constant 0 : i32
    %c0_i32_1 = arith.constant 0 : i32
    %c0_i32_2 = arith.constant 0 : i32
    return %c0_i32, %c0_i32_0, %c0_i32_1 : i32, i32, i32
  }
  func.func @transform_9(%arg0: i32, %arg1: i32) -> (i32, i32) {
    %c0_i32 = arith.constant 0 : i32
    %c0_i32_0 = arith.constant 0 : i32
    %c0_i32_1 = arith.constant 0 : i32
    return %c0_i32, %c0_i32_0 : i32, i32
  }
  func.func @transform_10(%arg0: i32, %arg1: i32) -> (i32, i32) {
    %c0_i32 = arith.constant 0 : i32
    %c0_i32_0 = arith.constant 0 : i32
    %c0_i32_1 = arith.constant 0 : i32
    return %c0_i32, %c0_i32_0 : i32, i32
  }
  func.func @transform_11(%arg0: i32, %arg1: i32) -> (i32, i32) {
    %c0_i32 = arith.constant 0 : i32
    %c0_i32_0 = arith.constant 0 : i32
    %c0_i32_1 = arith.constant 0 : i32
    return %c0_i32, %c0_i32_0 : i32, i32
  }
  func.func @transform_12(%arg0: i32, %arg1: i32) -> (i32, i32) {
    %c0_i32 = arith.constant 0 : i32
    %c0_i32_0 = arith.constant 0 : i32
    %c0_i32_1 = arith.constant 0 : i32
    return %c0_i32, %c0_i32_0 : i32, i32
  }
  func.func @transform_13(%arg0: i32, %arg1: i32) -> (i32, i32) {
    %c0_i32 = arith.constant 0 : i32
    %c0_i32_0 = arith.constant 0 : i32
    %c0_i32_1 = arith.constant 0 : i32
    return %c0_i32, %c0_i32_0 : i32, i32
  }
  func.func @transform_14(%arg0: i32, %arg1: i32) -> (i32, i32) {
    %c0_i32 = arith.constant 0 : i32
    %c0_i32_0 = arith.constant 0 : i32
    %c0_i32_1 = arith.constant 0 : i32
    return %c0_i32, %c0_i32_0 : i32, i32
  }
  func.func @transform_15(%arg0: i32, %arg1: i32) -> (i32, i32) {
    %c0_i32 = arith.constant 0 : i32
    %c0_i32_0 = arith.constant 0 : i32
    %c0_i32_1 = arith.constant 0 : i32
    return %c0_i32, %c0_i32_0 : i32, i32
  }
  func.func @transform_16(%arg0: i32, %arg1: i32) -> (i32, i32) {
    %c0_i32 = arith.constant 0 : i32
    %c0_i32_0 = arith.constant 0 : i32
    %c0_i32_1 = arith.constant 0 : i32
    return %c0_i32, %c0_i32_0 : i32, i32
  }
  func.func @transform_17(%arg0: i32, %arg1: i32) -> (i32, i32) {
    %c0_i32 = arith.constant 0 : i32
    %c0_i32_0 = arith.constant 0 : i32
    %c0_i32_1 = arith.constant 0 : i32
    return %c0_i32, %c0_i32_0 : i32, i32
  }
  func.func @transform_18(%arg0: i32, %arg1: i32) -> (i32, i32, i32) {
    %c0_i32 = arith.constant 0 : i32
    %c0_i32_0 = arith.constant 0 : i32
    return %arg0, %arg1, %c0_i32 : i32, i32, i32
  }
}

</mosaic_0001>

<llo_original>
// kernel: tpu_custom_call.1
$region0: #{tpu_custom_call.1}
  #allocation0 [shape = 'u32[]', space=smem, size = 0x4, offset = 0x4, fixed_abs, tag = 'smem constant byte address 0x4 - core index']
  #allocation1 [shape = 'u32[144,128]{1,0:T(1,128)}', space=vmem, size = 0x12000, scoped, tag = 'internal scratch']
  #allocation2 [shape = 'bf16[4,8,8]{2,1,0:T(8,128)(2,1)}', space=vmem, size = 0x2000, scoped, tag = 'scratch operand']
  #allocation3 [shape = 'bf16[4,8,8]{2,1,0:T(8,128)(2,1)}', space=vmem, size = 0x2000, scoped, tag = 'scratch operand']
  #allocation4 [shape = 'f32[8,32]{1,0:T(8,128)}', space=vmem, size = 0x1000, scoped, tag = 'scratch operand']
  %s0 = inlined_call_operand.vmem [shape: f32[2,8,32], index: 0, kind: input, shape index: {}]
  %s1 = inlined_call_operand.vmem [shape: bf16[2,8,32], index: 1, kind: input, shape index: {}]
  %s2 = inlined_call_operand.vmem [shape: bf16[4,32,8], index: 2, kind: input, shape index: {}]
  %s3 = inlined_call_operand.vmem [shape: bf16[4,32,8], index: 3, kind: input, shape index: {}]
  %s4 = inlined_call_operand.vmem [shape: bf16[4,32,8], index: 4, kind: input, shape index: {}]
  %s5 = inlined_call_operand.vmem [shape: bf16[4,8,32], index: 5, kind: input, shape index: {}]
  %s6 = inlined_call_operand.vmem [shape: f32[4,1,8], index: 6, kind: input, shape index: {}]
  %s7 = inlined_call_operand.vmem [shape: f32[4,1,8], index: 7, kind: input, shape index: {}]
  %s8 = inlined_call_operand.vmem [shape: f32[4,1,8], index: 8, kind: input, shape index: {}]
  %s9 = inlined_call_operand.vmem [shape: f32[1,32], index: 9, kind: input, shape index: {}]
  %s10 = inlined_call_operand.vmem [shape: bf16[32,128], index: 10, kind: input, shape index: {}]
  %s11 = inlined_call_operand.vmem [shape: f32[1,128], index: 11, kind: input, shape index: {}]
  %s12 = inlined_call_operand.vmem [shape: bf16[128,32], index: 12, kind: input, shape index: {}]
  %s13 = inlined_call_operand.vmem [shape: f32[1,32], index: 13, kind: input, shape index: {}]
  %s14 = inlined_call_operand.vmem [shape: f32[1,32], index: 14, kind: input, shape index: {}]
  %s15 = inlined_call_operand.vmem [shape: f32[1,32], index: 15, kind: input, shape index: {}]
  %s16 = inlined_call_operand.vmem [shape: f32[1,32], index: 16, kind: input, shape index: {}]
  %s17 = inlined_call_operand.vmem [shape: f32[1,32], index: 17, kind: input, shape index: {}]
  %s18 = inlined_call_operand.hbm [shape: f32[2,8,32], index: 18, kind: output, shape index: {}]
  %s19 = sld [smem:[#allocation0]]
  $region109: #{tpu_custom_call.1} parent=0
    _
  %s21 = ssub.s32 1, %s19
  %s22 = scalar_select 0, %s21, %s19
  $region1: #{tpu_custom_call.1} parent=0
    #allocation5 [shape = 'u8[8192]{0}', space=vmem, size = 0x2000, scoped, tag = 'output window, operand 0']
    #allocation6 [shape = 's32[2]{0}', space=sflag, size = 0x8, scoped, tag = 'scoped memory for tpu_custom_call.1']
    %23 = vsyncpa [#allocation6], 0
    %s24 = scalar_lea.sflag [#allocation6], 1
    %25 = vsyncpa %s24, 0
    loop: start=0, step=1, limit=4
    $region2: #{tpu_custom_call.1} parent=1 // loop_pre_header
      _
    $region3: #{tpu_custom_call.1} parent=1 // loop_header
      %s27 = sphi 0, %s31
      %p28 = scmp.ge.s32.totalorder %s27, 4
      %s34 = sphi 0, %s46
      %s35 = sphi 0, %s42
      %s36 = sphi 0, %s34
      %s37 = sphi 0, %s35
      %s38 = sphi 0, %s36
      %s39 = sphi 0, %s37
      %s51 = sphi 0, %s53
      %s54 = sphi 0, %s51
      %s55 = sphi 0, %s54
      %s71 = sphi 0, %s55
      %s77 = sphi 0, %s79
      %s80 = sphi 0, %s77
      %s81 = sphi 0, %s80
      %s97 = sphi 0, %s81
      %s101 = sphi 0, %s101
      %s103 = sphi 0, %s101
      %s104 = sphi 0, %s103
      %s118 = sphi 0, %s104
      %s122 = sphi 0, %s122
      %s124 = sphi 0, %s122
      %s125 = sphi 0, %s124
      %s139 = sphi 0, %s125
      %s143 = sphi 0, %s143
      %s145 = sphi 0, %s143
      %s146 = sphi 0, %s145
      %s160 = sphi 0, %s146
      %s164 = sphi 0, %s164
      %s166 = sphi 0, %s164
      %s167 = sphi 0, %s166
      %s181 = sphi 0, %s167
      %s185 = sphi 0, %s185
      %s187 = sphi 0, %s185
      %s188 = sphi 0, %s187
      %s202 = sphi 0, %s188
      %s206 = sphi 0, %s206
      %s208 = sphi 0, %s206
      %s209 = sphi 0, %s208
      %s223 = sphi 0, %s209
      %s227 = sphi 0, %s227
      %s229 = sphi 0, %s227
      %s230 = sphi 0, %s229
      %s244 = sphi 0, %s230
      %s248 = sphi 0, %s248
      %s250 = sphi 0, %s248
      %s251 = sphi 0, %s250
      %s265 = sphi 0, %s251
      %s269 = sphi 0, %s269
      %s271 = sphi 0, %s269
      %s272 = sphi 0, %s271
      %s286 = sphi 0, %s272
      %s290 = sphi 0, %s290
      %s292 = sphi 0, %s290
      %s293 = sphi 0, %s292
      %s307 = sphi 0, %s293
      %s311 = sphi 0, %s311
      %s313 = sphi 0, %s311
      %s314 = sphi 0, %s313
      %s328 = sphi 0, %s314
      %s332 = sphi 0, %s332
      %s334 = sphi 0, %s332
      %s335 = sphi 0, %s334
      %s349 = sphi 0, %s335
      %s353 = sphi 0, %s353
      %s355 = sphi 0, %s353
      %s356 = sphi 0, %s355
      %s370 = sphi 0, %s356
      %s374 = sphi 0, %s374
      %s376 = sphi 0, %s374
      %s377 = sphi 0, %s376
      %s391 = sphi 0, %s377
      %s395 = sphi 0, %s395
      %s397 = sphi 0, %s395
      %s398 = sphi 0, %s397
      %s412 = sphi 0, %s398
      %s416 = sphi 0, %s416
      %s418 = sphi 0, %s416
      %s419 = sphi 0, %s418
      %s433 = sphi 0, %s419
      %s441 = sphi 0, %s443
      %s444 = sphi 0, %s441
      %s445 = sphi 0, %s444
      %s461 = sphi 0, %s445
    $region4: #{tpu_custom_call.1} parent=1 // loop_header_branch
      %30 = sbr.rel (%p28) target = $region8
    $region5: #{tpu_custom_call.1} parent=1 // loop_body
      %s32 = ssub.s32 %s27, 1
      %s33 = ssub.s32 %s27, 2
      %s40 = sadd.s32 1, %s35
      %p41 = scmp.ge.s32.totalorder %s40, 1
      %s42 = scalar_select %p41, 0, %s40
      %s43 = sadd.s32 1, %s34
      %s44 = scalar_select %p41, %s43, %s34
      %p45 = scmp.ge.s32.totalorder %s44, 2
      %s46 = scalar_select %p45, 0, %s44
      %s47 = ssub.s32 %s34, %s46
      %s48 = ssub.s32 %s35, %s42
      %s49 = sor.u32 %s47, %s48
      %p50 = scmp.eq.s32.totalorder %s49, 0
      %s52 = sadd.s32 %s51, 1
      %s53 = scalar_select %p50, %s51, %s52
      %p56 = pneg %p50
      %p57 = scmp.eq.s32.totalorder %s27, 1
      %p58 = por %p56, %p57
      %p59 = scmp.ne.s32.totalorder %s51, %s54
      %p60 = scmp.eq.s32.totalorder %s27, 0
      %p61 = por %p59, %p60
      %p62 = scmp.ne.s32.totalorder %s51, %s54
      %p63 = scmp.eq.s32.totalorder %s32, 1
      %p64 = por %p62, %p63
      %p65 = scmp.ne.s32.totalorder %s54, %s55
      %p66 = scmp.eq.s32.totalorder %s32, 0
      %p67 = por %p65, %p66
      %p68 = scmp.ne.s32.totalorder %s54, %s55
      %p69 = scmp.eq.s32.totalorder %s33, 1
      %p70 = por %p68, %p69
      %p72 = scmp.ne.s32.totalorder %s55, %s71
      %p73 = scmp.eq.s32.totalorder %s33, 0
      %p74 = por %p72, %p73
      %s75 = ssub.s32 %s34, %s46
      %p76 = scmp.eq.s32.totalorder %s75, 0
      %s78 = sadd.s32 %s77, 1
      %s79 = scalar_select %p76, %s77, %s78
      %p82 = pneg %p76
      %p83 = scmp.eq.s32.totalorder %s27, 1
      %p84 = por %p82, %p83
      %p85 = scmp.ne.s32.totalorder %s77, %s80
      %p86 = scmp.eq.s32.totalorder %s27, 0
      %p87 = por %p85, %p86
      %p88 = scmp.ne.s32.totalorder %s77, %s80
      %p89 = scmp.eq.s32.totalorder %s32, 1
      %p90 = por %p88, %p89
      %p91 = scmp.ne.s32.totalorder %s80, %s81
      %p92 = scmp.eq.s32.totalorder %s32, 0
      %p93 = por %p91, %p92
      %p94 = scmp.ne.s32.totalorder %s80, %s81
      %p95 = scmp.eq.s32.totalorder %s33, 1
      %p96 = por %p94, %p95
      %p98 = scmp.ne.s32.totalorder %s81, %s97
      %p99 = scmp.eq.s32.totalorder %s33, 0
      %p100 = por %p98, %p99
      %s102 = sadd.s32 %s101, 1
      %p105 = scmp.eq.s32.totalorder %s27, 1
      %p106 = scmp.ne.s32.totalorder %s101, %s103
      %p107 = scmp.eq.s32.totalorder %s27, 0
      %p108 = por %p106, %p107
      %p109 = scmp.ne.s32.totalorder %s101, %s103
      %p110 = scmp.eq.s32.totalorder %s32, 1
      %p111 = por %p109, %p110
      %p112 = scmp.ne.s32.totalorder %s103, %s104
      %p113 = scmp.eq.s32.totalorder %s32, 0
      %p114 = por %p112, %p113
      %p115 = scmp.ne.s32.totalorder %s103, %s104
      %p116 = scmp.eq.s32.totalorder %s33, 1
      %p117 = por %p115, %p116
      %p119 = scmp.ne.s32.totalorder %s104, %s118
      %p120 = scmp.eq.s32.totalorder %s33, 0
      %p121 = por %p119, %p120
      %s123 = sadd.s32 %s122, 1
      %p126 = scmp.eq.s32.totalorder %s27, 1
      %p127 = scmp.ne.s32.totalorder %s122, %s124
      %p128 = scmp.eq.s32.totalorder %s27, 0
      %p129 = por %p127, %p128
      %p130 = scmp.ne.s32.totalorder %s122, %s124
      %p131 = scmp.eq.s32.totalorder %s32, 1
      %p132 = por %p130, %p131
      %p133 = scmp.ne.s32.totalorder %s124, %s125
      %p134 = scmp.eq.s32.totalorder %s32, 0
      %p135 = por %p133, %p134
      %p136 = scmp.ne.s32.totalorder %s124, %s125
      %p137 = scmp.eq.s32.totalorder %s33, 1
      %p138 = por %p136, %p137
      %p140 = scmp.ne.s32.totalorder %s125, %s139
      %p141 = scmp.eq.s32.totalorder %s33, 0
      %p142 = por %p140, %p141
      %s144 = sadd.s32 %s143, 1
      %p147 = scmp.eq.s32.totalorder %s27, 1
      %p148 = scmp.ne.s32.totalorder %s143, %s145
      %p149 = scmp.eq.s32.totalorder %s27, 0
      %p150 = por %p148, %p149
      %p151 = scmp.ne.s32.totalorder %s143, %s145
      %p152 = scmp.eq.s32.totalorder %s32, 1
      %p153 = por %p151, %p152
      %p154 = scmp.ne.s32.totalorder %s145, %s146
      %p155 = scmp.eq.s32.totalorder %s32, 0
      %p156 = por %p154, %p155
      %p157 = scmp.ne.s32.totalorder %s145, %s146
      %p158 = scmp.eq.s32.totalorder %s33, 1
      %p159 = por %p157, %p158
      %p161 = scmp.ne.s32.totalorder %s146, %s160
      %p162 = scmp.eq.s32.totalorder %s33, 0
      %p163 = por %p161, %p162
      %s165 = sadd.s32 %s164, 1
      %p168 = scmp.eq.s32.totalorder %s27, 1
      %p169 = scmp.ne.s32.totalorder %s164, %s166
      %p170 = scmp.eq.s32.totalorder %s27, 0
      %p171 = por %p169, %p170
      %p172 = scmp.ne.s32.totalorder %s164, %s166
      %p173 = scmp.eq.s32.totalorder %s32, 1
      %p174 = por %p172, %p173
      %p175 = scmp.ne.s32.totalorder %s166, %s167
      %p176 = scmp.eq.s32.totalorder %s32, 0
      %p177 = por %p175, %p176
      %p178 = scmp.ne.s32.totalorder %s166, %s167
      %p179 = scmp.eq.s32.totalorder %s33, 1
      %p180 = por %p178, %p179
      %p182 = scmp.ne.s32.totalorder %s167, %s181
      %p183 = scmp.eq.s32.totalorder %s33, 0
      %p184 = por %p182, %p183
      %s186 = sadd.s32 %s185, 1
      %p189 = scmp.eq.s32.totalorder %s27, 1
      %p190 = scmp.ne.s32.totalorder %s185, %s187
      %p191 = scmp.eq.s32.totalorder %s27, 0
      %p192 = por %p190, %p191
      %p193 = scmp.ne.s32.totalorder %s185, %s187
      %p194 = scmp.eq.s32.totalorder %s32, 1
      %p195 = por %p193, %p194
      %p196 = scmp.ne.s32.totalorder %s187, %s188
      %p197 = scmp.eq.s32.totalorder %s32, 0
      %p198 = por %p196, %p197
      %p199 = scmp.ne.s32.totalorder %s187, %s188
      %p200 = scmp.eq.s32.totalorder %s33, 1
      %p201 = por %p199, %p200
      %p203 = scmp.ne.s32.totalorder %s188, %s202
      %p204 = scmp.eq.s32.totalorder %s33, 0
      %p205 = por %p203, %p204
      %s207 = sadd.s32 %s206, 1
      %p210 = scmp.eq.s32.totalorder %s27, 1
      %p211 = scmp.ne.s32.totalorder %s206, %s208
      %p212 = scmp.eq.s32.totalorder %s27, 0
      %p213 = por %p211, %p212
      %p214 = scmp.ne.s32.totalorder %s206, %s208
      %p215 = scmp.eq.s32.totalorder %s32, 1
      %p216 = por %p214, %p215
      %p217 = scmp.ne.s32.totalorder %s208, %s209
      %p218 = scmp.eq.s32.totalorder %s32, 0
      %p219 = por %p217, %p218
      %p220 = scmp.ne.s32.totalorder %s208, %s209
      %p221 = scmp.eq.s32.totalorder %s33, 1
      %p222 = por %p220, %p221
      %p224 = scmp.ne.s32.totalorder %s209, %s223
      %p225 = scmp.eq.s32.totalorder %s33, 0
      %p226 = por %p224, %p225
      %s228 = sadd.s32 %s227, 1
      %p231 = scmp.eq.s32.totalorder %s27, 1
      %p232 = scmp.ne.s32.totalorder %s227, %s229
      %p233 = scmp.eq.s32.totalorder %s27, 0
      %p234 = por %p232, %p233
      %p235 = scmp.ne.s32.totalorder %s227, %s229
      %p236 = scmp.eq.s32.totalorder %s32, 1
      %p237 = por %p235, %p236
      %p238 = scmp.ne.s32.totalorder %s229, %s230
      %p239 = scmp.eq.s32.totalorder %s32, 0
      %p240 = por %p238, %p239
      %p241 = scmp.ne.s32.totalorder %s229, %s230
      %p242 = scmp.eq.s32.totalorder %s33, 1
      %p243 = por %p241, %p242
      %p245 = scmp.ne.s32.totalorder %s230, %s244
      %p246 = scmp.eq.s32.totalorder %s33, 0
      %p247 = por %p245, %p246
      %s249 = sadd.s32 %s248, 1
      %p252 = scmp.eq.s32.totalorder %s27, 1
      %p253 = scmp.ne.s32.totalorder %s248, %s250
      %p254 = scmp.eq.s32.totalorder %s27, 0
      %p255 = por %p253, %p254
      %p256 = scmp.ne.s32.totalorder %s248, %s250
      %p257 = scmp.eq.s32.totalorder %s32, 1
      %p258 = por %p256, %p257
      %p259 = scmp.ne.s32.totalorder %s250, %s251
      %p260 = scmp.eq.s32.totalorder %s32, 0
      %p261 = por %p259, %p260
      %p262 = scmp.ne.s32.totalorder %s250, %s251
      %p263 = scmp.eq.s32.totalorder %s33, 1
      %p264 = por %p262, %p263
      %p266 = scmp.ne.s32.totalorder %s251, %s265
      %p267 = scmp.eq.s32.totalorder %s33, 0
      %p268 = por %p266, %p267
      %s270 = sadd.s32 %s269, 1
      %p273 = scmp.eq.s32.totalorder %s27, 1
      %p274 = scmp.ne.s32.totalorder %s269, %s271
      %p275 = scmp.eq.s32.totalorder %s27, 0
      %p276 = por %p274, %p275
      %p277 = scmp.ne.s32.totalorder %s269, %s271
      %p278 = scmp.eq.s32.totalorder %s32, 1
      %p279 = por %p277, %p278
      %p280 = scmp.ne.s32.totalorder %s271, %s272
      %p281 = scmp.eq.s32.totalorder %s32, 0
      %p282 = por %p280, %p281
      %p283 = scmp.ne.s32.totalorder %s271, %s272
      %p284 = scmp.eq.s32.totalorder %s33, 1
      %p285 = por %p283, %p284
      %p287 = scmp.ne.s32.totalorder %s272, %s286
      %p288 = scmp.eq.s32.totalorder %s33, 0
      %p289 = por %p287, %p288
      %s291 = sadd.s32 %s290, 1
      %p294 = scmp.eq.s32.totalorder %s27, 1
      %p295 = scmp.ne.s32.totalorder %s290, %s292
      %p296 = scmp.eq.s32.totalorder %s27, 0
      %p297 = por %p295, %p296
      %p298 = scmp.ne.s32.totalorder %s290, %s292
      %p299 = scmp.eq.s32.totalorder %s32, 1
      %p300 = por %p298, %p299
      %p301 = scmp.ne.s32.totalorder %s292, %s293
      %p302 = scmp.eq.s32.totalorder %s32, 0
      %p303 = por %p301, %p302
      %p304 = scmp.ne.s32.totalorder %s292, %s293
      %p305 = scmp.eq.s32.totalorder %s33, 1
      %p306 = por %p304, %p305
      %p308 = scmp.ne.s32.totalorder %s293, %s307
      %p309 = scmp.eq.s32.totalorder %s33, 0
      %p310 = por %p308, %p309
      %s312 = sadd.s32 %s311, 1
      %p315 = scmp.eq.s32.totalorder %s27, 1
      %p316 = scmp.ne.s32.totalorder %s311, %s313
      %p317 = scmp.eq.s32.totalorder %s27, 0
      %p318 = por %p316, %p317
      %p319 = scmp.ne.s32.totalorder %s311, %s313
      %p320 = scmp.eq.s32.totalorder %s32, 1
      %p321 = por %p319, %p320
      %p322 = scmp.ne.s32.totalorder %s313, %s314
      %p323 = scmp.eq.s32.totalorder %s32, 0
      %p324 = por %p322, %p323
      %p325 = scmp.ne.s32.totalorder %s313, %s314
      %p326 = scmp.eq.s32.totalorder %s33, 1
      %p327 = por %p325, %p326
      %p329 = scmp.ne.s32.totalorder %s314, %s328
      %p330 = scmp.eq.s32.totalorder %s33, 0
      %p331 = por %p329, %p330
      %s333 = sadd.s32 %s332, 1
      %p336 = scmp.eq.s32.totalorder %s27, 1
      %p337 = scmp.ne.s32.totalorder %s332, %s334
      %p338 = scmp.eq.s32.totalorder %s27, 0
      %p339 = por %p337, %p338
      %p340 = scmp.ne.s32.totalorder %s332, %s334
      %p341 = scmp.eq.s32.totalorder %s32, 1
      %p342 = por %p340, %p341
      %p343 = scmp.ne.s32.totalorder %s334, %s335
      %p344 = scmp.eq.s32.totalorder %s32, 0
      %p345 = por %p343, %p344
      %p346 = scmp.ne.s32.totalorder %s334, %s335
      %p347 = scmp.eq.s32.totalorder %s33, 1
      %p348 = por %p346, %p347
      %p350 = scmp.ne.s32.totalorder %s335, %s349
      %p351 = scmp.eq.s32.totalorder %s33, 0
      %p352 = por %p350, %p351
      %s354 = sadd.s32 %s353, 1
      %p357 = scmp.eq.s32.totalorder %s27, 1
      %p358 = scmp.ne.s32.totalorder %s353, %s355
      %p359 = scmp.eq.s32.totalorder %s27, 0
      %p360 = por %p358, %p359
      %p361 = scmp.ne.s32.totalorder %s353, %s355
      %p362 = scmp.eq.s32.totalorder %s32, 1
      %p363 = por %p361, %p362
      %p364 = scmp.ne.s32.totalorder %s355, %s356
      %p365 = scmp.eq.s32.totalorder %s32, 0
      %p366 = por %p364, %p365
      %p367 = scmp.ne.s32.totalorder %s355, %s356
      %p368 = scmp.eq.s32.totalorder %s33, 1
      %p369 = por %p367, %p368
      %p371 = scmp.ne.s32.totalorder %s356, %s370
      %p372 = scmp.eq.s32.totalorder %s33, 0
      %p373 = por %p371, %p372
      %s375 = sadd.s32 %s374, 1
      %p378 = scmp.eq.s32.totalorder %s27, 1
      %p379 = scmp.ne.s32.totalorder %s374, %s376
      %p380 = scmp.eq.s32.totalorder %s27, 0
      %p381 = por %p379, %p380
      %p382 = scmp.ne.s32.totalorder %s374, %s376
      %p383 = scmp.eq.s32.totalorder %s32, 1
      %p384 = por %p382, %p383
      %p385 = scmp.ne.s32.totalorder %s376, %s377
      %p386 = scmp.eq.s32.totalorder %s32, 0
      %p387 = por %p385, %p386
      %p388 = scmp.ne.s32.totalorder %s376, %s377
      %p389 = scmp.eq.s32.totalorder %s33, 1
      %p390 = por %p388, %p389
      %p392 = scmp.ne.s32.totalorder %s377, %s391
      %p393 = scmp.eq.s32.totalorder %s33, 0
      %p394 = por %p392, %p393
      %s396 = sadd.s32 %s395, 1
      %p399 = scmp.eq.s32.totalorder %s27, 1
      %p400 = scmp.ne.s32.totalorder %s395, %s397
      %p401 = scmp.eq.s32.totalorder %s27, 0
      %p402 = por %p400, %p401
      %p403 = scmp.ne.s32.totalorder %s395, %s397
      %p404 = scmp.eq.s32.totalorder %s32, 1
      %p405 = por %p403, %p404
      %p406 = scmp.ne.s32.totalorder %s397, %s398
      %p407 = scmp.eq.s32.totalorder %s32, 0
      %p408 = por %p406, %p407
      %p409 = scmp.ne.s32.totalorder %s397, %s398
      %p410 = scmp.eq.s32.totalorder %s33, 1
      %p411 = por %p409, %p410
      %p413 = scmp.ne.s32.totalorder %s398, %s412
      %p414 = scmp.eq.s32.totalorder %s33, 0
      %p415 = por %p413, %p414
      %s417 = sadd.s32 %s416, 1
      %p420 = scmp.eq.s32.totalorder %s27, 1
      %p421 = scmp.ne.s32.totalorder %s416, %s418
      %p422 = scmp.eq.s32.totalorder %s27, 0
      %p423 = por %p421, %p422
      %p424 = scmp.ne.s32.totalorder %s416, %s418
      %p425 = scmp.eq.s32.totalorder %s32, 1
      %p426 = por %p424, %p425
      %p427 = scmp.ne.s32.totalorder %s418, %s419
      %p428 = scmp.eq.s32.totalorder %s32, 0
      %p429 = por %p427, %p428
      %p430 = scmp.ne.s32.totalorder %s418, %s419
      %p431 = scmp.eq.s32.totalorder %s33, 1
      %p432 = por %p430, %p431
      %p434 = scmp.ne.s32.totalorder %s419, %s433
      %p435 = scmp.eq.s32.totalorder %s33, 0
      %p436 = por %p434, %p435
      %s437 = ssub.s32 %s34, %s46
      %s438 = ssub.s32 %s35, %s42
      %s439 = sor.u32 %s437, %s438
      %p440 = scmp.eq.s32.totalorder %s439, 0
      %s442 = sadd.s32 %s441, 1
      %s443 = scalar_select %p440, %s441, %s442
      %p446 = pneg %p440
      %p447 = scmp.eq.s32.totalorder %s27, 1
      %p448 = por %p446, %p447
      %p449 = scmp.ne.s32.totalorder %s441, %s444
      %p450 = scmp.eq.s32.totalorder %s27, 0
      %p451 = por %p449, %p450
      %p452 = scmp.ne.s32.totalorder %s441, %s444
      %p453 = scmp.eq.s32.totalorder %s32, 1
      %p454 = por %p452, %p453
      %p455 = scmp.ne.s32.totalorder %s444, %s445
      %p456 = scmp.eq.s32.totalorder %s32, 0
      %p457 = por %p455, %p456
      %p458 = scmp.ne.s32.totalorder %s444, %s445
      %p459 = scmp.eq.s32.totalorder %s33, 1
      %p460 = por %p458, %p459
      %p462 = scmp.ne.s32.totalorder %s445, %s461
      %p463 = scmp.eq.s32.totalorder %s33, 0
      %p464 = por %p462, %p463
      %p465 = scmp.le.s32.totalorder 1, %s27
      %p466 = scmp.lt.s32.totalorder %s27, 3
      %p467 = pnand %p465, %p466
      %p468 = pneg %p467
      // Predicated region
      $region9: #{tpu_custom_call.1} parent=5 // pred_check
        _
      $region10: #{tpu_custom_call.1} parent=5 // pred_check_branch
        %470 = sbr.rel (%p467) target = $region12
      $region11: #{tpu_custom_call.1} parent=5 // pred_region
        %s471 = ssub.s32 %s27, 1
        // Predicated region
        $region13: #{tpu_custom_call.1} parent=11 // pred_check
          %p472 = pneg %p114
        $region14: #{tpu_custom_call.1} parent=11 // pred_check_branch
          %474 = sbr.rel (%p472) target = $region16
        $region15: #{tpu_custom_call.1} parent=11 // pred_region
          _
        $region16: #{tpu_custom_call.1} parent=11 // pred_fallthru
          _
        // Predicated region
        $region17: #{tpu_custom_call.1} parent=11 // pred_check
          %p475 = pneg %p135
        $region18: #{tpu_custom_call.1} parent=11 // pred_check_branch
          %477 = sbr.rel (%p475) target = $region20
        $region19: #{tpu_custom_call.1} parent=11 // pred_region
          _
        $region20: #{tpu_custom_call.1} parent=11 // pred_fallthru
          _
        // Predicated region
        $region21: #{tpu_custom_call.1} parent=11 // pred_check
          %p478 = pneg %p156
        $region22: #{tpu_custom_call.1} parent=11 // pred_check_branch
          %480 = sbr.rel (%p478) target = $region24
        $region23: #{tpu_custom_call.1} parent=11 // pred_region
          _
        $region24: #{tpu_custom_call.1} parent=11 // pred_fallthru
          _
        // Predicated region
        $region25: #{tpu_custom_call.1} parent=11 // pred_check
          %p481 = pneg %p177
        $region26: #{tpu_custom_call.1} parent=11 // pred_check_branch
          %483 = sbr.rel (%p481) target = $region28
        $region27: #{tpu_custom_call.1} parent=11 // pred_region
          _
        $region28: #{tpu_custom_call.1} parent=11 // pred_fallthru
          _
        // Predicated region
        $region29: #{tpu_custom_call.1} parent=11 // pred_check
          %p484 = pneg %p198
        $region30: #{tpu_custom_call.1} parent=11 // pred_check_branch
          %486 = sbr.rel (%p484) target = $region32
        $region31: #{tpu_custom_call.1} parent=11 // pred_region
          _
        $region32: #{tpu_custom_call.1} parent=11 // pred_fallthru
          _
        // Predicated region
        $region33: #{tpu_custom_call.1} parent=11 // pred_check
          %p487 = pneg %p219
        $region34: #{tpu_custom_call.1} parent=11 // pred_check_branch
          %489 = sbr.rel (%p487) target = $region36
        $region35: #{tpu_custom_call.1} parent=11 // pred_region
          _
        $region36: #{tpu_custom_call.1} parent=11 // pred_fallthru
          _
        // Predicated region
        $region37: #{tpu_custom_call.1} parent=11 // pred_check
          %p490 = pneg %p240
        $region38: #{tpu_custom_call.1} parent=11 // pred_check_branch
          %492 = sbr.rel (%p490) target = $region40
        $region39: #{tpu_custom_call.1} parent=11 // pred_region
          _
        $region40: #{tpu_custom_call.1} parent=11 // pred_fallthru
          _
        // Predicated region
        $region41: #{tpu_custom_call.1} parent=11 // pred_check
          %p493 = pneg %p261
        $region42: #{tpu_custom_call.1} parent=11 // pred_check_branch
          %495 = sbr.rel (%p493) target = $region44
        $region43: #{tpu_custom_call.1} parent=11 // pred_region
          _
        $region44: #{tpu_custom_call.1} parent=11 // pred_fallthru
          _
        // Predicated region
        $region45: #{tpu_custom_call.1} parent=11 // pred_check
          %p496 = pneg %p282
        $region46: #{tpu_custom_call.1} parent=11 // pred_check_branch
          %498 = sbr.rel (%p496) target = $region48
        $region47: #{tpu_custom_call.1} parent=11 // pred_region
          _
        $region48: #{tpu_custom_call.1} parent=11 // pred_fallthru
          _
        // Predicated region
        $region49: #{tpu_custom_call.1} parent=11 // pred_check
          %p499 = pneg %p303
        $region50: #{tpu_custom_call.1} parent=11 // pred_check_branch
          %501 = sbr.rel (%p499) target = $region52
        $region51: #{tpu_custom_call.1} parent=11 // pred_region
          _
        $region52: #{tpu_custom_call.1} parent=11 // pred_fallthru
          _
        // Predicated region
        $region53: #{tpu_custom_call.1} parent=11 // pred_check
          %p502 = pneg %p324
        $region54: #{tpu_custom_call.1} parent=11 // pred_check_branch
          %504 = sbr.rel (%p502) target = $region56
        $region55: #{tpu_custom_call.1} parent=11 // pred_region
          _
        $region56: #{tpu_custom_call.1} parent=11 // pred_fallthru
          _
        // Predicated region
        $region57: #{tpu_custom_call.1} parent=11 // pred_check
          %p505 = pneg %p345
        $region58: #{tpu_custom_call.1} parent=11 // pred_check_branch
          %507 = sbr.rel (%p505) target = $region60
        $region59: #{tpu_custom_call.1} parent=11 // pred_region
          _
        $region60: #{tpu_custom_call.1} parent=11 // pred_fallthru
          _
        // Predicated region
        $region61: #{tpu_custom_call.1} parent=11 // pred_check
          %p508 = pneg %p366
        $region62: #{tpu_custom_call.1} parent=11 // pred_check_branch
          %510 = sbr.rel (%p508) target = $region64
        $region63: #{tpu_custom_call.1} parent=11 // pred_region
          _
        $region64: #{tpu_custom_call.1} parent=11 // pred_fallthru
          _
        // Predicated region
        $region65: #{tpu_custom_call.1} parent=11 // pred_check
          %p511 = pneg %p387
        $region66: #{tpu_custom_call.1} parent=11 // pred_check_branch
          %513 = sbr.rel (%p511) target = $region68
        $region67: #{tpu_custom_call.1} parent=11 // pred_region
          _
        $region68: #{tpu_custom_call.1} parent=11 // pred_fallthru
          _
        // Predicated region
        $region69: #{tpu_custom_call.1} parent=11 // pred_check
          %p514 = pneg %p408
        $region70: #{tpu_custom_call.1} parent=11 // pred_check_branch
          %516 = sbr.rel (%p514) target = $region72
        $region71: #{tpu_custom_call.1} parent=11 // pred_region
          _
        $region72: #{tpu_custom_call.1} parent=11 // pred_fallthru
          _
        // Predicated region
        $region73: #{tpu_custom_call.1} parent=11 // pred_check
          %p517 = pneg %p429
        $region74: #{tpu_custom_call.1} parent=11 // pred_check_branch
          %519 = sbr.rel (%p517) target = $region76
        $region75: #{tpu_custom_call.1} parent=11 // pred_region
          _
        $region76: #{tpu_custom_call.1} parent=11 // pred_fallthru
          _
      $region12: #{tpu_custom_call.1} parent=5 // pred_fallthru
        _
      %p520 = scmp.lt.s32.totalorder %s27, 2
      // Predicated region
      $region77: #{tpu_custom_call.1} parent=5 // pred_check
        %p521 = pneg %p520
      $region78: #{tpu_custom_call.1} parent=5 // pred_check_branch
        %523 = sbr.rel (%p521) target = $region80
      $region79: #{tpu_custom_call.1} parent=5 // pred_region
        // Predicated region
        $region81: #{tpu_custom_call.1} parent=79 // pred_check
          %p524 = pneg %p61
        $region82: #{tpu_custom_call.1} parent=79 // pred_check_branch
          %526 = sbr.rel (%p524) target = $region84
        $region83: #{tpu_custom_call.1} parent=79 // pred_region
          %p527 = scmp.lt.s32.totalorder %s34, 1
          %s528 = scalar_select %p527, %s34, 1
          %p529 = scmp.lt.s32.totalorder %s35, 0
          %s530 = scalar_select %p529, %s35, 0
          %s531 = sadd.s32 %s530, %s528
          %s532 = smul.addr %s531, 8
          %s533 = scalar_lea.vmem %s0, %s532
        $region84: #{tpu_custom_call.1} parent=79 // pred_fallthru
          _
        // Predicated region
        $region85: #{tpu_custom_call.1} parent=79 // pred_check
          %p534 = pneg %p87
        $region86: #{tpu_custom_call.1} parent=79 // pred_check_branch
          %536 = sbr.rel (%p534) target = $region88
        $region87: #{tpu_custom_call.1} parent=79 // pred_region
          %p537 = scmp.lt.s32.totalorder %s34, 1
          %s538 = scalar_select %p537, %s34, 1
          %s539 = smul.addr %s538, 4
          %s540 = scalar_lea.vmem %s1, %s539
        $region88: #{tpu_custom_call.1} parent=79 // pred_fallthru
          _
      $region80: #{tpu_custom_call.1} parent=5 // pred_fallthru
        _
      %p541 = scmp.le.s32.totalorder 1, %s27
      %p542 = scmp.lt.s32.totalorder %s27, 3
      %p543 = pnand %p541, %p542
      %p544 = pneg %p543
      // Predicated region
      $region89: #{tpu_custom_call.1} parent=5 // pred_check
        _
      $region90: #{tpu_custom_call.1} parent=5 // pred_check_branch
        %546 = sbr.rel (%p543) target = $region92
      $region91: #{tpu_custom_call.1} parent=5 // pred_region
        %s547 = ssub.s32 %s27, 1
        %p548 = scmp.lt.s32.totalorder %s36, 1
        %s549 = scalar_select %p548, %s36, 1
        %p550 = scmp.lt.s32.totalorder %s37, 0
        %s551 = scalar_select %p550, %s37, 0
        %s552 = sadd.s32 %s551, %s549
        %s553 = smul.addr %s552, 8
        %s554 = scalar_lea.vmem %s0, %s553
        %p555 = pneg %p67
        %p556 = pneg %p64
        %p557 = scmp.lt.s32.totalorder %s36, 1
        %s558 = scalar_select %p557, %s36, 1
        %s559 = smul.addr %s558, 4
        %s560 = scalar_lea.vmem %s1, %s559
        %p561 = pneg %p93
        %p562 = pneg %p90
        %p563 = pneg %p114
        %p564 = pneg %p111
        %p565 = pneg %p135
        %p566 = pneg %p132
        %p567 = pneg %p156
        %p568 = pneg %p153
        %p569 = pneg %p177
        %p570 = pneg %p174
        %p571 = pneg %p198
        %p572 = pneg %p195
        %p573 = pneg %p219
        %p574 = pneg %p216
        %p575 = pneg %p240
        %p576 = pneg %p237
        %p577 = pneg %p261
        %p578 = pneg %p258
        %p579 = pneg %p282
        %p580 = pneg %p279
        %p581 = pneg %p303
        %p582 = pneg %p300
        %p583 = pneg %p324
        %p584 = pneg %p321
        %p585 = pneg %p345
        %p586 = pneg %p342
        %p587 = pneg %p366
        %p588 = pneg %p363
        %p589 = pneg %p387
        %p590 = pneg %p384
        %p591 = pneg %p408
        %p592 = pneg %p405
        %p593 = pneg %p429
        %p594 = pneg %p426
        %p595 = pneg %p457
        %p596 = pneg %p454
        %s597 = sand.u32 %s444, 1
        %s598 = scalar_lea.sflag [#allocation6], %s597
        %s599 = sand.u32 %s444, 1
        %s600 = smul.addr %s599, 8
        %s601 = scalar_lea.vmem [#allocation5], %s600
        %p602 = scmp.lt.s32.totalorder %s36, 1
        %s603 = scalar_select %p602, %s36, 1
        %p604 = scmp.lt.s32.totalorder %s37, 0
        %s605 = scalar_select %p604, %s37, 0
        %s606 = sadd.s32 %s605, %s603
        %s607 = smul.addr %s606, 8
        %s608 = scalar_lea.vmem %s0, %s607
        %p609 = scmp.lt.s32.totalorder %s36, 1
        %s610 = scalar_select %p609, %s36, 1
        %s611 = smul.addr %s610, 4
        %s612 = scalar_lea.vmem %s1, %s611
        %p614 = scmp.eq.s32.totalorder %s37, 0
        // Predicated region
        $region93: #{tpu_custom_call.1} parent=91 // pred_check
          %p615 = pneg %p614
        $region94: #{tpu_custom_call.1} parent=91 // pred_check_branch
          %617 = sbr.rel (%p615) target = $region96
        $region95: #{tpu_custom_call.1} parent=91 // pred_region
          %v618 = vld [vmem:[%s612] sm:$0xf]
          %v619 = vld [vmem:[%s3] sm:$0xf]
          %v620 = vld [vmem:[%s3 + $0x4] sm:$0xf]
          %v621 = vld [vmem:[%s3 + $0x8] sm:$0xf]
          %v622 = vld [vmem:[%s3 + $0xc] sm:$0xf]
          %v623 = vld [vmem:[%s7] sm:$0x1]
          %v625 = vlaneseq
          %v626 = vshrl.u32 %v625, 7
          %v627 = vsub.s32 0, %v626
          %v628 = vrot.slane %v623, %v627
          %v634 = vunpack.c.l.b16 %v619
          %v635 = vunpack.c.l.b16 %v620
          %v636 = vunpack.c.l.b16 %v621
          %v637 = vunpack.c.l.b16 %v622
          %v638 = vpack.c.b16 %v635, %v634
          %v639 = vpack.c.b16 %v637, %v636
          %vm642 = vcmask 261120
          %v644 = vsel %vm642, %v618, 0
          %646 = vmatprep.subr.bf16.mxu0 0
          %647 = vmatpush1.bf16.msra.mxu0 %v638
          %648 = vmatprep.subr.bf16.mxu0 0
          %649 = vmatpush1.bf16.msra.mxu0 %v639
          %650 = vmatprep.subr.bf16.mxu0 0
          %651 = vmatpush1.bf16.msra.mxu0 0
          %652 = vmatprep.subr.bf16.mxu0 0
          %653 = vmatpush1.bf16.msra.mxu0 0
          %654 = vmatprep.subr.bf16.mxu0 0
          %655 = vmatpush1.bf16.msra.mxu0 0
          %656 = vmatprep.subr.bf16.mxu0 0
          %657 = vmatpush1.bf16.msra.mxu0 0
          %658 = vmatprep.subr.bf16.mxu0 0
          %659 = vmatpush1.bf16.msra.mxu0 0
          %660 = vmatprep.subr.bf16.mxu0 0
          %661 = vmatpush1.bf16.msra.mxu0 0
          %662 = vmatprep.subr.bf16.mxu0 0
          %663 = vmatpush1.bf16.msra.mxu0 0
          %664 = vmatprep.subr.bf16.mxu0 0
          %665 = vmatpush1.bf16.msra.mxu0 0
          %666 = vmatprep.subr.bf16.mxu0 0
          %667 = vmatpush1.bf16.msra.mxu0 0
          %668 = vmatprep.subr.bf16.mxu0 0
          %669 = vmatpush1.bf16.msra.mxu0 0
          %670 = vmatprep.subr.bf16.mxu0 0
          %671 = vmatpush1.bf16.msra.mxu0 0
          %672 = vmatprep.subr.bf16.mxu0 0
          %673 = vmatpush1.bf16.msra.mxu0 0
          %674 = vmatprep.subr.bf16.mxu0 0
          %675 = vmatpush1.bf16.msra.mxu0 0
          %676 = vmatprep.subr.bf16.mxu0 0
          %677 = vmatpush1.bf16.msra.mxu0 0
          %678 = vmatprep.mubr.bf16.mxu0 0
          %679 = vmatmul.mubr.bf16.gmra.mrb[0].mxu0 %v644
          %v680 = vpop.f32.mrb[0].mxu0
          %v681 = vadd.f32 %v628, %v680
          %v682 = vpop.f32.mrb[0].mxu0
          %v683 = vpop.f32.mrb[0].mxu0
          %v684 = vpop.f32.mrb[0].mxu0
          %685 = vdwg.mxu0
          %v686 = vld [vmem:[%s4] sm:$0xf]
          %v687 = vld [vmem:[%s4 + $0x4] sm:$0xf]
          %v688 = vld [vmem:[%s4 + $0x8] sm:$0xf]
          %v689 = vld [vmem:[%s4 + $0xc] sm:$0xf]
          %v690 = vld [vmem:[%s8] sm:$0x1]
          %v692 = vlaneseq
          %v693 = vshrl.u32 %v692, 7
          %v694 = vsub.s32 0, %v693
          %v695 = vrot.slane %v690, %v694
          %v701 = vunpack.c.l.b16 %v686
          %v702 = vunpack.c.l.b16 %v687
          %v703 = vunpack.c.l.b16 %v688
          %v704 = vunpack.c.l.b16 %v689
          %v705 = vpack.c.b16 %v702, %v701
          %v706 = vpack.c.b16 %v704, %v703
          %709 = vmatprep.subr.bf16.mxu0 0
          %710 = vmatpush1.bf16.msra.mxu0 %v705
          %711 = vmatprep.subr.bf16.mxu0 0
          %712 = vmatpush1.bf16.msra.mxu0 %v706
          %713 = vmatprep.subr.bf16.mxu0 0
          %714 = vmatpush1.bf16.msra.mxu0 0
          %715 = vmatprep.subr.bf16.mxu0 0
          %716 = vmatpush1.bf16.msra.mxu0 0
          %717 = vmatprep.subr.bf16.mxu0 0
          %718 = vmatpush1.bf16.msra.mxu0 0
          %719 = vmatprep.subr.bf16.mxu0 0
          %720 = vmatpush1.bf16.msra.mxu0 0
          %721 = vmatprep.subr.bf16.mxu0 0
          %722 = vmatpush1.bf16.msra.mxu0 0
          %723 = vmatprep.subr.bf16.mxu0 0
          %724 = vmatpush1.bf16.msra.mxu0 0
          %725 = vmatprep.subr.bf16.mxu0 0
          %726 = vmatpush1.bf16.msra.mxu0 0
          %727 = vmatprep.subr.bf16.mxu0 0
          %728 = vmatpush1.bf16.msra.mxu0 0
          %729 = vmatprep.subr.bf16.mxu0 0
          %730 = vmatpush1.bf16.msra.mxu0 0
          %731 = vmatprep.subr.bf16.mxu0 0
          %732 = vmatpush1.bf16.msra.mxu0 0
          %733 = vmatprep.subr.bf16.mxu0 0
          %734 = vmatpush1.bf16.msra.mxu0 0
          %735 = vmatprep.subr.bf16.mxu0 0
          %736 = vmatpush1.bf16.msra.mxu0 0
          %737 = vmatprep.subr.bf16.mxu0 0
          %738 = vmatpush1.bf16.msra.mxu0 0
          %739 = vmatprep.subr.bf16.mxu0 0
          %740 = vmatpush1.bf16.msra.mxu0 0
          %741 = vmatprep.mubr.bf16.mxu0 0
          %742 = vmatmul.mubr.bf16.gmra.mrb[0].mxu0 %v644
          %v743 = vpop.f32.mrb[0].mxu0
          %v744 = vadd.f32 %v695, %v743
          %v745 = vpop.f32.mrb[0].mxu0
          %v746 = vpop.f32.mrb[0].mxu0
          %v747 = vpop.f32.mrb[0].mxu0
          %748 = vdwg.mxu0
          %v749 = vpack.c.bf16 %v681, %v681
          %vm750 = vcmask 60416
          %751 = vst.msk [vmem:[#allocation2] sm:$0xf] %vm750, %v749
          %v752 = vpack.c.bf16 %v744, %v744
          %753 = vst.msk [vmem:[#allocation3] sm:$0xf] %vm750, %v752
          %s754 = scalar_lea.vmem %s3, 16
          %v755 = vld [vmem:[%s754] sm:$0xf]
          %v756 = vld [vmem:[%s754 + $0x4] sm:$0xf]
          %v757 = vld [vmem:[%s754 + $0x8] sm:$0xf]
          %v758 = vld [vmem:[%s754 + $0xc] sm:$0xf]
          %s759 = scalar_lea.vmem %s7, 1
          %v760 = vld [vmem:[%s759] sm:$0x1]
          %v762 = vlaneseq
          %v763 = vshrl.u32 %v762, 7
          %v764 = vsub.s32 0, %v763
          %v765 = vrot.slane %v760, %v764
          %v771 = vunpack.c.l.b16 %v755
          %v772 = vunpack.c.l.b16 %v756
          %v773 = vunpack.c.l.b16 %v757
          %v774 = vunpack.c.l.b16 %v758
          %v775 = vpack.c.b16 %v772, %v771
          %v776 = vpack.c.b16 %v774, %v773
          %779 = vmatprep.subr.bf16.mxu0 0
          %780 = vmatpush1.bf16.msra.mxu0 %v775
          %781 = vmatprep.subr.bf16.mxu0 0
          %782 = vmatpush1.bf16.msra.mxu0 %v776
          %783 = vmatprep.subr.bf16.mxu0 0
          %784 = vmatpush1.bf16.msra.mxu0 0
          %785 = vmatprep.subr.bf16.mxu0 0
          %786 = vmatpush1.bf16.msra.mxu0 0
          %787 = vmatprep.subr.bf16.mxu0 0
          %788 = vmatpush1.bf16.msra.mxu0 0
          %789 = vmatprep.subr.bf16.mxu0 0
          %790 = vmatpush1.bf16.msra.mxu0 0
          %791 = vmatprep.subr.bf16.mxu0 0
          %792 = vmatpush1.bf16.msra.mxu0 0
          %793 = vmatprep.subr.bf16.mxu0 0
          %794 = vmatpush1.bf16.msra.mxu0 0
          %795 = vmatprep.subr.bf16.mxu0 0
          %796 = vmatpush1.bf16.msra.mxu0 0
          %797 = vmatprep.subr.bf16.mxu0 0
          %798 = vmatpush1.bf16.msra.mxu0 0
          %799 = vmatprep.subr.bf16.mxu0 0
          %800 = vmatpush1.bf16.msra.mxu0 0
          %801 = vmatprep.subr.bf16.mxu0 0
          %802 = vmatpush1.bf16.msra.mxu0 0
          %803 = vmatprep.subr.bf16.mxu0 0
          %804 = vmatpush1.bf16.msra.mxu0 0
          %805 = vmatprep.subr.bf16.mxu0 0
          %806 = vmatpush1.bf16.msra.mxu0 0
          %807 = vmatprep.subr.bf16.mxu0 0
          %808 = vmatpush1.bf16.msra.mxu0 0
          %809 = vmatprep.subr.bf16.mxu0 0
          %810 = vmatpush1.bf16.msra.mxu0 0
          %811 = vmatprep.mubr.bf16.mxu0 0
          %812 = vmatmul.mubr.bf16.gmra.mrb[0].mxu0 %v644
          %v813 = vpop.f32.mrb[0].mxu0
          %v814 = vadd.f32 %v765, %v813
          %v815 = vpop.f32.mrb[0].mxu0
          %v816 = vpop.f32.mrb[0].mxu0
          %v817 = vpop.f32.mrb[0].mxu0
          %818 = vdwg.mxu0
          %s819 = scalar_lea.vmem %s4, 16
          %v820 = vld [vmem:[%s819] sm:$0xf]
          %v821 = vld [vmem:[%s819 + $0x4] sm:$0xf]
          %v822 = vld [vmem:[%s819 + $0x8] sm:$0xf]
          %v823 = vld [vmem:[%s819 + $0xc] sm:$0xf]
          %s824 = scalar_lea.vmem %s8, 1
          %v825 = vld [vmem:[%s824] sm:$0x1]
          %v827 = vlaneseq
          %v828 = vshrl.u32 %v827, 7
          %v829 = vsub.s32 0, %v828
          %v830 = vrot.slane %v825, %v829
          %v836 = vunpack.c.l.b16 %v820
          %v837 = vunpack.c.l.b16 %v821
          %v838 = vunpack.c.l.b16 %v822
          %v839 = vunpack.c.l.b16 %v823
          %v840 = vpack.c.b16 %v837, %v836
          %v841 = vpack.c.b16 %v839, %v838
          %844 = vmatprep.subr.bf16.mxu0 0
          %845 = vmatpush1.bf16.msra.mxu0 %v840
          %846 = vmatprep.subr.bf16.mxu0 0
          %847 = vmatpush1.bf16.msra.mxu0 %v841
          %848 = vmatprep.subr.bf16.mxu0 0
          %849 = vmatpush1.bf16.msra.mxu0 0
          %850 = vmatprep.subr.bf16.mxu0 0
          %851 = vmatpush1.bf16.msra.mxu0 0
          %852 = vmatprep.subr.bf16.mxu0 0
          %853 = vmatpush1.bf16.msra.mxu0 0
          %854 = vmatprep.subr.bf16.mxu0 0
          %855 = vmatpush1.bf16.msra.mxu0 0
          %856 = vmatprep.subr.bf16.mxu0 0
          %857 = vmatpush1.bf16.msra.mxu0 0
          %858 = vmatprep.subr.bf16.mxu0 0
          %859 = vmatpush1.bf16.msra.mxu0 0
          %860 = vmatprep.subr.bf16.mxu0 0
          %861 = vmatpush1.bf16.msra.mxu0 0
          %862 = vmatprep.subr.bf16.mxu0 0
          %863 = vmatpush1.bf16.msra.mxu0 0
          %864 = vmatprep.subr.bf16.mxu0 0
          %865 = vmatpush1.bf16.msra.mxu0 0
          %866 = vmatprep.subr.bf16.mxu0 0
          %867 = vmatpush1.bf16.msra.mxu0 0
          %868 = vmatprep.subr.bf16.mxu0 0
          %869 = vmatpush1.bf16.msra.mxu0 0
          %870 = vmatprep.subr.bf16.mxu0 0
          %871 = vmatpush1.bf16.msra.mxu0 0
          %872 = vmatprep.subr.bf16.mxu0 0
          %873 = vmatpush1.bf16.msra.mxu0 0
          %874 = vmatprep.subr.bf16.mxu0 0
          %875 = vmatpush1.bf16.msra.mxu0 0
          %876 = vmatprep.mubr.bf16.mxu0 0
          %877 = vmatmul.mubr.bf16.gmra.mrb[0].mxu0 %v644
          %v878 = vpop.f32.mrb[0].mxu0
          %v879 = vadd.f32 %v830, %v878
          %v880 = vpop.f32.mrb[0].mxu0
          %v881 = vpop.f32.mrb[0].mxu0
          %v882 = vpop.f32.mrb[0].mxu0
          %883 = vdwg.mxu0
          %v884 = vpack.c.bf16 %v814, %v814
          %s885 = scalar_lea.vmem [#allocation2], 4
          %886 = vst.msk [vmem:[%s885] sm:$0xf] %vm750, %v884
          %v887 = vpack.c.bf16 %v879, %v879
          %s888 = scalar_lea.vmem [#allocation3], 4
          %889 = vst.msk [vmem:[%s888] sm:$0xf] %vm750, %v887
          %s890 = scalar_lea.vmem %s3, 32
          %v891 = vld [vmem:[%s890] sm:$0xf]
          %v892 = vld [vmem:[%s890 + $0x4] sm:$0xf]
          %v893 = vld [vmem:[%s890 + $0x8] sm:$0xf]
          %v894 = vld [vmem:[%s890 + $0xc] sm:$0xf]
          %s895 = scalar_lea.vmem %s7, 2
          %v896 = vld [vmem:[%s895] sm:$0x1]
          %v898 = vlaneseq
          %v899 = vshrl.u32 %v898, 7
          %v900 = vsub.s32 0, %v899
          %v901 = vrot.slane %v896, %v900
          %v907 = vunpack.c.l.b16 %v891
          %v908 = vunpack.c.l.b16 %v892
          %v909 = vunpack.c.l.b16 %v893
          %v910 = vunpack.c.l.b16 %v894
          %v911 = vpack.c.b16 %v908, %v907
          %v912 = vpack.c.b16 %v910, %v909
          %915 = vmatprep.subr.bf16.mxu0 0
          %916 = vmatpush1.bf16.msra.mxu0 %v911
          %917 = vmatprep.subr.bf16.mxu0 0
          %918 = vmatpush1.bf16.msra.mxu0 %v912
          %919 = vmatprep.subr.bf16.mxu0 0
          %920 = vmatpush1.bf16.msra.mxu0 0
          %921 = vmatprep.subr.bf16.mxu0 0
          %922 = vmatpush1.bf16.msra.mxu0 0
          %923 = vmatprep.subr.bf16.mxu0 0
          %924 = vmatpush1.bf16.msra.mxu0 0
          %925 = vmatprep.subr.bf16.mxu0 0
          %926 = vmatpush1.bf16.msra.mxu0 0
          %927 = vmatprep.subr.bf16.mxu0 0
          %928 = vmatpush1.bf16.msra.mxu0 0
          %929 = vmatprep.subr.bf16.mxu0 0
          %930 = vmatpush1.bf16.msra.mxu0 0
          %931 = vmatprep.subr.bf16.mxu0 0
          %932 = vmatpush1.bf16.msra.mxu0 0
          %933 = vmatprep.subr.bf16.mxu0 0
          %934 = vmatpush1.bf16.msra.mxu0 0
          %935 = vmatprep.subr.bf16.mxu0 0
          %936 = vmatpush1.bf16.msra.mxu0 0
          %937 = vmatprep.subr.bf16.mxu0 0
          %938 = vmatpush1.bf16.msra.mxu0 0
          %939 = vmatprep.subr.bf16.mxu0 0
          %940 = vmatpush1.bf16.msra.mxu0 0
          %941 = vmatprep.subr.bf16.mxu0 0
          %942 = vmatpush1.bf16.msra.mxu0 0
          %943 = vmatprep.subr.bf16.mxu0 0
          %944 = vmatpush1.bf16.msra.mxu0 0
          %945 = vmatprep.subr.bf16.mxu0 0
          %946 = vmatpush1.bf16.msra.mxu0 0
          %947 = vmatprep.mubr.bf16.mxu0 0
          %948 = vmatmul.mubr.bf16.gmra.mrb[0].mxu0 %v644
          %v949 = vpop.f32.mrb[0].mxu0
          %v950 = vadd.f32 %v901, %v949
          %v951 = vpop.f32.mrb[0].mxu0
          %v952 = vpop.f32.mrb[0].mxu0
          %v953 = vpop.f32.mrb[0].mxu0
          %954 = vdwg.mxu0
          %s955 = scalar_lea.vmem %s4, 32
          %v956 = vld [vmem:[%s955] sm:$0xf]
          %v957 = vld [vmem:[%s955 + $0x4] sm:$0xf]
          %v958 = vld [vmem:[%s955 + $0x8] sm:$0xf]
          %v959 = vld [vmem:[%s955 + $0xc] sm:$0xf]
          %s960 = scalar_lea.vmem %s8, 2
          %v961 = vld [vmem:[%s960] sm:$0x1]
          %v963 = vlaneseq
          %v964 = vshrl.u32 %v963, 7
          %v965 = vsub.s32 0, %v964
          %v966 = vrot.slane %v961, %v965
          %v972 = vunpack.c.l.b16 %v956
          %v973 = vunpack.c.l.b16 %v957
          %v974 = vunpack.c.l.b16 %v958
          %v975 = vunpack.c.l.b16 %v959
          %v976 = vpack.c.b16 %v973, %v972
          %v977 = vpack.c.b16 %v975, %v974
          %980 = vmatprep.subr.bf16.mxu0 0
          %981 = vmatpush1.bf16.msra.mxu0 %v976
          %982 = vmatprep.subr.bf16.mxu0 0
          %983 = vmatpush1.bf16.msra.mxu0 %v977
          %984 = vmatprep.subr.bf16.mxu0 0
          %985 = vmatpush1.bf16.msra.mxu0 0
          %986 = vmatprep.subr.bf16.mxu0 0
          %987 = vmatpush1.bf16.msra.mxu0 0
          %988 = vmatprep.subr.bf16.mxu0 0
          %989 = vmatpush1.bf16.msra.mxu0 0
          %990 = vmatprep.subr.bf16.mxu0 0
          %991 = vmatpush1.bf16.msra.mxu0 0
          %992 = vmatprep.subr.bf16.mxu0 0
          %993 = vmatpush1.bf16.msra.mxu0 0
          %994 = vmatprep.subr.bf16.mxu0 0
          %995 = vmatpush1.bf16.msra.mxu0 0
          %996 = vmatprep.subr.bf16.mxu0 0
          %997 = vmatpush1.bf16.msra.mxu0 0
          %998 = vmatprep.subr.bf16.mxu0 0
          %999 = vmatpush1.bf16.msra.mxu0 0
          %1000 = vmatprep.subr.bf16.mxu0 0
          %1001 = vmatpush1.bf16.msra.mxu0 0
          %1002 = vmatprep.subr.bf16.mxu0 0
          %1003 = vmatpush1.bf16.msra.mxu0 0
          %1004 = vmatprep.subr.bf16.mxu0 0
          %1005 = vmatpush1.bf16.msra.mxu0 0
          %1006 = vmatprep.subr.bf16.mxu0 0
          %1007 = vmatpush1.bf16.msra.mxu0 0
          %1008 = vmatprep.subr.bf16.mxu0 0
          %1009 = vmatpush1.bf16.msra.mxu0 0
          %1010 = vmatprep.subr.bf16.mxu0 0
          %1011 = vmatpush1.bf16.msra.mxu0 0
          %1012 = vmatprep.mubr.bf16.mxu0 0
          %1013 = vmatmul.mubr.bf16.gmra.mrb[0].mxu0 %v644
          %v1014 = vpop.f32.mrb[0].mxu0
          %v1015 = vadd.f32 %v966, %v1014
          %v1016 = vpop.f32.mrb[0].mxu0
          %v1017 = vpop.f32.mrb[0].mxu0
          %v1018 = vpop.f32.mrb[0].mxu0
          %1019 = vdwg.mxu0
          %v1020 = vpack.c.bf16 %v950, %v950
          %s1021 = scalar_lea.vmem [#allocation2], 8
          %1022 = vst.msk [vmem:[%s1021] sm:$0xf] %vm750, %v1020
          %v1023 = vpack.c.bf16 %v1015, %v1015
          %s1024 = scalar_lea.vmem [#allocation3], 8
          %1025 = vst.msk [vmem:[%s1024] sm:$0xf] %vm750, %v1023
          %s1026 = scalar_lea.vmem %s3, 48
          %v1027 = vld [vmem:[%s1026] sm:$0xf]
          %v1028 = vld [vmem:[%s1026 + $0x4] sm:$0xf]
          %v1029 = vld [vmem:[%s1026 + $0x8] sm:$0xf]
          %v1030 = vld [vmem:[%s1026 + $0xc] sm:$0xf]
          %s1031 = scalar_lea.vmem %s7, 3
          %v1032 = vld [vmem:[%s1031] sm:$0x1]
          %v1034 = vlaneseq
          %v1035 = vshrl.u32 %v1034, 7
          %v1036 = vsub.s32 0, %v1035
          %v1037 = vrot.slane %v1032, %v1036
          %v1043 = vunpack.c.l.b16 %v1027
          %v1044 = vunpack.c.l.b16 %v1028
          %v1045 = vunpack.c.l.b16 %v1029
          %v1046 = vunpack.c.l.b16 %v1030
          %v1047 = vpack.c.b16 %v1044, %v1043
          %v1048 = vpack.c.b16 %v1046, %v1045
          %1051 = vmatprep.subr.bf16.mxu0 0
          %1052 = vmatpush1.bf16.msra.mxu0 %v1047
          %1053 = vmatprep.subr.bf16.mxu0 0
          %1054 = vmatpush1.bf16.msra.mxu0 %v1048
          %1055 = vmatprep.subr.bf16.mxu0 0
          %1056 = vmatpush1.bf16.msra.mxu0 0
          %1057 = vmatprep.subr.bf16.mxu0 0
          %1058 = vmatpush1.bf16.msra.mxu0 0
          %1059 = vmatprep.subr.bf16.mxu0 0
          %1060 = vmatpush1.bf16.msra.mxu0 0
          %1061 = vmatprep.subr.bf16.mxu0 0
          %1062 = vmatpush1.bf16.msra.mxu0 0
          %1063 = vmatprep.subr.bf16.mxu0 0
          %1064 = vmatpush1.bf16.msra.mxu0 0
          %1065 = vmatprep.subr.bf16.mxu0 0
          %1066 = vmatpush1.bf16.msra.mxu0 0
          %1067 = vmatprep.subr.bf16.mxu0 0
          %1068 = vmatpush1.bf16.msra.mxu0 0
          %1069 = vmatprep.subr.bf16.mxu0 0
          %1070 = vmatpush1.bf16.msra.mxu0 0
          %1071 = vmatprep.subr.bf16.mxu0 0
          %1072 = vmatpush1.bf16.msra.mxu0 0
          %1073 = vmatprep.subr.bf16.mxu0 0
          %1074 = vmatpush1.bf16.msra.mxu0 0
          %1075 = vmatprep.subr.bf16.mxu0 0
          %1076 = vmatpush1.bf16.msra.mxu0 0
          %1077 = vmatprep.subr.bf16.mxu0 0
          %1078 = vmatpush1.bf16.msra.mxu0 0
          %1079 = vmatprep.subr.bf16.mxu0 0
          %1080 = vmatpush1.bf16.msra.mxu0 0
          %1081 = vmatprep.subr.bf16.mxu0 0
          %1082 = vmatpush1.bf16.msra.mxu0 0
          %1083 = vmatprep.mubr.bf16.mxu0 0
          %1084 = vmatmul.mubr.bf16.gmra.mrb[0].mxu0 %v644
          %v1085 = vpop.f32.mrb[0].mxu0
          %v1086 = vadd.f32 %v1037, %v1085
          %v1087 = vpop.f32.mrb[0].mxu0
          %v1088 = vpop.f32.mrb[0].mxu0
          %v1089 = vpop.f32.mrb[0].mxu0
          %1090 = vdwg.mxu0
          %s1091 = scalar_lea.vmem %s4, 48
          %v1092 = vld [vmem:[%s1091] sm:$0xf]
          %v1093 = vld [vmem:[%s1091 + $0x4] sm:$0xf]
          %v1094 = vld [vmem:[%s1091 + $0x8] sm:$0xf]
          %v1095 = vld [vmem:[%s1091 + $0xc] sm:$0xf]
          %s1096 = scalar_lea.vmem %s8, 3
          %v1097 = vld [vmem:[%s1096] sm:$0x1]
          %v1099 = vlaneseq
          %v1100 = vshrl.u32 %v1099, 7
          %v1101 = vsub.s32 0, %v1100
          %v1102 = vrot.slane %v1097, %v1101
          %v1108 = vunpack.c.l.b16 %v1092
          %v1109 = vunpack.c.l.b16 %v1093
          %v1110 = vunpack.c.l.b16 %v1094
          %v1111 = vunpack.c.l.b16 %v1095
          %v1112 = vpack.c.b16 %v1109, %v1108
          %v1113 = vpack.c.b16 %v1111, %v1110
          %1116 = vmatprep.subr.bf16.mxu0 0
          %1117 = vmatpush1.bf16.msra.mxu0 %v1112
          %1118 = vmatprep.subr.bf16.mxu0 0
          %1119 = vmatpush1.bf16.msra.mxu0 %v1113
          %1120 = vmatprep.subr.bf16.mxu0 0
          %1121 = vmatpush1.bf16.msra.mxu0 0
          %1122 = vmatprep.subr.bf16.mxu0 0
          %1123 = vmatpush1.bf16.msra.mxu0 0
          %1124 = vmatprep.subr.bf16.mxu0 0
          %1125 = vmatpush1.bf16.msra.mxu0 0
          %1126 = vmatprep.subr.bf16.mxu0 0
          %1127 = vmatpush1.bf16.msra.mxu0 0
          %1128 = vmatprep.subr.bf16.mxu0 0
          %1129 = vmatpush1.bf16.msra.mxu0 0
          %1130 = vmatprep.subr.bf16.mxu0 0
          %1131 = vmatpush1.bf16.msra.mxu0 0
          %1132 = vmatprep.subr.bf16.mxu0 0
          %1133 = vmatpush1.bf16.msra.mxu0 0
          %1134 = vmatprep.subr.bf16.mxu0 0
          %1135 = vmatpush1.bf16.msra.mxu0 0
          %1136 = vmatprep.subr.bf16.mxu0 0
          %1137 = vmatpush1.bf16.msra.mxu0 0
          %1138 = vmatprep.subr.bf16.mxu0 0
          %1139 = vmatpush1.bf16.msra.mxu0 0
          %1140 = vmatprep.subr.bf16.mxu0 0
          %1141 = vmatpush1.bf16.msra.mxu0 0
          %1142 = vmatprep.subr.bf16.mxu0 0
          %1143 = vmatpush1.bf16.msra.mxu0 0
          %1144 = vmatprep.subr.bf16.mxu0 0
          %1145 = vmatpush1.bf16.msra.mxu0 0
          %1146 = vmatprep.subr.bf16.mxu0 0
          %1147 = vmatpush1.bf16.msra.mxu0 0
          %1148 = vmatprep.mubr.bf16.mxu0 0
          %1149 = vmatmul.mubr.bf16.gmra.mrb[0].mxu0 %v644
          %v1150 = vpop.f32.mrb[0].mxu0
          %v1151 = vadd.f32 %v1102, %v1150
          %v1152 = vpop.f32.mrb[0].mxu0
          %v1153 = vpop.f32.mrb[0].mxu0
          %v1154 = vpop.f32.mrb[0].mxu0
          %1155 = vdwg.mxu0
          %v1156 = vpack.c.bf16 %v1086, %v1086
          %s1157 = scalar_lea.vmem [#allocation2], 12
          %1158 = vst.msk [vmem:[%s1157] sm:$0xf] %vm750, %v1156
          %v1159 = vpack.c.bf16 %v1151, %v1151
          %s1160 = scalar_lea.vmem [#allocation3], 12
          %1161 = vst.msk [vmem:[%s1160] sm:$0xf] %vm750, %v1159
        $region96: #{tpu_custom_call.1} parent=91 // pred_fallthru
          _
        %v1162 = vld [vmem:[%s608] sm:$0xff]
        %v1163 = vpack.c.bf16 %v1162, %v1162
        %v1164 = vld [vmem:[%s2] sm:$0xf]
        %v1165 = vld [vmem:[%s2 + $0x4] sm:$0xf]
        %v1166 = vld [vmem:[%s2 + $0x8] sm:$0xf]
        %v1167 = vld [vmem:[%s2 + $0xc] sm:$0xf]
        %v1168 = vld [vmem:[%s6] sm:$0x1]
        %v1170 = vlaneseq
        %v1171 = vshrl.u32 %v1170, 7
        %v1172 = vsub.s32 0, %v1171
        %v1173 = vrot.slane %v1168, %v1172
        %v1179 = vunpack.c.l.b16 %v1164
        %v1180 = vunpack.c.l.b16 %v1165
        %v1181 = vunpack.c.l.b16 %v1166
        %v1182 = vunpack.c.l.b16 %v1167
        %v1183 = vpack.c.b16 %v1180, %v1179
        %v1184 = vpack.c.b16 %v1182, %v1181
        %vm1187 = vcmask 261120
        %v1189 = vsel %vm1187, %v1163, 0
        %1191 = vmatprep.subr.bf16.mxu0 0
        %1192 = vmatpush1.bf16.msra.mxu0 %v1183
        %1193 = vmatprep.subr.bf16.mxu0 0
        %1194 = vmatpush1.bf16.msra.mxu0 %v1184
        %1195 = vmatprep.subr.bf16.mxu0 0
        %1196 = vmatpush1.bf16.msra.mxu0 0
        %1197 = vmatprep.subr.bf16.mxu0 0
        %1198 = vmatpush1.bf16.msra.mxu0 0
        %1199 = vmatprep.subr.bf16.mxu0 0
        %1200 = vmatpush1.bf16.msra.mxu0 0
        %1201 = vmatprep.subr.bf16.mxu0 0
        %1202 = vmatpush1.bf16.msra.mxu0 0
        %1203 = vmatprep.subr.bf16.mxu0 0
        %1204 = vmatpush1.bf16.msra.mxu0 0
        %1205 = vmatprep.subr.bf16.mxu0 0
        %1206 = vmatpush1.bf16.msra.mxu0 0
        %1207 = vmatprep.subr.bf16.mxu0 0
        %1208 = vmatpush1.bf16.msra.mxu0 0
        %1209 = vmatprep.subr.bf16.mxu0 0
        %1210 = vmatpush1.bf16.msra.mxu0 0
        %1211 = vmatprep.subr.bf16.mxu0 0
        %1212 = vmatpush1.bf16.msra.mxu0 0
        %1213 = vmatprep.subr.bf16.mxu0 0
        %1214 = vmatpush1.bf16.msra.mxu0 0
        %1215 = vmatprep.subr.bf16.mxu0 0
        %1216 = vmatpush1.bf16.msra.mxu0 0
        %1217 = vmatprep.subr.bf16.mxu0 0
        %1218 = vmatpush1.bf16.msra.mxu0 0
        %1219 = vmatprep.subr.bf16.mxu0 0
        %1220 = vmatpush1.bf16.msra.mxu0 0
        %1221 = vmatprep.subr.bf16.mxu0 0
        %1222 = vmatpush1.bf16.msra.mxu0 0
        %1223 = vmatprep.mubr.bf16.mxu0 0
        %1224 = vmatmul.mubr.bf16.gmra.mrb[0].mxu0 %v1189
        %v1225 = vpop.f32.mrb[0].mxu0
        %v1226 = vadd.f32 %v1173, %v1225
        %v1227 = vpop.f32.mrb[0].mxu0
        %v1228 = vpop.f32.mrb[0].mxu0
        %v1229 = vpop.f32.mrb[0].mxu0
        %1230 = vdwg.mxu0
        %v1231 = vmul.f32 %v1226, 0.35355338
        %v1232 = vpack.c.bf16 %v1231, %v1231
        %v1233 = vld [vmem:[#allocation2] sm:$0xf]
        %vm1234 = vcmask 64512
        %v1236 = vsel %vm1234, %v1232, 0
        %v1239 = vsel %vm1234, %v1233, 0
        %1241 = vmatprep.subr.bf16.mxu0 0
        %1242 = vmatpush1.bf16.xpose.msra.mxu0 %v1239
        %1243 = vmatprep.subr.bf16.mxu0 0
        %1244 = vmatpush1.bf16.xpose.msra.mxu0 0
        %1245 = vmatprep.subr.bf16.mxu0 0
        %1246 = vmatpush1.bf16.xpose.msra.mxu0 0
        %1247 = vmatprep.subr.bf16.mxu0 0
        %1248 = vmatpush1.bf16.xpose.msra.mxu0 0
        %1249 = vmatprep.subr.bf16.mxu0 0
        %1250 = vmatpush1.bf16.xpose.msra.mxu0 0
        %1251 = vmatprep.subr.bf16.mxu0 0
        %1252 = vmatpush1.bf16.xpose.msra.mxu0 0
        %1253 = vmatprep.subr.bf16.mxu0 0
        %1254 = vmatpush1.bf16.xpose.msra.mxu0 0
        %1255 = vmatprep.subr.bf16.mxu0 0
        %1256 = vmatpush1.bf16.xpose.msra.mxu0 0
        %1257 = vmatprep.subr.bf16.mxu0 0
        %1258 = vmatpush1.bf16.xpose.msra.mxu0 0
        %1259 = vmatprep.subr.bf16.mxu0 0
        %1260 = vmatpush1.bf16.xpose.msra.mxu0 0
        %1261 = vmatprep.subr.bf16.mxu0 0
        %1262 = vmatpush1.bf16.xpose.msra.mxu0 0
        %1263 = vmatprep.subr.bf16.mxu0 0
        %1264 = vmatpush1.bf16.xpose.msra.mxu0 0
        %1265 = vmatprep.subr.bf16.mxu0 0
        %1266 = vmatpush1.bf16.xpose.msra.mxu0 0
        %1267 = vmatprep.subr.bf16.mxu0 0
        %1268 = vmatpush1.bf16.xpose.msra.mxu0 0
        %1269 = vmatprep.subr.bf16.mxu0 0
        %1270 = vmatpush1.bf16.xpose.msra.mxu0 0
        %1271 = vmatprep.subr.bf16.mxu0 0
        %1272 = vmatpush1.bf16.xpose.msra.mxu0 0
        %1273 = vmatprep.mubr.bf16.mxu0 0
        %1274 = vmatmul.mubr.bf16.gmra.mrb[0].mxu0 %v1236
        %v1275 = vpop.f32.mrb[0].mxu0
        %v1276 = vadd.f32 0.0, %v1275
        %v1277 = vpop.f32.mrb[0].mxu0
        %v1278 = vpop.f32.mrb[0].mxu0
        %v1279 = vpop.f32.mrb[0].mxu0
        %1280 = vdwg.mxu0
        %v1281 = vsel %vm1234, %v1276, -inf
        %1282 = vmax.xlane.f32.xlu0 %v1281
        %v1283 = vpop.xlane.xlu0 %1282
        %v1284 = vsub.f32 %v1276, %v1283
        %v1285 = vmul.f32 %v1284, 1.442695
        %v1286 = vpow.pop %v1285
        %v1287 = vsel %vm1234, %v1286, 0.0
        %1288 = vadd.xlane.f32.xlu0 %v1287
        %v1289 = vpop.xlane.xlu0 %1288
        %v1290 = vrcp.pop %v1289
        %v1291 = vmul.f32 %v1286, %v1290
        %v1292 = vpack.c.bf16 %v1291, %v1291
        %v1293 = vld [vmem:[#allocation3] sm:$0xf]
        %v1295 = vsel %vm1234, %v1292, 0
        %vm1297 = vcmask 1043456
        %v1299 = vsel %vm1297, %v1293, 0
        %1301 = vmatprep.subr.bf16.mxu0 0
        %1302 = vmatpush1.bf16.msra.mxu0 %v1299
        %1303 = vmatprep.subr.bf16.mxu0 0
        %1304 = vmatpush1.bf16.msra.mxu0 0
        %1305 = vmatprep.subr.bf16.mxu0 0
        %1306 = vmatpush1.bf16.msra.mxu0 0
        %1307 = vmatprep.subr.bf16.mxu0 0
        %1308 = vmatpush1.bf16.msra.mxu0 0
        %1309 = vmatprep.subr.bf16.mxu0 0
        %1310 = vmatpush1.bf16.msra.mxu0 0
        %1311 = vmatprep.subr.bf16.mxu0 0
        %1312 = vmatpush1.bf16.msra.mxu0 0
        %1313 = vmatprep.subr.bf16.mxu0 0
        %1314 = vmatpush1.bf16.msra.mxu0 0
        %1315 = vmatprep.subr.bf16.mxu0 0
        %1316 = vmatpush1.bf16.msra.mxu0 0
        %1317 = vmatprep.subr.bf16.mxu0 0
        %1318 = vmatpush1.bf16.msra.mxu0 0
        %1319 = vmatprep.subr.bf16.mxu0 0
        %1320 = vmatpush1.bf16.msra.mxu0 0
        %1321 = vmatprep.subr.bf16.mxu0 0
        %1322 = vmatpush1.bf16.msra.mxu0 0
        %1323 = vmatprep.subr.bf16.mxu0 0
        %1324 = vmatpush1.bf16.msra.mxu0 0
        %1325 = vmatprep.subr.bf16.mxu0 0
        %1326 = vmatpush1.bf16.msra.mxu0 0
        %1327 = vmatprep.subr.bf16.mxu0 0
        %1328 = vmatpush1.bf16.msra.mxu0 0
        %1329 = vmatprep.subr.bf16.mxu0 0
        %1330 = vmatpush1.bf16.msra.mxu0 0
        %1331 = vmatprep.subr.bf16.mxu0 0
        %1332 = vmatpush1.bf16.msra.mxu0 0
        %1333 = vmatprep.mubr.bf16.mxu0 0
        %1334 = vmatmul.mubr.bf16.gmra.mrb[0].mxu0 %v1295
        %v1335 = vpop.f32.mrb[0].mxu0
        %v1336 = vadd.f32 0.0, %v1335
        %v1337 = vpop.f32.mrb[0].mxu0
        %v1338 = vpop.f32.mrb[0].mxu0
        %v1339 = vpop.f32.mrb[0].mxu0
        %1340 = vdwg.mxu0
        %v1341 = vpack.c.bf16 %v1336, %v1336
        %v1342 = vld [vmem:[%s5] sm:$0xf]
        %s1343 = scalar_lea.vmem %s2, 16
        %v1344 = vld [vmem:[%s1343] sm:$0xf]
        %v1345 = vld [vmem:[%s1343 + $0x4] sm:$0xf]
        %v1346 = vld [vmem:[%s1343 + $0x8] sm:$0xf]
        %v1347 = vld [vmem:[%s1343 + $0xc] sm:$0xf]
        %s1348 = scalar_lea.vmem %s6, 1
        %v1349 = vld [vmem:[%s1348] sm:$0x1]
        %v1351 = vlaneseq
        %v1352 = vshrl.u32 %v1351, 7
        %v1353 = vsub.s32 0, %v1352
        %v1354 = vrot.slane %v1349, %v1353
        %v1360 = vunpack.c.l.b16 %v1344
        %v1361 = vunpack.c.l.b16 %v1345
        %v1362 = vunpack.c.l.b16 %v1346
        %v1363 = vunpack.c.l.b16 %v1347
        %v1364 = vpack.c.b16 %v1361, %v1360
        %v1365 = vpack.c.b16 %v1363, %v1362
        %1368 = vmatprep.subr.bf16.mxu0 0
        %1369 = vmatpush1.bf16.msra.mxu0 %v1364
        %1370 = vmatprep.subr.bf16.mxu0 0
        %1371 = vmatpush1.bf16.msra.mxu0 %v1365
        %1372 = vmatprep.subr.bf16.mxu0 0
        %1373 = vmatpush1.bf16.msra.mxu0 0
        %1374 = vmatprep.subr.bf16.mxu0 0
        %1375 = vmatpush1.bf16.msra.mxu0 0
        %1376 = vmatprep.subr.bf16.mxu0 0
        %1377 = vmatpush1.bf16.msra.mxu0 0
        %1378 = vmatprep.subr.bf16.mxu0 0
        %1379 = vmatpush1.bf16.msra.mxu0 0
        %1380 = vmatprep.subr.bf16.mxu0 0
        %1381 = vmatpush1.bf16.msra.mxu0 0
        %1382 = vmatprep.subr.bf16.mxu0 0
        %1383 = vmatpush1.bf16.msra.mxu0 0
        %1384 = vmatprep.subr.bf16.mxu0 0
        %1385 = vmatpush1.bf16.msra.mxu0 0
        %1386 = vmatprep.subr.bf16.mxu0 0
        %1387 = vmatpush1.bf16.msra.mxu0 0
        %1388 = vmatprep.subr.bf16.mxu0 0
        %1389 = vmatpush1.bf16.msra.mxu0 0
        %1390 = vmatprep.subr.bf16.mxu0 0
        %1391 = vmatpush1.bf16.msra.mxu0 0
        %1392 = vmatprep.subr.bf16.mxu0 0
        %1393 = vmatpush1.bf16.msra.mxu0 0
        %1394 = vmatprep.subr.bf16.mxu0 0
        %1395 = vmatpush1.bf16.msra.mxu0 0
        %1396 = vmatprep.subr.bf16.mxu0 0
        %1397 = vmatpush1.bf16.msra.mxu0 0
        %1398 = vmatprep.subr.bf16.mxu0 0
        %1399 = vmatpush1.bf16.msra.mxu0 0
        %1400 = vmatprep.mubr.bf16.mxu0 0
        %1401 = vmatmul.mubr.bf16.gmra.mrb[0].mxu0 %v1189
        %v1402 = vpop.f32.mrb[0].mxu0
        %v1403 = vadd.f32 %v1354, %v1402
        %v1404 = vpop.f32.mrb[0].mxu0
        %v1405 = vpop.f32.mrb[0].mxu0
        %v1406 = vpop.f32.mrb[0].mxu0
        %1407 = vdwg.mxu0
        %v1408 = vmul.f32 %v1403, 0.35355338
        %v1409 = vpack.c.bf16 %v1408, %v1408
        %s1410 = scalar_lea.vmem [#allocation2], 4
        %v1411 = vld [vmem:[%s1410] sm:$0xf]
        %v1413 = vsel %vm1234, %v1409, 0
        %v1416 = vsel %vm1234, %v1411, 0
        %1418 = vmatprep.subr.bf16.mxu0 0
        %1419 = vmatpush1.bf16.xpose.msra.mxu0 %v1416
        %1420 = vmatprep.subr.bf16.mxu0 0
        %1421 = vmatpush1.bf16.xpose.msra.mxu0 0
        %1422 = vmatprep.subr.bf16.mxu0 0
        %1423 = vmatpush1.bf16.xpose.msra.mxu0 0
        %1424 = vmatprep.subr.bf16.mxu0 0
        %1425 = vmatpush1.bf16.xpose.msra.mxu0 0
        %1426 = vmatprep.subr.bf16.mxu0 0
        %1427 = vmatpush1.bf16.xpose.msra.mxu0 0
        %1428 = vmatprep.subr.bf16.mxu0 0
        %1429 = vmatpush1.bf16.xpose.msra.mxu0 0
        %1430 = vmatprep.subr.bf16.mxu0 0
        %1431 = vmatpush1.bf16.xpose.msra.mxu0 0
        %1432 = vmatprep.subr.bf16.mxu0 0
        %1433 = vmatpush1.bf16.xpose.msra.mxu0 0
        %1434 = vmatprep.subr.bf16.mxu0 0
        %1435 = vmatpush1.bf16.xpose.msra.mxu0 0
        %1436 = vmatprep.subr.bf16.mxu0 0
        %1437 = vmatpush1.bf16.xpose.msra.mxu0 0
        %1438 = vmatprep.subr.bf16.mxu0 0
        %1439 = vmatpush1.bf16.xpose.msra.mxu0 0
        %1440 = vmatprep.subr.bf16.mxu0 0
        %1441 = vmatpush1.bf16.xpose.msra.mxu0 0
        %1442 = vmatprep.subr.bf16.mxu0 0
        %1443 = vmatpush1.bf16.xpose.msra.mxu0 0
        %1444 = vmatprep.subr.bf16.mxu0 0
        %1445 = vmatpush1.bf16.xpose.msra.mxu0 0
        %1446 = vmatprep.subr.bf16.mxu0 0
        %1447 = vmatpush1.bf16.xpose.msra.mxu0 0
        %1448 = vmatprep.subr.bf16.mxu0 0
        %1449 = vmatpush1.bf16.xpose.msra.mxu0 0
        %1450 = vmatprep.mubr.bf16.mxu0 0
        %1451 = vmatmul.mubr.bf16.gmra.mrb[0].mxu0 %v1413
        %v1452 = vpop.f32.mrb[0].mxu0
        %v1453 = vadd.f32 0.0, %v1452
        %v1454 = vpop.f32.mrb[0].mxu0
        %v1455 = vpop.f32.mrb[0].mxu0
        %v1456 = vpop.f32.mrb[0].mxu0
        %1457 = vdwg.mxu0
        %v1458 = vsel %vm1234, %v1453, -inf
        %1459 = vmax.xlane.f32.xlu0 %v1458
        %v1460 = vpop.xlane.xlu0 %1459
        %v1461 = vsub.f32 %v1453, %v1460
        %v1462 = vmul.f32 %v1461, 1.442695
        %v1463 = vpow.pop %v1462
        %v1464 = vsel %vm1234, %v1463, 0.0
        %1465 = vadd.xlane.f32.xlu0 %v1464
        %v1466 = vpop.xlane.xlu0 %1465
        %v1467 = vrcp.pop %v1466
        %v1468 = vmul.f32 %v1463, %v1467
        %v1469 = vpack.c.bf16 %v1468, %v1468
        %s1470 = scalar_lea.vmem [#allocation3], 4
        %v1471 = vld [vmem:[%s1470] sm:$0xf]
        %v1473 = vsel %vm1234, %v1469, 0
        %v1476 = vsel %vm1297, %v1471, 0
        %1478 = vmatprep.subr.bf16.mxu0 0
        %1479 = vmatpush1.bf16.msra.mxu0 %v1476
        %1480 = vmatprep.subr.bf16.mxu0 0
        %1481 = vmatpush1.bf16.msra.mxu0 0
        %1482 = vmatprep.subr.bf16.mxu0 0
        %1483 = vmatpush1.bf16.msra.mxu0 0
        %1484 = vmatprep.subr.bf16.mxu0 0
        %1485 = vmatpush1.bf16.msra.mxu0 0
        %1486 = vmatprep.subr.bf16.mxu0 0
        %1487 = vmatpush1.bf16.msra.mxu0 0
        %1488 = vmatprep.subr.bf16.mxu0 0
        %1489 = vmatpush1.bf16.msra.mxu0 0
        %1490 = vmatprep.subr.bf16.mxu0 0
        %1491 = vmatpush1.bf16.msra.mxu0 0
        %1492 = vmatprep.subr.bf16.mxu0 0
        %1493 = vmatpush1.bf16.msra.mxu0 0
        %1494 = vmatprep.subr.bf16.mxu0 0
        %1495 = vmatpush1.bf16.msra.mxu0 0
        %1496 = vmatprep.subr.bf16.mxu0 0
        %1497 = vmatpush1.bf16.msra.mxu0 0
        %1498 = vmatprep.subr.bf16.mxu0 0
        %1499 = vmatpush1.bf16.msra.mxu0 0
        %1500 = vmatprep.subr.bf16.mxu0 0
        %1501 = vmatpush1.bf16.msra.mxu0 0
        %1502 = vmatprep.subr.bf16.mxu0 0
        %1503 = vmatpush1.bf16.msra.mxu0 0
        %1504 = vmatprep.subr.bf16.mxu0 0
        %1505 = vmatpush1.bf16.msra.mxu0 0
        %1506 = vmatprep.subr.bf16.mxu0 0
        %1507 = vmatpush1.bf16.msra.mxu0 0
        %1508 = vmatprep.subr.bf16.mxu0 0
        %1509 = vmatpush1.bf16.msra.mxu0 0
        %1510 = vmatprep.mubr.bf16.mxu0 0
        %1511 = vmatmul.mubr.bf16.gmra.mrb[0].mxu0 %v1473
        %v1512 = vpop.f32.mrb[0].mxu0
        %v1513 = vadd.f32 0.0, %v1512
        %v1514 = vpop.f32.mrb[0].mxu0
        %v1515 = vpop.f32.mrb[0].mxu0
        %v1516 = vpop.f32.mrb[0].mxu0
        %1517 = vdwg.mxu0
        %v1518 = vpack.c.bf16 %v1513, %v1513
        %s1519 = scalar_lea.vmem %s5, 4
        %v1520 = vld [vmem:[%s1519] sm:$0xf]
        %v1522 = vsel %vm1234, %v1518, 0
        %v1525 = vsel %vm1297, %v1520, 0
        %1527 = vmatprep.subr.bf16.mxu0 0
        %1528 = vmatpush1.bf16.msra.mxu0 %v1525
        %1529 = vmatprep.subr.bf16.mxu0 0
        %1530 = vmatpush1.bf16.msra.mxu0 0
        %1531 = vmatprep.subr.bf16.mxu0 0
        %1532 = vmatpush1.bf16.msra.mxu0 0
        %1533 = vmatprep.subr.bf16.mxu0 0
        %1534 = vmatpush1.bf16.msra.mxu0 0
        %1535 = vmatprep.subr.bf16.mxu0 0
        %1536 = vmatpush1.bf16.msra.mxu0 0
        %1537 = vmatprep.subr.bf16.mxu0 0
        %1538 = vmatpush1.bf16.msra.mxu0 0
        %1539 = vmatprep.subr.bf16.mxu0 0
        %1540 = vmatpush1.bf16.msra.mxu0 0
        %1541 = vmatprep.subr.bf16.mxu0 0
        %1542 = vmatpush1.bf16.msra.mxu0 0
        %1543 = vmatprep.subr.bf16.mxu0 0
        %1544 = vmatpush1.bf16.msra.mxu0 0
        %1545 = vmatprep.subr.bf16.mxu0 0
        %1546 = vmatpush1.bf16.msra.mxu0 0
        %1547 = vmatprep.subr.bf16.mxu0 0
        %1548 = vmatpush1.bf16.msra.mxu0 0
        %1549 = vmatprep.subr.bf16.mxu0 0
        %1550 = vmatpush1.bf16.msra.mxu0 0
        %1551 = vmatprep.subr.bf16.mxu0 0
        %1552 = vmatpush1.bf16.msra.mxu0 0
        %1553 = vmatprep.subr.bf16.mxu0 0
        %1554 = vmatpush1.bf16.msra.mxu0 0
        %1555 = vmatprep.subr.bf16.mxu0 0
        %1556 = vmatpush1.bf16.msra.mxu0 0
        %1557 = vmatprep.subr.bf16.mxu0 0
        %1558 = vmatpush1.bf16.msra.mxu0 0
        %1559 = vmatprep.mubr.bf16.mxu0 0
        %1560 = vmatmul.mubr.bf16.gmra.mrb[0].mxu0 %v1522
        %v1561 = vpop.f32.mrb[0].mxu0
        %v1562 = vadd.f32 0.0, %v1561
        %v1563 = vpop.f32.mrb[0].mxu0
        %v1564 = vpop.f32.mrb[0].mxu0
        %v1565 = vpop.f32.mrb[0].mxu0
        %1566 = vdwg.mxu0
        %v1568 = vsel %vm1234, %v1341, 0
        %v1571 = vsel %vm1297, %v1342, 0
        %1573 = vmatprep.subr.bf16.mxu0 0
        %1574 = vmatpush1.bf16.msra.mxu0 %v1571
        %1575 = vmatprep.subr.bf16.mxu0 0
        %1576 = vmatpush1.bf16.msra.mxu0 0
        %1577 = vmatprep.subr.bf16.mxu0 0
        %1578 = vmatpush1.bf16.msra.mxu0 0
        %1579 = vmatprep.subr.bf16.mxu0 0
        %1580 = vmatpush1.bf16.msra.mxu0 0
        %1581 = vmatprep.subr.bf16.mxu0 0
        %1582 = vmatpush1.bf16.msra.mxu0 0
        %1583 = vmatprep.subr.bf16.mxu0 0
        %1584 = vmatpush1.bf16.msra.mxu0 0
        %1585 = vmatprep.subr.bf16.mxu0 0
        %1586 = vmatpush1.bf16.msra.mxu0 0
        %1587 = vmatprep.subr.bf16.mxu0 0
        %1588 = vmatpush1.bf16.msra.mxu0 0
        %1589 = vmatprep.subr.bf16.mxu0 0
        %1590 = vmatpush1.bf16.msra.mxu0 0
        %1591 = vmatprep.subr.bf16.mxu0 0
        %1592 = vmatpush1.bf16.msra.mxu0 0
        %1593 = vmatprep.subr.bf16.mxu0 0
        %1594 = vmatpush1.bf16.msra.mxu0 0
        %1595 = vmatprep.subr.bf16.mxu0 0
        %1596 = vmatpush1.bf16.msra.mxu0 0
        %1597 = vmatprep.subr.bf16.mxu0 0
        %1598 = vmatpush1.bf16.msra.mxu0 0
        %1599 = vmatprep.subr.bf16.mxu0 0
        %1600 = vmatpush1.bf16.msra.mxu0 0
        %1601 = vmatprep.subr.bf16.mxu0 0
        %1602 = vmatpush1.bf16.msra.mxu0 0
        %1603 = vmatprep.subr.bf16.mxu0 0
        %1604 = vmatpush1.bf16.msra.mxu0 0
        %1605 = vmatprep.mubr.bf16.mxu0 0
        %1606 = vmatmul.mubr.bf16.gmra.mrb[0].mxu0 %v1568
        %v1607 = vpop.f32.mrb[0].mxu0
        %v1608 = vadd.f32 %v1562, %v1607
        %v1609 = vpop.f32.mrb[0].mxu0
        %v1610 = vpop.f32.mrb[0].mxu0
        %v1611 = vpop.f32.mrb[0].mxu0
        %1612 = vdwg.mxu0
        %s1613 = scalar_lea.vmem %s2, 32
        %v1614 = vld [vmem:[%s1613] sm:$0xf]
        %v1615 = vld [vmem:[%s1613 + $0x4] sm:$0xf]
        %v1616 = vld [vmem:[%s1613 + $0x8] sm:$0xf]
        %v1617 = vld [vmem:[%s1613 + $0xc] sm:$0xf]
        %s1618 = scalar_lea.vmem %s6, 2
        %v1619 = vld [vmem:[%s1618] sm:$0x1]
        %v1621 = vlaneseq
        %v1622 = vshrl.u32 %v1621, 7
        %v1623 = vsub.s32 0, %v1622
        %v1624 = vrot.slane %v1619, %v1623
        %v1630 = vunpack.c.l.b16 %v1614
        %v1631 = vunpack.c.l.b16 %v1615
        %v1632 = vunpack.c.l.b16 %v1616
        %v1633 = vunpack.c.l.b16 %v1617
        %v1634 = vpack.c.b16 %v1631, %v1630
        %v1635 = vpack.c.b16 %v1633, %v1632
        %1638 = vmatprep.subr.bf16.mxu0 0
        %1639 = vmatpush1.bf16.msra.mxu0 %v1634
        %1640 = vmatprep.subr.bf16.mxu0 0
        %1641 = vmatpush1.bf16.msra.mxu0 %v1635
        %1642 = vmatprep.subr.bf16.mxu0 0
        %1643 = vmatpush1.bf16.msra.mxu0 0
        %1644 = vmatprep.subr.bf16.mxu0 0
        %1645 = vmatpush1.bf16.msra.mxu0 0
        %1646 = vmatprep.subr.bf16.mxu0 0
        %1647 = vmatpush1.bf16.msra.mxu0 0
        %1648 = vmatprep.subr.bf16.mxu0 0
        %1649 = vmatpush1.bf16.msra.mxu0 0
        %1650 = vmatprep.subr.bf16.mxu0 0
        %1651 = vmatpush1.bf16.msra.mxu0 0
        %1652 = vmatprep.subr.bf16.mxu0 0
        %1653 = vmatpush1.bf16.msra.mxu0 0
        %1654 = vmatprep.subr.bf16.mxu0 0
        %1655 = vmatpush1.bf16.msra.mxu0 0
        %1656 = vmatprep.subr.bf16.mxu0 0
        %1657 = vmatpush1.bf16.msra.mxu0 0
        %1658 = vmatprep.subr.bf16.mxu0 0
        %1659 = vmatpush1.bf16.msra.mxu0 0
        %1660 = vmatprep.subr.bf16.mxu0 0
        %1661 = vmatpush1.bf16.msra.mxu0 0
        %1662 = vmatprep.subr.bf16.mxu0 0
        %1663 = vmatpush1.bf16.msra.mxu0 0
        %1664 = vmatprep.subr.bf16.mxu0 0
        %1665 = vmatpush1.bf16.msra.mxu0 0
        %1666 = vmatprep.subr.bf16.mxu0 0
        %1667 = vmatpush1.bf16.msra.mxu0 0
        %1668 = vmatprep.subr.bf16.mxu0 0
        %1669 = vmatpush1.bf16.msra.mxu0 0
        %1670 = vmatprep.mubr.bf16.mxu0 0
        %1671 = vmatmul.mubr.bf16.gmra.mrb[0].mxu0 %v1189
        %v1672 = vpop.f32.mrb[0].mxu0
        %v1673 = vadd.f32 %v1624, %v1672
        %v1674 = vpop.f32.mrb[0].mxu0
        %v1675 = vpop.f32.mrb[0].mxu0
        %v1676 = vpop.f32.mrb[0].mxu0
        %1677 = vdwg.mxu0
        %v1678 = vmul.f32 %v1673, 0.35355338
        %v1679 = vpack.c.bf16 %v1678, %v1678
        %s1680 = scalar_lea.vmem [#allocation2], 8
        %v1681 = vld [vmem:[%s1680] sm:$0xf]
        %v1683 = vsel %vm1234, %v1679, 0
        %v1686 = vsel %vm1234, %v1681, 0
        %1688 = vmatprep.subr.bf16.mxu0 0
        %1689 = vmatpush1.bf16.xpose.msra.mxu0 %v1686
        %1690 = vmatprep.subr.bf16.mxu0 0
        %1691 = vmatpush1.bf16.xpose.msra.mxu0 0
        %1692 = vmatprep.subr.bf16.mxu0 0
        %1693 = vmatpush1.bf16.xpose.msra.mxu0 0
        %1694 = vmatprep.subr.bf16.mxu0 0
        %1695 = vmatpush1.bf16.xpose.msra.mxu0 0
        %1696 = vmatprep.subr.bf16.mxu0 0
        %1697 = vmatpush1.bf16.xpose.msra.mxu0 0
        %1698 = vmatprep.subr.bf16.mxu0 0
        %1699 = vmatpush1.bf16.xpose.msra.mxu0 0
        %1700 = vmatprep.subr.bf16.mxu0 0
        %1701 = vmatpush1.bf16.xpose.msra.mxu0 0
        %1702 = vmatprep.subr.bf16.mxu0 0
        %1703 = vmatpush1.bf16.xpose.msra.mxu0 0
        %1704 = vmatprep.subr.bf16.mxu0 0
        %1705 = vmatpush1.bf16.xpose.msra.mxu0 0
        %1706 = vmatprep.subr.bf16.mxu0 0
        %1707 = vmatpush1.bf16.xpose.msra.mxu0 0
        %1708 = vmatprep.subr.bf16.mxu0 0
        %1709 = vmatpush1.bf16.xpose.msra.mxu0 0
        %1710 = vmatprep.subr.bf16.mxu0 0
        %1711 = vmatpush1.bf16.xpose.msra.mxu0 0
        %1712 = vmatprep.subr.bf16.mxu0 0
        %1713 = vmatpush1.bf16.xpose.msra.mxu0 0
        %1714 = vmatprep.subr.bf16.mxu0 0
        %1715 = vmatpush1.bf16.xpose.msra.mxu0 0
        %1716 = vmatprep.subr.bf16.mxu0 0
        %1717 = vmatpush1.bf16.xpose.msra.mxu0 0
        %1718 = vmatprep.subr.bf16.mxu0 0
        %1719 = vmatpush1.bf16.xpose.msra.mxu0 0
        %1720 = vmatprep.mubr.bf16.mxu0 0
        %1721 = vmatmul.mubr.bf16.gmra.mrb[0].mxu0 %v1683
        %v1722 = vpop.f32.mrb[0].mxu0
        %v1723 = vadd.f32 0.0, %v1722
        %v1724 = vpop.f32.mrb[0].mxu0
        %v1725 = vpop.f32.mrb[0].mxu0
        %v1726 = vpop.f32.mrb[0].mxu0
        %1727 = vdwg.mxu0
        %v1728 = vsel %vm1234, %v1723, -inf
        %1729 = vmax.xlane.f32.xlu0 %v1728
        %v1730 = vpop.xlane.xlu0 %1729
        %v1731 = vsub.f32 %v1723, %v1730
        %v1732 = vmul.f32 %v1731, 1.442695
        %v1733 = vpow.pop %v1732
        %v1734 = vsel %vm1234, %v1733, 0.0
        %1735 = vadd.xlane.f32.xlu0 %v1734
        %v1736 = vpop.xlane.xlu0 %1735
        %v1737 = vrcp.pop %v1736
        %v1738 = vmul.f32 %v1733, %v1737
        %v1739 = vpack.c.bf16 %v1738, %v1738
        %s1740 = scalar_lea.vmem [#allocation3], 8
        %v1741 = vld [vmem:[%s1740] sm:$0xf]
        %v1743 = vsel %vm1234, %v1739, 0
        %v1746 = vsel %vm1297, %v1741, 0
        %1748 = vmatprep.subr.bf16.mxu0 0
        %1749 = vmatpush1.bf16.msra.mxu0 %v1746
        %1750 = vmatprep.subr.bf16.mxu0 0
        %1751 = vmatpush1.bf16.msra.mxu0 0
        %1752 = vmatprep.subr.bf16.mxu0 0
        %1753 = vmatpush1.bf16.msra.mxu0 0
        %1754 = vmatprep.subr.bf16.mxu0 0
        %1755 = vmatpush1.bf16.msra.mxu0 0
        %1756 = vmatprep.subr.bf16.mxu0 0
        %1757 = vmatpush1.bf16.msra.mxu0 0
        %1758 = vmatprep.subr.bf16.mxu0 0
        %1759 = vmatpush1.bf16.msra.mxu0 0
        %1760 = vmatprep.subr.bf16.mxu0 0
        %1761 = vmatpush1.bf16.msra.mxu0 0
        %1762 = vmatprep.subr.bf16.mxu0 0
        %1763 = vmatpush1.bf16.msra.mxu0 0
        %1764 = vmatprep.subr.bf16.mxu0 0
        %1765 = vmatpush1.bf16.msra.mxu0 0
        %1766 = vmatprep.subr.bf16.mxu0 0
        %1767 = vmatpush1.bf16.msra.mxu0 0
        %1768 = vmatprep.subr.bf16.mxu0 0
        %1769 = vmatpush1.bf16.msra.mxu0 0
        %1770 = vmatprep.subr.bf16.mxu0 0
        %1771 = vmatpush1.bf16.msra.mxu0 0
        %1772 = vmatprep.subr.bf16.mxu0 0
        %1773 = vmatpush1.bf16.msra.mxu0 0
        %1774 = vmatprep.subr.bf16.mxu0 0
        %1775 = vmatpush1.bf16.msra.mxu0 0
        %1776 = vmatprep.subr.bf16.mxu0 0
        %1777 = vmatpush1.bf16.msra.mxu0 0
        %1778 = vmatprep.subr.bf16.mxu0 0
        %1779 = vmatpush1.bf16.msra.mxu0 0
        %1780 = vmatprep.mubr.bf16.mxu0 0
        %1781 = vmatmul.mubr.bf16.gmra.mrb[0].mxu0 %v1743
        %v1782 = vpop.f32.mrb[0].mxu0
        %v1783 = vadd.f32 0.0, %v1782
        %v1784 = vpop.f32.mrb[0].mxu0
        %v1785 = vpop.f32.mrb[0].mxu0
        %v1786 = vpop.f32.mrb[0].mxu0
        %1787 = vdwg.mxu0
        %v1788 = vpack.c.bf16 %v1783, %v1783
        %s1789 = scalar_lea.vmem %s5, 8
        %v1790 = vld [vmem:[%s1789] sm:$0xf]
        %v1792 = vsel %vm1234, %v1788, 0
        %v1795 = vsel %vm1297, %v1790, 0
        %1797 = vmatprep.subr.bf16.mxu0 0
        %1798 = vmatpush1.bf16.msra.mxu0 %v1795
        %1799 = vmatprep.subr.bf16.mxu0 0
        %1800 = vmatpush1.bf16.msra.mxu0 0
        %1801 = vmatprep.subr.bf16.mxu0 0
        %1802 = vmatpush1.bf16.msra.mxu0 0
        %1803 = vmatprep.subr.bf16.mxu0 0
        %1804 = vmatpush1.bf16.msra.mxu0 0
        %1805 = vmatprep.subr.bf16.mxu0 0
        %1806 = vmatpush1.bf16.msra.mxu0 0
        %1807 = vmatprep.subr.bf16.mxu0 0
        %1808 = vmatpush1.bf16.msra.mxu0 0
        %1809 = vmatprep.subr.bf16.mxu0 0
        %1810 = vmatpush1.bf16.msra.mxu0 0
        %1811 = vmatprep.subr.bf16.mxu0 0
        %1812 = vmatpush1.bf16.msra.mxu0 0
        %1813 = vmatprep.subr.bf16.mxu0 0
        %1814 = vmatpush1.bf16.msra.mxu0 0
        %1815 = vmatprep.subr.bf16.mxu0 0
        %1816 = vmatpush1.bf16.msra.mxu0 0
        %1817 = vmatprep.subr.bf16.mxu0 0
        %1818 = vmatpush1.bf16.msra.mxu0 0
        %1819 = vmatprep.subr.bf16.mxu0 0
        %1820 = vmatpush1.bf16.msra.mxu0 0
        %1821 = vmatprep.subr.bf16.mxu0 0
        %1822 = vmatpush1.bf16.msra.mxu0 0
        %1823 = vmatprep.subr.bf16.mxu0 0
        %1824 = vmatpush1.bf16.msra.mxu0 0
        %1825 = vmatprep.subr.bf16.mxu0 0
        %1826 = vmatpush1.bf16.msra.mxu0 0
        %1827 = vmatprep.subr.bf16.mxu0 0
        %1828 = vmatpush1.bf16.msra.mxu0 0
        %1829 = vmatprep.mubr.bf16.mxu0 0
        %1830 = vmatmul.mubr.bf16.gmra.mrb[0].mxu0 %v1792
        %v1831 = vpop.f32.mrb[0].mxu0
        %v1832 = vadd.f32 0.0, %v1831
        %v1833 = vpop.f32.mrb[0].mxu0
        %v1834 = vpop.f32.mrb[0].mxu0
        %v1835 = vpop.f32.mrb[0].mxu0
        %1836 = vdwg.mxu0
        %v1837 = vadd.f32 %v1608, %v1832
        %s1838 = scalar_lea.vmem %s2, 48
        %v1839 = vld [vmem:[%s1838] sm:$0xf]
        %v1840 = vld [vmem:[%s1838 + $0x4] sm:$0xf]
        %v1841 = vld [vmem:[%s1838 + $0x8] sm:$0xf]
        %v1842 = vld [vmem:[%s1838 + $0xc] sm:$0xf]
        %s1843 = scalar_lea.vmem %s6, 3
        %v1844 = vld [vmem:[%s1843] sm:$0x1]
        %v1846 = vlaneseq
        %v1847 = vshrl.u32 %v1846, 7
        %v1848 = vsub.s32 0, %v1847
        %v1849 = vrot.slane %v1844, %v1848
        %v1855 = vunpack.c.l.b16 %v1839
        %v1856 = vunpack.c.l.b16 %v1840
        %v1857 = vunpack.c.l.b16 %v1841
        %v1858 = vunpack.c.l.b16 %v1842
        %v1859 = vpack.c.b16 %v1856, %v1855
        %v1860 = vpack.c.b16 %v1858, %v1857
        %1863 = vmatprep.subr.bf16.mxu0 0
        %1864 = vmatpush1.bf16.msra.mxu0 %v1859
        %1865 = vmatprep.subr.bf16.mxu0 0
        %1866 = vmatpush1.bf16.msra.mxu0 %v1860
        %1867 = vmatprep.subr.bf16.mxu0 0
        %1868 = vmatpush1.bf16.msra.mxu0 0
        %1869 = vmatprep.subr.bf16.mxu0 0
        %1870 = vmatpush1.bf16.msra.mxu0 0
        %1871 = vmatprep.subr.bf16.mxu0 0
        %1872 = vmatpush1.bf16.msra.mxu0 0
        %1873 = vmatprep.subr.bf16.mxu0 0
        %1874 = vmatpush1.bf16.msra.mxu0 0
        %1875 = vmatprep.subr.bf16.mxu0 0
        %1876 = vmatpush1.bf16.msra.mxu0 0
        %1877 = vmatprep.subr.bf16.mxu0 0
        %1878 = vmatpush1.bf16.msra.mxu0 0
        %1879 = vmatprep.subr.bf16.mxu0 0
        %1880 = vmatpush1.bf16.msra.mxu0 0
        %1881 = vmatprep.subr.bf16.mxu0 0
        %1882 = vmatpush1.bf16.msra.mxu0 0
        %1883 = vmatprep.subr.bf16.mxu0 0
        %1884 = vmatpush1.bf16.msra.mxu0 0
        %1885 = vmatprep.subr.bf16.mxu0 0
        %1886 = vmatpush1.bf16.msra.mxu0 0
        %1887 = vmatprep.subr.bf16.mxu0 0
        %1888 = vmatpush1.bf16.msra.mxu0 0
        %1889 = vmatprep.subr.bf16.mxu0 0
        %1890 = vmatpush1.bf16.msra.mxu0 0
        %1891 = vmatprep.subr.bf16.mxu0 0
        %1892 = vmatpush1.bf16.msra.mxu0 0
        %1893 = vmatprep.subr.bf16.mxu0 0
        %1894 = vmatpush1.bf16.msra.mxu0 0
        %1895 = vmatprep.mubr.bf16.mxu0 0
        %1896 = vmatmul.mubr.bf16.gmra.mrb[0].mxu0 %v1189
        %v1897 = vpop.f32.mrb[0].mxu0
        %v1898 = vadd.f32 %v1849, %v1897
        %v1899 = vpop.f32.mrb[0].mxu0
        %v1900 = vpop.f32.mrb[0].mxu0
        %v1901 = vpop.f32.mrb[0].mxu0
        %1902 = vdwg.mxu0
        %v1903 = vmul.f32 %v1898, 0.35355338
        %v1904 = vpack.c.bf16 %v1903, %v1903
        %s1905 = scalar_lea.vmem [#allocation2], 12
        %v1906 = vld [vmem:[%s1905] sm:$0xf]
        %v1908 = vsel %vm1234, %v1904, 0
        %v1911 = vsel %vm1234, %v1906, 0
        %1913 = vmatprep.subr.bf16.mxu0 0
        %1914 = vmatpush1.bf16.xpose.msra.mxu0 %v1911
        %1915 = vmatprep.subr.bf16.mxu0 0
        %1916 = vmatpush1.bf16.xpose.msra.mxu0 0
        %1917 = vmatprep.subr.bf16.mxu0 0
        %1918 = vmatpush1.bf16.xpose.msra.mxu0 0
        %1919 = vmatprep.subr.bf16.mxu0 0
        %1920 = vmatpush1.bf16.xpose.msra.mxu0 0
        %1921 = vmatprep.subr.bf16.mxu0 0
        %1922 = vmatpush1.bf16.xpose.msra.mxu0 0
        %1923 = vmatprep.subr.bf16.mxu0 0
        %1924 = vmatpush1.bf16.xpose.msra.mxu0 0
        %1925 = vmatprep.subr.bf16.mxu0 0
        %1926 = vmatpush1.bf16.xpose.msra.mxu0 0
        %1927 = vmatprep.subr.bf16.mxu0 0
        %1928 = vmatpush1.bf16.xpose.msra.mxu0 0
        %1929 = vmatprep.subr.bf16.mxu0 0
        %1930 = vmatpush1.bf16.xpose.msra.mxu0 0
        %1931 = vmatprep.subr.bf16.mxu0 0
        %1932 = vmatpush1.bf16.xpose.msra.mxu0 0
        %1933 = vmatprep.subr.bf16.mxu0 0
        %1934 = vmatpush1.bf16.xpose.msra.mxu0 0
        %1935 = vmatprep.subr.bf16.mxu0 0
        %1936 = vmatpush1.bf16.xpose.msra.mxu0 0
        %1937 = vmatprep.subr.bf16.mxu0 0
        %1938 = vmatpush1.bf16.xpose.msra.mxu0 0
        %1939 = vmatprep.subr.bf16.mxu0 0
        %1940 = vmatpush1.bf16.xpose.msra.mxu0 0
        %1941 = vmatprep.subr.bf16.mxu0 0
        %1942 = vmatpush1.bf16.xpose.msra.mxu0 0
        %1943 = vmatprep.subr.bf16.mxu0 0
        %1944 = vmatpush1.bf16.xpose.msra.mxu0 0
        %1945 = vmatprep.mubr.bf16.mxu0 0
        %1946 = vmatmul.mubr.bf16.gmra.mrb[0].mxu0 %v1908
        %v1947 = vpop.f32.mrb[0].mxu0
        %v1948 = vadd.f32 0.0, %v1947
        %v1949 = vpop.f32.mrb[0].mxu0
        %v1950 = vpop.f32.mrb[0].mxu0
        %v1951 = vpop.f32.mrb[0].mxu0
        %1952 = vdwg.mxu0
        %v1953 = vsel %vm1234, %v1948, -inf
        %1954 = vmax.xlane.f32.xlu0 %v1953
        %v1955 = vpop.xlane.xlu0 %1954
        %v1956 = vsub.f32 %v1948, %v1955
        %v1957 = vmul.f32 %v1956, 1.442695
        %v1958 = vpow.pop %v1957
        %v1959 = vsel %vm1234, %v1958, 0.0
        %1960 = vadd.xlane.f32.xlu0 %v1959
        %v1961 = vpop.xlane.xlu0 %1960
        %v1962 = vrcp.pop %v1961
        %v1963 = vmul.f32 %v1958, %v1962
        %v1964 = vpack.c.bf16 %v1963, %v1963
        %s1965 = scalar_lea.vmem [#allocation3], 12
        %v1966 = vld [vmem:[%s1965] sm:$0xf]
        %v1968 = vsel %vm1234, %v1964, 0
        %v1971 = vsel %vm1297, %v1966, 0
        %1973 = vmatprep.subr.bf16.mxu0 0
        %1974 = vmatpush1.bf16.msra.mxu0 %v1971
        %1975 = vmatprep.subr.bf16.mxu0 0
        %1976 = vmatpush1.bf16.msra.mxu0 0
        %1977 = vmatprep.subr.bf16.mxu0 0
        %1978 = vmatpush1.bf16.msra.mxu0 0
        %1979 = vmatprep.subr.bf16.mxu0 0
        %1980 = vmatpush1.bf16.msra.mxu0 0
        %1981 = vmatprep.subr.bf16.mxu0 0
        %1982 = vmatpush1.bf16.msra.mxu0 0
        %1983 = vmatprep.subr.bf16.mxu0 0
        %1984 = vmatpush1.bf16.msra.mxu0 0
        %1985 = vmatprep.subr.bf16.mxu0 0
        %1986 = vmatpush1.bf16.msra.mxu0 0
        %1987 = vmatprep.subr.bf16.mxu0 0
        %1988 = vmatpush1.bf16.msra.mxu0 0
        %1989 = vmatprep.subr.bf16.mxu0 0
        %1990 = vmatpush1.bf16.msra.mxu0 0
        %1991 = vmatprep.subr.bf16.mxu0 0
        %1992 = vmatpush1.bf16.msra.mxu0 0
        %1993 = vmatprep.subr.bf16.mxu0 0
        %1994 = vmatpush1.bf16.msra.mxu0 0
        %1995 = vmatprep.subr.bf16.mxu0 0
        %1996 = vmatpush1.bf16.msra.mxu0 0
        %1997 = vmatprep.subr.bf16.mxu0 0
        %1998 = vmatpush1.bf16.msra.mxu0 0
        %1999 = vmatprep.subr.bf16.mxu0 0
        %2000 = vmatpush1.bf16.msra.mxu0 0
        %2001 = vmatprep.subr.bf16.mxu0 0
        %2002 = vmatpush1.bf16.msra.mxu0 0
        %2003 = vmatprep.subr.bf16.mxu0 0
        %2004 = vmatpush1.bf16.msra.mxu0 0
        %2005 = vmatprep.mubr.bf16.mxu0 0
        %2006 = vmatmul.mubr.bf16.gmra.mrb[0].mxu0 %v1968
        %v2007 = vpop.f32.mrb[0].mxu0
        %v2008 = vadd.f32 0.0, %v2007
        %v2009 = vpop.f32.mrb[0].mxu0
        %v2010 = vpop.f32.mrb[0].mxu0
        %v2011 = vpop.f32.mrb[0].mxu0
        %2012 = vdwg.mxu0
        %v2013 = vpack.c.bf16 %v2008, %v2008
        %s2014 = scalar_lea.vmem %s5, 12
        %v2015 = vld [vmem:[%s2014] sm:$0xf]
        %v2017 = vsel %vm1234, %v2013, 0
        %v2020 = vsel %vm1297, %v2015, 0
        %2022 = vmatprep.subr.bf16.mxu0 0
        %2023 = vmatpush1.bf16.msra.mxu0 %v2020
        %2024 = vmatprep.subr.bf16.mxu0 0
        %2025 = vmatpush1.bf16.msra.mxu0 0
        %2026 = vmatprep.subr.bf16.mxu0 0
        %2027 = vmatpush1.bf16.msra.mxu0 0
        %2028 = vmatprep.subr.bf16.mxu0 0
        %2029 = vmatpush1.bf16.msra.mxu0 0
        %2030 = vmatprep.subr.bf16.mxu0 0
        %2031 = vmatpush1.bf16.msra.mxu0 0
        %2032 = vmatprep.subr.bf16.mxu0 0
        %2033 = vmatpush1.bf16.msra.mxu0 0
        %2034 = vmatprep.subr.bf16.mxu0 0
        %2035 = vmatpush1.bf16.msra.mxu0 0
        %2036 = vmatprep.subr.bf16.mxu0 0
        %2037 = vmatpush1.bf16.msra.mxu0 0
        %2038 = vmatprep.subr.bf16.mxu0 0
        %2039 = vmatpush1.bf16.msra.mxu0 0
        %2040 = vmatprep.subr.bf16.mxu0 0
        %2041 = vmatpush1.bf16.msra.mxu0 0
        %2042 = vmatprep.subr.bf16.mxu0 0
        %2043 = vmatpush1.bf16.msra.mxu0 0
        %2044 = vmatprep.subr.bf16.mxu0 0
        %2045 = vmatpush1.bf16.msra.mxu0 0
        %2046 = vmatprep.subr.bf16.mxu0 0
        %2047 = vmatpush1.bf16.msra.mxu0 0
        %2048 = vmatprep.subr.bf16.mxu0 0
        %2049 = vmatpush1.bf16.msra.mxu0 0
        %2050 = vmatprep.subr.bf16.mxu0 0
        %2051 = vmatpush1.bf16.msra.mxu0 0
        %2052 = vmatprep.subr.bf16.mxu0 0
        %2053 = vmatpush1.bf16.msra.mxu0 0
        %2054 = vmatprep.mubr.bf16.mxu0 0
        %2055 = vmatmul.mubr.bf16.gmra.mrb[0].mxu0 %v2017
        %v2056 = vpop.f32.mrb[0].mxu0
        %v2057 = vadd.f32 0.0, %v2056
        %v2058 = vpop.f32.mrb[0].mxu0
        %v2059 = vpop.f32.mrb[0].mxu0
        %v2060 = vpop.f32.mrb[0].mxu0
        %2061 = vdwg.mxu0
        %v2062 = vadd.f32 %v1837, %v2057
        %v2063 = vld [vmem:[%s9] sm:$0x1]
        %v2065 = vlaneseq
        %v2066 = vshrl.u32 %v2065, 7
        %v2067 = vsub.s32 0, %v2066
        %v2068 = vrot.slane %v2063, %v2067
        %v2070 = vadd.f32 %v2062, %v2068
        %v2071 = vadd.f32 %v1162, %v2070
        %v2072 = vld [vmem:[%s14] sm:$0x1]
        %v2073 = vld [vmem:[%s15] sm:$0x1]
        %v2074 = vsel %vm1187, %v2071, 0.0
        %2075 = vadd.xlane.f32.xlu0 %v2074
        %v2076 = vpop.xlane.xlu0 %2075
        %v2077 = vrcp.pop 32.0
        %v2078 = vmul.f32 %v2076, %v2077
        %v2079 = vsub.f32 %v2071, %v2078
        %v2080 = vmul.f32 %v2079, %v2079
        %v2081 = vsel %vm1187, %v2080, 0.0
        %2082 = vadd.xlane.f32.xlu0 %v2081
        %v2083 = vpop.xlane.xlu0 %2082
        %v2084 = vmul.f32 %v2083, %v2077
        %v2085 = vadd.f32 %v2084, 1e-05
        %v2086 = vrsqrt.pop %v2085
        %v2087 = vmul.f32 %v2079, %v2086
        %v2089 = vlaneseq
        %v2090 = vshrl.u32 %v2089, 7
        %v2091 = vsub.s32 0, %v2090
        %v2092 = vrot.slane %v2072, %v2091
        %v2094 = vmul.f32 %v2087, %v2092
        %v2096 = vlaneseq
        %v2097 = vshrl.u32 %v2096, 7
        %v2098 = vsub.s32 0, %v2097
        %v2099 = vrot.slane %v2073, %v2098
        %v2101 = vadd.f32 %v2094, %v2099
        %v2102 = vpack.c.bf16 %v2101, %v2101
        %2103 = vst.msk [vmem:[#allocation4] sm:$0xff] %vm1187, 0.0
        %v2104 = vld [vmem:[%s10] sm:$0xf]
        %v2105 = vld [vmem:[%s10 + $0x4] sm:$0xf]
        %v2106 = vld [vmem:[%s10 + $0x8] sm:$0xf]
        %v2107 = vld [vmem:[%s10 + $0xc] sm:$0xf]
        %v2108 = vld [vmem:[%s11] sm:$0x1]
        %v2110 = vlaneseq
        %v2111 = vshrl.u32 %v2110, 7
        %v2112 = vsub.s32 0, %v2111
        %v2113 = vrot.slane %v2108, %v2112
        %v2119 = vunpack.c.l.b16 %v2104
        %v2120 = vunpack.c.l.b16 %v2105
        %v2121 = vunpack.c.l.b16 %v2106
        %v2122 = vunpack.c.l.b16 %v2107
        %v2123 = vpack.c.b16 %v2120, %v2119
        %v2124 = vpack.c.b16 %v2122, %v2121
        %v2128 = vsel %vm1187, %v2102, 0
        %2130 = vmatprep.subr.bf16.mxu0 0
        %2131 = vmatpush1.bf16.msra.mxu0 %v2123
        %2132 = vmatprep.subr.bf16.mxu0 0
        %2133 = vmatpush1.bf16.msra.mxu0 %v2124
        %2134 = vmatprep.subr.bf16.mxu0 0
        %2135 = vmatpush1.bf16.msra.mxu0 0
        %2136 = vmatprep.subr.bf16.mxu0 0
        %2137 = vmatpush1.bf16.msra.mxu0 0
        %2138 = vmatprep.subr.bf16.mxu0 0
        %2139 = vmatpush1.bf16.msra.mxu0 0
        %2140 = vmatprep.subr.bf16.mxu0 0
        %2141 = vmatpush1.bf16.msra.mxu0 0
        %2142 = vmatprep.subr.bf16.mxu0 0
        %2143 = vmatpush1.bf16.msra.mxu0 0
        %2144 = vmatprep.subr.bf16.mxu0 0
        %2145 = vmatpush1.bf16.msra.mxu0 0
        %2146 = vmatprep.subr.bf16.mxu0 0
        %2147 = vmatpush1.bf16.msra.mxu0 0
        %2148 = vmatprep.subr.bf16.mxu0 0
        %2149 = vmatpush1.bf16.msra.mxu0 0
        %2150 = vmatprep.subr.bf16.mxu0 0
        %2151 = vmatpush1.bf16.msra.mxu0 0
        %2152 = vmatprep.subr.bf16.mxu0 0
        %2153 = vmatpush1.bf16.msra.mxu0 0
        %2154 = vmatprep.subr.bf16.mxu0 0
        %2155 = vmatpush1.bf16.msra.mxu0 0
        %2156 = vmatprep.subr.bf16.mxu0 0
        %2157 = vmatpush1.bf16.msra.mxu0 0
        %2158 = vmatprep.subr.bf16.mxu0 0
        %2159 = vmatpush1.bf16.msra.mxu0 0
        %2160 = vmatprep.subr.bf16.mxu0 0
        %2161 = vmatpush1.bf16.msra.mxu0 0
        %2162 = vmatprep.mubr.bf16.mxu0 0
        %2163 = vmatmul.mubr.bf16.gmra.mrb[0].mxu0 %v2128
        %v2164 = vpop.f32.mrb[0].mxu0
        %v2165 = vadd.f32 %v2113, %v2164
        %v2166 = vpop.f32.mrb[0].mxu0
        %v2167 = vpop.f32.mrb[0].mxu0
        %v2168 = vpop.f32.mrb[0].mxu0
        %2169 = vdwg.mxu0
        %v2170 = vmax.f32 %v2165, 0.0
        %v2171 = vld [vmem:[%s12] sm:$0xf]
        %v2172 = vld [vmem:[%s12 + $0x4] sm:$0xf]
        %v2173 = vld [vmem:[%s12 + $0x8] sm:$0xf]
        %v2174 = vld [vmem:[%s12 + $0xc] sm:$0xf]
        %v2175 = vld [vmem:[%s12 + $0x10] sm:$0xf]
        %v2176 = vld [vmem:[%s12 + $0x14] sm:$0xf]
        %v2177 = vld [vmem:[%s12 + $0x18] sm:$0xf]
        %v2178 = vld [vmem:[%s12 + $0x1c] sm:$0xf]
        %v2179 = vld [vmem:[%s12 + $0x20] sm:$0xf]
        %v2180 = vld [vmem:[%s12 + $0x24] sm:$0xf]
        %v2181 = vld [vmem:[%s12 + $0x28] sm:$0xf]
        %v2182 = vld [vmem:[%s12 + $0x2c] sm:$0xf]
        %v2183 = vld [vmem:[%s12 + $0x30] sm:$0xf]
        %v2184 = vld [vmem:[%s12 + $0x34] sm:$0xf]
        %v2185 = vld [vmem:[%s12 + $0x38] sm:$0xf]
        %v2186 = vld [vmem:[%s12 + $0x3c] sm:$0xf]
        %v2187 = vld [vmem:[#allocation4] sm:$0xff]
        %v2188 = vpack.c.bf16 %v2170, %v2170
        %v2205 = vunpack.c.l.b16 %v2171
        %v2206 = vunpack.c.l.b16 %v2172
        %v2207 = vunpack.c.l.b16 %v2173
        %v2208 = vunpack.c.l.b16 %v2174
        %v2209 = vunpack.c.l.b16 %v2175
        %v2210 = vunpack.c.l.b16 %v2176
        %v2211 = vunpack.c.l.b16 %v2177
        %v2212 = vunpack.c.l.b16 %v2178
        %v2213 = vunpack.c.l.b16 %v2179
        %v2214 = vunpack.c.l.b16 %v2180
        %v2215 = vunpack.c.l.b16 %v2181
        %v2216 = vunpack.c.l.b16 %v2182
        %v2217 = vunpack.c.l.b16 %v2183
        %v2218 = vunpack.c.l.b16 %v2184
        %v2219 = vunpack.c.l.b16 %v2185
        %v2220 = vunpack.c.l.b16 %v2186
        %v2221 = vpack.c.b16 %v2206, %v2205
        %v2222 = vpack.c.b16 %v2208, %v2207
        %v2223 = vpack.c.b16 %v2210, %v2209
        %v2224 = vpack.c.b16 %v2212, %v2211
        %v2225 = vpack.c.b16 %v2214, %v2213
        %v2226 = vpack.c.b16 %v2216, %v2215
        %v2227 = vpack.c.b16 %v2218, %v2217
        %v2228 = vpack.c.b16 %v2220, %v2219
        %2237 = vmatprep.subr.bf16.mxu0 0
        %2238 = vmatpush1.bf16.msra.mxu0 %v2221
        %2239 = vmatprep.subr.bf16.mxu0 0
        %2240 = vmatpush1.bf16.msra.mxu0 %v2222
        %2241 = vmatprep.subr.bf16.mxu0 0
        %2242 = vmatpush1.bf16.msra.mxu0 %v2223
        %2243 = vmatprep.subr.bf16.mxu0 0
        %2244 = vmatpush1.bf16.msra.mxu0 %v2224
        %2245 = vmatprep.subr.bf16.mxu0 0
        %2246 = vmatpush1.bf16.msra.mxu0 %v2225
        %2247 = vmatprep.subr.bf16.mxu0 0
        %2248 = vmatpush1.bf16.msra.mxu0 %v2226
        %2249 = vmatprep.subr.bf16.mxu0 0
        %2250 = vmatpush1.bf16.msra.mxu0 %v2227
        %2251 = vmatprep.subr.bf16.mxu0 0
        %2252 = vmatpush1.bf16.msra.mxu0 %v2228
        %2253 = vmatprep.subr.bf16.mxu0 0
        %2254 = vmatpush1.bf16.msra.mxu0 0
        %2255 = vmatprep.subr.bf16.mxu0 0
        %2256 = vmatpush1.bf16.msra.mxu0 0
        %2257 = vmatprep.subr.bf16.mxu0 0
        %2258 = vmatpush1.bf16.msra.mxu0 0
        %2259 = vmatprep.subr.bf16.mxu0 0
        %2260 = vmatpush1.bf16.msra.mxu0 0
        %2261 = vmatprep.subr.bf16.mxu0 0
        %2262 = vmatpush1.bf16.msra.mxu0 0
        %2263 = vmatprep.subr.bf16.mxu0 0
        %2264 = vmatpush1.bf16.msra.mxu0 0
        %2265 = vmatprep.subr.bf16.mxu0 0
        %2266 = vmatpush1.bf16.msra.mxu0 0
        %2267 = vmatprep.subr.bf16.mxu0 0
        %2268 = vmatpush1.bf16.msra.mxu0 0
        %2269 = vmatprep.mubr.bf16.mxu0 0
        %2270 = vmatmul.mubr.bf16.gmra.mrb[0].mxu0 %v2188
        %v2271 = vpop.f32.mrb[0].mxu0
        %v2272 = vadd.f32 0.0, %v2271
        %v2273 = vpop.f32.mrb[0].mxu0
        %v2274 = vpop.f32.mrb[0].mxu0
        %v2275 = vpop.f32.mrb[0].mxu0
        %2276 = vdwg.mxu0
        %v2277 = vadd.f32 %v2187, %v2272
        %2278 = vst.msk [vmem:[#allocation4] sm:$0xff] %vm1187, %v2277
        %v2279 = vld [vmem:[#allocation4] sm:$0xff]
        %v2280 = vld [vmem:[%s13] sm:$0x1]
        %v2282 = vlaneseq
        %v2283 = vshrl.u32 %v2282, 7
        %v2284 = vsub.s32 0, %v2283
        %v2285 = vrot.slane %v2280, %v2284
        %v2287 = vadd.f32 %v2279, %v2285
        %v2288 = vadd.f32 %v2101, %v2287
        %v2289 = vld [vmem:[%s16] sm:$0x1]
        %v2290 = vld [vmem:[%s17] sm:$0x1]
        %v2291 = vsel %vm1187, %v2288, 0.0
        %2292 = vadd.xlane.f32.xlu0 %v2291
        %v2293 = vpop.xlane.xlu0 %2292
        %v2294 = vmul.f32 %v2293, %v2077
        %v2295 = vsub.f32 %v2288, %v2294
        %v2296 = vmul.f32 %v2295, %v2295
        %v2297 = vsel %vm1187, %v2296, 0.0
        %2298 = vadd.xlane.f32.xlu0 %v2297
        %v2299 = vpop.xlane.xlu0 %2298
        %v2300 = vmul.f32 %v2299, %v2077
        %v2301 = vadd.f32 %v2300, 1e-05
        %v2302 = vrsqrt.pop %v2301
        %v2303 = vmul.f32 %v2295, %v2302
        %v2305 = vlaneseq
        %v2306 = vshrl.u32 %v2305, 7
        %v2307 = vsub.s32 0, %v2306
        %v2308 = vrot.slane %v2289, %v2307
        %v2310 = vmul.f32 %v2303, %v2308
        %v2312 = vlaneseq
        %v2313 = vshrl.u32 %v2312, 7
        %v2314 = vsub.s32 0, %v2313
        %v2315 = vrot.slane %v2290, %v2314
        %v2317 = vadd.f32 %v2310, %v2315
        %2318 = vst.msk [vmem:[%s601] sm:$0xff] %vm1187, %v2317
        %s2319 = sand.u32 %s444, 1
        %s2320 = scalar_lea.sflag [#allocation6], %s2319
        %s2321 = sand.u32 %s444, 1
        %s2322 = smul.addr %s2321, 8
        %s2323 = scalar_lea.vmem [#allocation5], %s2322
        // Predicated region
        $region97: #{tpu_custom_call.1} parent=91 // pred_check
          %p2324 = pneg %p454
        $region98: #{tpu_custom_call.1} parent=91 // pred_check_branch
          %2326 = sbr.rel (%p2324) target = $region100
        $region99: #{tpu_custom_call.1} parent=91 // pred_region
          %s2328 = ssub.s32 128, 128
          %2329 = vsyncadd %s2320, %s2328
          %s2330 = sadd.s32 %s37, %s36
          %s2331 = smul.addr %s2330, 128
          %s2332 = scalar_lea.hbm %s18, %s2331
          %s2334 = sshll.u32 %s2323, 4
          %s2335 = int_to_ptr.vmem [resolvable:$true] %s2334
          %2337 = dma.vmem_to_hbm [thread:$0]  %s2335, 128, %s2332, %s2320
        $region100: #{tpu_custom_call.1} parent=91 // pred_fallthru
          _
      $region92: #{tpu_custom_call.1} parent=5 // pred_fallthru
        _
      %p2338 = scmp.le.s32.totalorder 2, %s27
      // Predicated region
      $region101: #{tpu_custom_call.1} parent=5 // pred_check
        %p2339 = pneg %p2338
      $region102: #{tpu_custom_call.1} parent=5 // pred_check_branch
        %2341 = sbr.rel (%p2339) target = $region104
      $region103: #{tpu_custom_call.1} parent=5 // pred_region
        %s2342 = ssub.s32 %s27, 2
        // Predicated region
        $region105: #{tpu_custom_call.1} parent=103 // pred_check
          %p2343 = pneg %p460
        $region106: #{tpu_custom_call.1} parent=103 // pred_check_branch
          %2345 = sbr.rel (%p2343) target = $region108
        $region107: #{tpu_custom_call.1} parent=103 // pred_region
          %s2346 = sand.u32 %s445, 1
          %s2347 = scalar_lea.sflag [#allocation6], %s2346
          %s2348 = sand.u32 %s445, 1
          %s2349 = smul.addr %s2348, 8
          %s2350 = scalar_lea.vmem [#allocation5], %s2349
          %2351 = dma.done %s2347, 128
        $region108: #{tpu_custom_call.1} parent=103 // pred_fallthru
          _
      $region104: #{tpu_custom_call.1} parent=5 // pred_fallthru
        _
    $region6: #{tpu_custom_call.1} parent=1 // loop_footer
      %s31 = sadd.s32 1, %s27
    $region7: #{tpu_custom_call.1} parent=1 // loop_footer_branch
      %26 = sbr.rel target = $region3
    $region8: #{tpu_custom_call.1} parent=1 // loop_exit
      _
    %2352 = vsyncpa [#allocation6], 1
    %s2353 = scalar_lea.sflag [#allocation6], 1
    %2354 = vsyncpa %s2353, 1

</llo_original>
